<compile_context>
chip_gen: v7x
topology: tpu7x:2x2x1
jax: 0.10.0
libtpu: 0.0.40
codegen_flags: <defaults>
</compile_context>

<pallas_src>
import functools
import math

import jax
import jax.numpy as jnp
from jax import lax
from jax.experimental import pallas as pl
from jax.experimental.pallas import tpu as pltpu

LN_EPS = 1e-5                      # torch.nn.LayerNorm default
INV_SQRT2 = 1.0 / math.sqrt(2.0)


def _layernorm(x, gamma, beta):
    # x: (N, D) f32, gamma/beta: (1, D); biased variance like torch.nn.LayerNorm.
    mean = jnp.mean(x, axis=-1, keepdims=True)
    xc = x - mean
    var = jnp.mean(xc * xc, axis=-1, keepdims=True)
    return xc * lax.rsqrt(var + LN_EPS) * gamma + beta


def layer_kernel(x_ref, norms_ref, wq_ref, wk_ref, wv_ref, wo_ref,
                 w1_ref, b1_ref, w2_ref, o_ref, *, heads):
    f32 = jnp.float32
    bf16 = jnp.bfloat16

    x = x_ref[0].astype(f32)                      # (N, D) residual stream (f32)
    N, D = x.shape
    norms = norms_ref[...].astype(f32)            # (5, D): ln1_g, ln1_b, ln2_g, ln2_b, b2

    # ---------------- attention sub-block ----------------
    xn = _layernorm(x, norms[0:1], norms[1:2])    # (N, D) f32
    xn_h = jnp.broadcast_to(xn.astype(bf16), (heads, N, D))   # (h, N, D) bf16

    # batched per-head projections; softmax scale already folded into wq.
    q = jnp.einsum("hnd,hdk->hnk", xn_h, wq_ref[...], preferred_element_type=f32)
    k = jnp.einsum("hnd,hdk->hnk", xn_h, wk_ref[...], preferred_element_type=f32)
    v = jnp.einsum("hnd,hdk->hnk", xn_h, wv_ref[...], preferred_element_type=f32)

    s = jnp.einsum("hnk,hmk->hnm", q.astype(bf16), k.astype(bf16),
                   preferred_element_type=f32)     # (h, N, N) f32 scores
    s = s - jnp.max(s, axis=-1, keepdims=True)
    e = jnp.exp(s)
    p = e * pl.reciprocal(jnp.sum(e, axis=-1, keepdims=True), approx=True)

    ctx = jnp.einsum("hnm,hmk->hnk", p.astype(bf16), v.astype(bf16),
                     preferred_element_type=f32)   # (h, N, dh)
    proj_h = jnp.einsum("hnk,hkd->hnd", ctx.astype(bf16), wo_ref[...],
                        preferred_element_type=f32)          # (h, N, D)
    x = jnp.sum(proj_h, axis=0) + x               # output projection + residual

    # ---------------- feed-forward sub-block ----------------
    xn2 = _layernorm(x, norms[2:3], norms[3:4])
    h = jnp.dot(xn2.astype(bf16), w1_ref[...], preferred_element_type=f32)
    h = h + b1_ref[...].astype(f32)
    h = 0.5 * h * (1.0 + lax.erf(h * INV_SQRT2))  # exact GELU (torch default)
    y = jnp.dot(h.astype(bf16), w2_ref[...], preferred_element_type=f32)
    y = y + norms[4:5]                            # b2
    o_ref[0] = (y + x).astype(o_ref.dtype)        # residual


def transformer_layer(x, p, *, heads, dim_head):
    B, N, D = x.shape
    H = p["w1"].shape[1]
    dh = dim_head
    kernel = functools.partial(layer_kernel, heads=heads)
    return pl.pallas_call(
        kernel,
        out_shape=jax.ShapeDtypeStruct((B, N, D), x.dtype),
        grid=(B,),
        in_specs=[
            pl.BlockSpec((1, N, D), lambda b: (b, 0, 0)),          # x
            pl.BlockSpec((5, D), lambda b: (0, 0)),                # packed ln params + b2
            pl.BlockSpec((heads, D, dh), lambda b: (0, 0, 0)),     # w_q (scale folded)
            pl.BlockSpec((heads, D, dh), lambda b: (0, 0, 0)),     # w_k
            pl.BlockSpec((heads, D, dh), lambda b: (0, 0, 0)),     # w_v
            pl.BlockSpec((heads, dh, D), lambda b: (0, 0, 0)),     # w_out
            pl.BlockSpec((D, H), lambda b: (0, 0)),                # w1
            pl.BlockSpec((1, H), lambda b: (0, 0)),                # b1
            pl.BlockSpec((H, D), lambda b: (0, 0)),                # w2
        ],
        out_specs=pl.BlockSpec((1, N, D), lambda b: (b, 0, 0)),
        input_output_aliases={0: 0},
        compiler_params=pltpu.CompilerParams(dimension_semantics=("parallel",)),
    )(x, p["norms"], p["w_q"], p["w_k"], p["w_v"], p["w_out"],
      p["w1"], p["b1"], p["w2"])


@functools.partial(jax.jit, static_argnames=("heads", "dim_head"))
def transformer_forward(x, kernel_layers, *, heads, dim_head):
    for p in kernel_layers:
        x = transformer_layer(x, p, heads=heads, dim_head=dim_head)
    return x


# ---------------------------------------------------------------------------
# deterministic parameter construction (synthetic, torch-equivalent layout)
# ---------------------------------------------------------------------------
def init_params(key, *, dim, depth, heads, dim_head, mlp_dim):
    inner = heads * dim_head
    layers = []
    for _ in range(depth):
        key, k1, k2, k3, k4 = jax.random.split(key, 5)
        attn_p = {
            "ln_g": jnp.ones((1, dim), jnp.float32),
            "ln_b": jnp.zeros((1, dim), jnp.float32),
            # stored as [in, out] so math is x @ W (== torch x @ W.T with W[out,in])
            "w_qkv": 0.02 * jax.random.normal(k1, (dim, 3 * inner), jnp.float32),
            "w_out": 0.02 * jax.random.normal(k2, (inner, dim), jnp.float32),
        }
        ff_p = {
            "ln_g": jnp.ones((1, dim), jnp.float32),
            "ln_b": jnp.zeros((1, dim), jnp.float32),
            "w1": 0.02 * jax.random.normal(k3, (dim, mlp_dim), jnp.float32),
            "b1": jnp.zeros((1, mlp_dim), jnp.float32),
            "w2": 0.02 * jax.random.normal(k4, (mlp_dim, dim), jnp.float32),
            "b2": jnp.zeros((1, dim), jnp.float32),
        }
        layers.append((attn_p, ff_p))
    return layers


def prepare_params(layers, *, heads, dim_head):
    """Convert torch-like params to the kernel layout (head-batched bf16 weights,
    softmax scale folded into w_q, packed layernorm params)."""
    scale = dim_head ** -0.5
    prepped = []
    for attn_p, ff_p in layers:
        D = attn_p["w_qkv"].shape[0]
        inner = heads * dim_head
        w_qkv = attn_p["w_qkv"]

        def to_heads(w):  # (D, inner) -> (heads, D, dim_head)
            return jnp.transpose(w.reshape(D, heads, dim_head), (1, 0, 2))

        prepped.append({
            "norms": jnp.concatenate(
                [attn_p["ln_g"], attn_p["ln_b"],
                 ff_p["ln_g"], ff_p["ln_b"], ff_p["b2"]], axis=0
            ).astype(jnp.float32),                                        # (5, D)
            "w_q": to_heads(w_qkv[:, 0 * inner:1 * inner] * scale).astype(jnp.bfloat16),
            "w_k": to_heads(w_qkv[:, 1 * inner:2 * inner]).astype(jnp.bfloat16),
            "w_v": to_heads(w_qkv[:, 2 * inner:3 * inner]).astype(jnp.bfloat16),
            "w_out": attn_p["w_out"].reshape(heads, dim_head, D).astype(jnp.bfloat16),
            "w1": ff_p["w1"].astype(jnp.bfloat16),
            "b1": ff_p["b1"].astype(jnp.float32),
            "w2": ff_p["w2"].astype(jnp.bfloat16),
        })
    return prepped


# ---------------------------------------------------------------------------
# pure-JAX f32 reference (for correctness check only)
# ---------------------------------------------------------------------------
def _ref_forward(x, layers, *, heads, dim_head):
    def ln(x, g, b):
        m = jnp.mean(x, -1, keepdims=True)
        v = jnp.mean((x - m) ** 2, -1, keepdims=True)
        return (x - m) / jnp.sqrt(v + LN_EPS) * g + b

    inner = heads * dim_head
    for attn_p, ff_p in layers:
        xn = ln(x, attn_p["ln_g"], attn_p["ln_b"])
        qkv = xn @ attn_p["w_qkv"]
        q, k, v = jnp.split(qkv, 3, axis=-1)
        B, N, _ = x.shape
        rs = lambda t: t.reshape(B, N, heads, dim_head).transpose(0, 2, 1, 3)
        q, k, v = rs(q), rs(k), rs(v)
        dots = jnp.einsum("bhnd,bhmd->bhnm", q, k) * (dim_head ** -0.5)
        a = jax.nn.softmax(dots, axis=-1)
        o = jnp.einsum("bhnm,bhmd->bhnd", a, v).transpose(0, 2, 1, 3).reshape(B, N, inner)
        x = o @ attn_p["w_out"] + x
        xn = ln(x, ff_p["ln_g"], ff_p["ln_b"])
        h = xn @ ff_p["w1"] + ff_p["b1"]
        h = 0.5 * h * (1.0 + lax.erf(h / math.sqrt(2.0)))
        x = h @ ff_p["w2"] + ff_p["b2"] + x
    return x


if __name__ == "__main__":
    # small shapes consistent with the module
    B, N = 2, 8
    dim, depth, heads, dim_head, mlp_dim = 32, 2, 4, 8, 64

    key = jax.random.PRNGKey(0)
    kx, kp = jax.random.split(key)
    x = jax.random.normal(kx, (B, N, dim), jnp.float32)
    layers = init_params(kp, dim=dim, depth=depth, heads=heads,
                         dim_head=dim_head, mlp_dim=mlp_dim)
    kernel_layers = prepare_params(layers, heads=heads, dim_head=dim_head)

    out = transformer_forward(x, kernel_layers, heads=heads, dim_head=dim_head)
    out = jax.block_until_ready(out)

    ref = _ref_forward(x, layers, heads=heads, dim_head=dim_head)
    assert out.shape == (B, N, dim)
    max_err = float(jnp.max(jnp.abs(out - ref)))
    # bf16 matmul operands (f32 accumulate) + approx reciprocal => relaxed tolerance
    assert jnp.allclose(out, ref, atol=2e-2, rtol=2e-2), f"mismatch vs reference (max abs err {max_err})"

    print("KERNEL_OK")
</pallas_src>

<mosaic_0001>
module attributes {stable_mosaic.version = 11 : i64} {
  func.func @layer_kernel(%arg0: i32, %arg1: memref<1x8x32xf32, #tpu.memory_space<vmem>>, %arg2: memref<5x32xf32, #tpu.memory_space<vmem>>, %arg3: memref<4x32x8xbf16, #tpu.memory_space<vmem>>, %arg4: memref<4x32x8xbf16, #tpu.memory_space<vmem>>, %arg5: memref<4x32x8xbf16, #tpu.memory_space<vmem>>, %arg6: memref<4x8x32xbf16, #tpu.memory_space<vmem>>, %arg7: memref<32x64xbf16, #tpu.memory_space<vmem>>, %arg8: memref<1x64xf32, #tpu.memory_space<vmem>>, %arg9: memref<64x32xbf16, #tpu.memory_space<vmem>>, %arg10: memref<1x8x32xf32, #tpu.memory_space<vmem>>) attributes {dimension_semantics = [#tpu.dimension_semantics<parallel>], iteration_bounds = array<i64: 2>, scalar_prefetch = 0 : i64, scratch_operands = 0 : i64, tpu.core_type = #tpu.core_type<tc>, window_params = [{transform_indices = @transform_0, window_bounds = array<i64: 1, 8, 32>}, {pipeline_mode = #tpu.pipeline_mode<synchronous>, transform_indices = @transform_1, window_bounds = array<i64: 5, 32>}, {pipeline_mode = #tpu.pipeline_mode<synchronous>, transform_indices = @transform_2, window_bounds = array<i64: 4, 32, 8>}, {pipeline_mode = #tpu.pipeline_mode<synchronous>, transform_indices = @transform_3, window_bounds = array<i64: 4, 32, 8>}, {pipeline_mode = #tpu.pipeline_mode<synchronous>, transform_indices = @transform_4, window_bounds = array<i64: 4, 32, 8>}, {pipeline_mode = #tpu.pipeline_mode<synchronous>, transform_indices = @transform_5, window_bounds = array<i64: 4, 8, 32>}, {pipeline_mode = #tpu.pipeline_mode<synchronous>, transform_indices = @transform_6, window_bounds = array<i64: 32, 64>}, {pipeline_mode = #tpu.pipeline_mode<synchronous>, transform_indices = @transform_7, window_bounds = array<i64: 1, 64>}, {pipeline_mode = #tpu.pipeline_mode<synchronous>, transform_indices = @transform_8, window_bounds = array<i64: 64, 32>}, {transform_indices = @transform_9, window_bounds = array<i64: 1, 8, 32>}]} {
    %c0 = arith.constant 0 : index
    %c0_0 = arith.constant 0 : index
    %c0_1 = arith.constant 0 : index
    %0 = vector.load %arg1[%c0, %c0_0, %c0_1] : memref<1x8x32xf32, #tpu.memory_space<vmem>>, vector<1x8x32xf32>
    %1 = vector.shape_cast %0 : vector<1x8x32xf32> to vector<8x32xf32>
    %c0_2 = arith.constant 0 : index
    %c0_3 = arith.constant 0 : index
    %2 = vector.load %arg2[%c0_2, %c0_3] : memref<5x32xf32, #tpu.memory_space<vmem>>, vector<5x32xf32>
    %3 = vector.extract_strided_slice %2 {offsets = [0, 0], sizes = [1, 32], strides = [1, 1]} : vector<5x32xf32> to vector<1x32xf32>
    %4 = vector.extract_strided_slice %2 {offsets = [1, 0], sizes = [1, 32], strides = [1, 1]} : vector<5x32xf32> to vector<1x32xf32>
    %cst = arith.constant dense<0.000000e+00> : vector<8xf32>
    %5 = vector.multi_reduction <add>, %1, %cst [1] : vector<8x32xf32> to vector<8xf32>
    %6 = vector.shape_cast %5 : vector<8xf32> to vector<8x1xf32>
    %cst_4 = arith.constant 3.200000e+01 : f32
    %7 = vector.broadcast %cst_4 : f32 to vector<8x1xf32>
    %8 = arith.divf %6, %7 : vector<8x1xf32>
    %9 = vector.broadcast %8 : vector<8x1xf32> to vector<8x32xf32>
    %10 = arith.subf %1, %9 : vector<8x32xf32>
    %11 = arith.mulf %10, %10 : vector<8x32xf32>
    %cst_5 = arith.constant dense<0.000000e+00> : vector<8xf32>
    %12 = vector.multi_reduction <add>, %11, %cst_5 [1] : vector<8x32xf32> to vector<8xf32>
    %13 = vector.shape_cast %12 : vector<8xf32> to vector<8x1xf32>
    %cst_6 = arith.constant 3.200000e+01 : f32
    %14 = vector.broadcast %cst_6 : f32 to vector<8x1xf32>
    %15 = arith.divf %13, %14 : vector<8x1xf32>
    %cst_7 = arith.constant 9.99999974E-6 : f32
    %16 = vector.broadcast %cst_7 : f32 to vector<8x1xf32>
    %17 = arith.addf %15, %16 : vector<8x1xf32>
    %18 = math.rsqrt %17 : vector<8x1xf32>
    %19 = vector.broadcast %18 : vector<8x1xf32> to vector<8x32xf32>
    %20 = arith.mulf %10, %19 : vector<8x32xf32>
    %21 = vector.broadcast %3 : vector<1x32xf32> to vector<8x32xf32>
    %22 = arith.mulf %20, %21 : vector<8x32xf32>
    %23 = vector.broadcast %4 : vector<1x32xf32> to vector<8x32xf32>
    %24 = arith.addf %22, %23 : vector<8x32xf32>
    %25 = arith.truncf %24 : vector<8x32xf32> to vector<8x32xbf16>
    %26 = vector.shape_cast %25 : vector<8x32xbf16> to vector<1x8x32xbf16>
    %27 = vector.broadcast %26 : vector<1x8x32xbf16> to vector<4x8x32xbf16>
    %c0_8 = arith.constant 0 : index
    %c0_9 = arith.constant 0 : index
    %c0_10 = arith.constant 0 : index
    %28 = vector.load %arg3[%c0_8, %c0_9, %c0_10] : memref<4x32x8xbf16, #tpu.memory_space<vmem>>, vector<4x32x8xbf16>
    "tpu.trace_start"() <{level = 10 : i32, message = "hnd,hdk->hnk"}> : () -> ()
    %cst_11 = arith.constant dense<0.000000e+00> : vector<4x8x8xf32>
    %29 = tpu.matmul %27, %28, %cst_11 {dimension_numbers = #tpu.dot_dimension_numbers<[2], [1], [1], [2], [0, 0, 0, 1, 1, 2], [0], [0]>} : vector<4x8x32xbf16>, vector<4x32x8xbf16>, vector<4x8x8xf32> -> vector<4x8x8xf32>
    "tpu.trace_stop"() : () -> ()
    %c0_12 = arith.constant 0 : index
    %c0_13 = arith.constant 0 : index
    %c0_14 = arith.constant 0 : index
    %30 = vector.load %arg4[%c0_12, %c0_13, %c0_14] : memref<4x32x8xbf16, #tpu.memory_space<vmem>>, vector<4x32x8xbf16>
    "tpu.trace_start"() <{level = 10 : i32, message = "hnd,hdk->hnk"}> : () -> ()
    %cst_15 = arith.constant dense<0.000000e+00> : vector<4x8x8xf32>
    %31 = tpu.matmul %27, %30, %cst_15 {dimension_numbers = #tpu.dot_dimension_numbers<[2], [1], [1], [2], [0, 0, 0, 1, 1, 2], [0], [0]>} : vector<4x8x32xbf16>, vector<4x32x8xbf16>, vector<4x8x8xf32> -> vector<4x8x8xf32>
    "tpu.trace_stop"() : () -> ()
    %c0_16 = arith.constant 0 : index
    %c0_17 = arith.constant 0 : index
    %c0_18 = arith.constant 0 : index
    %32 = vector.load %arg5[%c0_16, %c0_17, %c0_18] : memref<4x32x8xbf16, #tpu.memory_space<vmem>>, vector<4x32x8xbf16>
    "tpu.trace_start"() <{level = 10 : i32, message = "hnd,hdk->hnk"}> : () -> ()
    %cst_19 = arith.constant dense<0.000000e+00> : vector<4x8x8xf32>
    %33 = tpu.matmul %27, %32, %cst_19 {dimension_numbers = #tpu.dot_dimension_numbers<[2], [1], [1], [2], [0, 0, 0, 1, 1, 2], [0], [0]>} : vector<4x8x32xbf16>, vector<4x32x8xbf16>, vector<4x8x8xf32> -> vector<4x8x8xf32>
    "tpu.trace_stop"() : () -> ()
    %34 = arith.truncf %29 : vector<4x8x8xf32> to vector<4x8x8xbf16>
    %35 = arith.truncf %31 : vector<4x8x8xf32> to vector<4x8x8xbf16>
    "tpu.trace_start"() <{level = 10 : i32, message = "hnk,hmk->hnm"}> : () -> ()
    %cst_20 = arith.constant dense<0.000000e+00> : vector<4x8x8xf32>
    %36 = tpu.matmul %34, %35, %cst_20 {dimension_numbers = #tpu.dot_dimension_numbers<[2], [2], [1], [1], [0, 0, 0, 1, 1, 1], [0], [0]>} : vector<4x8x8xbf16>, vector<4x8x8xbf16>, vector<4x8x8xf32> -> vector<4x8x8xf32>
    "tpu.trace_stop"() : () -> ()
    %cst_21 = arith.constant dense<0xFF800000> : vector<4x8xf32>
    %37 = vector.multi_reduction <maximumf>, %36, %cst_21 [2] : vector<4x8x8xf32> to vector<4x8xf32>
    %38 = vector.shape_cast %37 : vector<4x8xf32> to vector<4x8x1xf32>
    %39 = vector.broadcast %38 : vector<4x8x1xf32> to vector<4x8x8xf32>
    %40 = arith.subf %36, %39 : vector<4x8x8xf32>
    %41 = math.exp %40 : vector<4x8x8xf32>
    %cst_22 = arith.constant dense<0.000000e+00> : vector<4x8xf32>
    %42 = vector.multi_reduction <add>, %41, %cst_22 [2] : vector<4x8x8xf32> to vector<4x8xf32>
    %43 = vector.shape_cast %42 : vector<4x8xf32> to vector<4x8x1xf32>
    %44 = tpu.reciprocal %43 {approx = true} : vector<4x8x1xf32> -> vector<4x8x1xf32>
    %45 = vector.broadcast %44 : vector<4x8x1xf32> to vector<4x8x8xf32>
    %46 = arith.mulf %41, %45 : vector<4x8x8xf32>
    %47 = arith.truncf %46 : vector<4x8x8xf32> to vector<4x8x8xbf16>
    %48 = arith.truncf %33 : vector<4x8x8xf32> to vector<4x8x8xbf16>
    "tpu.trace_start"() <{level = 10 : i32, message = "hnm,hmk->hnk"}> : () -> ()
    %cst_23 = arith.constant dense<0.000000e+00> : vector<4x8x8xf32>
    %49 = tpu.matmul %47, %48, %cst_23 {dimension_numbers = #tpu.dot_dimension_numbers<[2], [1], [1], [2], [0, 0, 0, 1, 1, 2], [0], [0]>} : vector<4x8x8xbf16>, vector<4x8x8xbf16>, vector<4x8x8xf32> -> vector<4x8x8xf32>
    "tpu.trace_stop"() : () -> ()
    %50 = arith.truncf %49 : vector<4x8x8xf32> to vector<4x8x8xbf16>
    %c0_24 = arith.constant 0 : index
    %c0_25 = arith.constant 0 : index
    %c0_26 = arith.constant 0 : index
    %51 = vector.load %arg6[%c0_24, %c0_25, %c0_26] : memref<4x8x32xbf16, #tpu.memory_space<vmem>>, vector<4x8x32xbf16>
    "tpu.trace_start"() <{level = 10 : i32, message = "hnk,hkd->hnd"}> : () -> ()
    %cst_27 = arith.constant dense<0.000000e+00> : vector<4x8x32xf32>
    %52 = tpu.matmul %50, %51, %cst_27 {dimension_numbers = #tpu.dot_dimension_numbers<[2], [1], [1], [2], [0, 0, 0, 1, 1, 2], [0], [0]>} : vector<4x8x8xbf16>, vector<4x8x32xbf16>, vector<4x8x32xf32> -> vector<4x8x32xf32>
    "tpu.trace_stop"() : () -> ()
    %cst_28 = arith.constant dense<0.000000e+00> : vector<8x32xf32>
    %53 = vector.multi_reduction <add>, %52, %cst_28 [0] : vector<4x8x32xf32> to vector<8x32xf32>
    %54 = arith.addf %53, %1 : vector<8x32xf32>
    %55 = vector.extract_strided_slice %2 {offsets = [2, 0], sizes = [1, 32], strides = [1, 1]} : vector<5x32xf32> to vector<1x32xf32>
    %56 = vector.extract_strided_slice %2 {offsets = [3, 0], sizes = [1, 32], strides = [1, 1]} : vector<5x32xf32> to vector<1x32xf32>
    %cst_29 = arith.constant dense<0.000000e+00> : vector<8xf32>
    %57 = vector.multi_reduction <add>, %54, %cst_29 [1] : vector<8x32xf32> to vector<8xf32>
    %58 = vector.shape_cast %57 : vector<8xf32> to vector<8x1xf32>
    %cst_30 = arith.constant 3.200000e+01 : f32
    %59 = vector.broadcast %cst_30 : f32 to vector<8x1xf32>
    %60 = arith.divf %58, %59 : vector<8x1xf32>
    %61 = vector.broadcast %60 : vector<8x1xf32> to vector<8x32xf32>
    %62 = arith.subf %54, %61 : vector<8x32xf32>
    %63 = arith.mulf %62, %62 : vector<8x32xf32>
    %cst_31 = arith.constant dense<0.000000e+00> : vector<8xf32>
    %64 = vector.multi_reduction <add>, %63, %cst_31 [1] : vector<8x32xf32> to vector<8xf32>
    %65 = vector.shape_cast %64 : vector<8xf32> to vector<8x1xf32>
    %cst_32 = arith.constant 3.200000e+01 : f32
    %66 = vector.broadcast %cst_32 : f32 to vector<8x1xf32>
    %67 = arith.divf %65, %66 : vector<8x1xf32>
    %cst_33 = arith.constant 9.99999974E-6 : f32
    %68 = vector.broadcast %cst_33 : f32 to vector<8x1xf32>
    %69 = arith.addf %67, %68 : vector<8x1xf32>
    %70 = math.rsqrt %69 : vector<8x1xf32>
    %71 = vector.broadcast %70 : vector<8x1xf32> to vector<8x32xf32>
    %72 = arith.mulf %62, %71 : vector<8x32xf32>
    %73 = vector.broadcast %55 : vector<1x32xf32> to vector<8x32xf32>
    %74 = arith.mulf %72, %73 : vector<8x32xf32>
    %75 = vector.broadcast %56 : vector<1x32xf32> to vector<8x32xf32>
    %76 = arith.addf %74, %75 : vector<8x32xf32>
    %77 = arith.truncf %76 : vector<8x32xf32> to vector<8x32xbf16>
    %c0_34 = arith.constant 0 : index
    %c0_35 = arith.constant 0 : index
    %78 = vector.load %arg7[%c0_34, %c0_35] : memref<32x64xbf16, #tpu.memory_space<vmem>>, vector<32x64xbf16>
    %cst_36 = arith.constant dense<0.000000e+00> : vector<8x64xf32>
    %79 = tpu.matmul %77, %78, %cst_36 {dimension_numbers = #tpu.dot_dimension_numbers<[1], [0], [0], [1], [0, 0, 1, 1], [], []>} : vector<8x32xbf16>, vector<32x64xbf16>, vector<8x64xf32> -> vector<8x64xf32>
    %c0_37 = arith.constant 0 : index
    %c0_38 = arith.constant 0 : index
    %80 = vector.load %arg8[%c0_37, %c0_38] : memref<1x64xf32, #tpu.memory_space<vmem>>, vector<1x64xf32>
    %81 = vector.broadcast %80 : vector<1x64xf32> to vector<8x64xf32>
    %82 = arith.addf %79, %81 : vector<8x64xf32>
    %cst_39 = arith.constant 5.000000e-01 : f32
    %83 = vector.broadcast %cst_39 : f32 to vector<8x64xf32>
    %84 = arith.mulf %83, %82 : vector<8x64xf32>
    %cst_40 = arith.constant 0.707106769 : f32
    %85 = vector.broadcast %cst_40 : f32 to vector<8x64xf32>
    %86 = arith.mulf %82, %85 : vector<8x64xf32>
    %87 = math.erf %86 : vector<8x64xf32>
    %cst_41 = arith.constant 1.000000e+00 : f32
    %88 = vector.broadcast %cst_41 : f32 to vector<8x64xf32>
    %89 = arith.addf %88, %87 : vector<8x64xf32>
    %90 = arith.mulf %84, %89 : vector<8x64xf32>
    %91 = arith.truncf %90 : vector<8x64xf32> to vector<8x64xbf16>
    %c0_42 = arith.constant 0 : index
    %c0_43 = arith.constant 0 : index
    %92 = vector.load %arg9[%c0_42, %c0_43] : memref<64x32xbf16, #tpu.memory_space<vmem>>, vector<64x32xbf16>
    %cst_44 = arith.constant dense<0.000000e+00> : vector<8x32xf32>
    %93 = tpu.matmul %91, %92, %cst_44 {dimension_numbers = #tpu.dot_dimension_numbers<[1], [0], [0], [1], [0, 0, 1, 1], [], []>} : vector<8x64xbf16>, vector<64x32xbf16>, vector<8x32xf32> -> vector<8x32xf32>
    %94 = vector.extract_strided_slice %2 {offsets = [4, 0], sizes = [1, 32], strides = [1, 1]} : vector<5x32xf32> to vector<1x32xf32>
    %95 = vector.broadcast %94 : vector<1x32xf32> to vector<8x32xf32>
    %96 = arith.addf %93, %95 : vector<8x32xf32>
    %97 = arith.addf %96, %54 : vector<8x32xf32>
    %c0_45 = arith.constant 0 : index
    %c0_46 = arith.constant 0 : index
    %c0_47 = arith.constant 0 : index
    %98 = vector.load %arg10[%c0_45, %c0_46, %c0_47] : memref<1x8x32xf32, #tpu.memory_space<vmem>>, vector<1x8x32xf32>
    %99 = vector.shape_cast %98 : vector<1x8x32xf32> to vector<8x32xf32>
    %100 = vector.shape_cast %97 : vector<8x32xf32> to vector<1x8x32xf32>
    tpu.vector_store %arg10[%c0_45, %c0_46, %c0_47], %100 {strides = array<i32>} : memref<1x8x32xf32, #tpu.memory_space<vmem>>, vector<1x8x32xf32>,
    return
  }
  func.func @transform_0(%arg0: i32) -> (i32, i32, i32) {
    %c0_i32 = arith.constant 0 : i32
    %c0_i32_0 = arith.constant 0 : i32
    %c0_i32_1 = arith.constant 0 : i32
    return %arg0, %c0_i32, %c0_i32_0 : i32, i32, i32
  }
  func.func @transform_1(%arg0: i32) -> (i32, i32) {
    %c0_i32 = arith.constant 0 : i32
    %c0_i32_0 = arith.constant 0 : i32
    %c0_i32_1 = arith.constant 0 : i32
    return %c0_i32, %c0_i32_0 : i32, i32
  }
  func.func @transform_2(%arg0: i32) -> (i32, i32, i32) {
    %c0_i32 = arith.constant 0 : i32
    %c0_i32_0 = arith.constant 0 : i32
    %c0_i32_1 = arith.constant 0 : i32
    %c0_i32_2 = arith.constant 0 : i32
    return %c0_i32, %c0_i32_0, %c0_i32_1 : i32, i32, i32
  }
  func.func @transform_3(%arg0: i32) -> (i32, i32, i32) {
    %c0_i32 = arith.constant 0 : i32
    %c0_i32_0 = arith.constant 0 : i32
    %c0_i32_1 = arith.constant 0 : i32
    %c0_i32_2 = arith.constant 0 : i32
    return %c0_i32, %c0_i32_0, %c0_i32_1 : i32, i32, i32
  }
  func.func @transform_4(%arg0: i32) -> (i32, i32, i32) {
    %c0_i32 = arith.constant 0 : i32
    %c0_i32_0 = arith.constant 0 : i32
    %c0_i32_1 = arith.constant 0 : i32
    %c0_i32_2 = arith.constant 0 : i32
    return %c0_i32, %c0_i32_0, %c0_i32_1 : i32, i32, i32
  }
  func.func @transform_5(%arg0: i32) -> (i32, i32, i32) {
    %c0_i32 = arith.constant 0 : i32
    %c0_i32_0 = arith.constant 0 : i32
    %c0_i32_1 = arith.constant 0 : i32
    %c0_i32_2 = arith.constant 0 : i32
    return %c0_i32, %c0_i32_0, %c0_i32_1 : i32, i32, i32
  }
  func.func @transform_6(%arg0: i32) -> (i32, i32) {
    %c0_i32 = arith.constant 0 : i32
    %c0_i32_0 = arith.constant 0 : i32
    %c0_i32_1 = arith.constant 0 : i32
    return %c0_i32, %c0_i32_0 : i32, i32
  }
  func.func @transform_7(%arg0: i32) -> (i32, i32) {
    %c0_i32 = arith.constant 0 : i32
    %c0_i32_0 = arith.constant 0 : i32
    %c0_i32_1 = arith.constant 0 : i32
    return %c0_i32, %c0_i32_0 : i32, i32
  }
  func.func @transform_8(%arg0: i32) -> (i32, i32) {
    %c0_i32 = arith.constant 0 : i32
    %c0_i32_0 = arith.constant 0 : i32
    %c0_i32_1 = arith.constant 0 : i32
    return %c0_i32, %c0_i32_0 : i32, i32
  }
  func.func @transform_9(%arg0: i32) -> (i32, i32, i32) {
    %c0_i32 = arith.constant 0 : i32
    %c0_i32_0 = arith.constant 0 : i32
    %c0_i32_1 = arith.constant 0 : i32
    return %arg0, %c0_i32, %c0_i32_0 : i32, i32, i32
  }
}

module attributes {stable_mosaic.version = 11 : i64} {
  func.func @layer_kernel(%arg0: i32, %arg1: memref<1x8x32xf32, #tpu.memory_space<vmem>>, %arg2: memref<5x32xf32, #tpu.memory_space<vmem>>, %arg3: memref<4x32x8xbf16, #tpu.memory_space<vmem>>, %arg4: memref<4x32x8xbf16, #tpu.memory_space<vmem>>, %arg5: memref<4x32x8xbf16, #tpu.memory_space<vmem>>, %arg6: memref<4x8x32xbf16, #tpu.memory_space<vmem>>, %arg7: memref<32x64xbf16, #tpu.memory_space<vmem>>, %arg8: memref<1x64xf32, #tpu.memory_space<vmem>>, %arg9: memref<64x32xbf16, #tpu.memory_space<vmem>>, %arg10: memref<1x8x32xf32, #tpu.memory_space<vmem>>) attributes {dimension_semantics = [#tpu.dimension_semantics<parallel>], iteration_bounds = array<i64: 2>, scalar_prefetch = 0 : i64, scratch_operands = 0 : i64, tpu.core_type = #tpu.core_type<tc>, window_params = [{transform_indices = @transform_0, window_bounds = array<i64: 1, 8, 32>}, {pipeline_mode = #tpu.pipeline_mode<synchronous>, transform_indices = @transform_1, window_bounds = array<i64: 5, 32>}, {pipeline_mode = #tpu.pipeline_mode<synchronous>, transform_indices = @transform_2, window_bounds = array<i64: 4, 32, 8>}, {pipeline_mode = #tpu.pipeline_mode<synchronous>, transform_indices = @transform_3, window_bounds = array<i64: 4, 32, 8>}, {pipeline_mode = #tpu.pipeline_mode<synchronous>, transform_indices = @transform_4, window_bounds = array<i64: 4, 32, 8>}, {pipeline_mode = #tpu.pipeline_mode<synchronous>, transform_indices = @transform_5, window_bounds = array<i64: 4, 8, 32>}, {pipeline_mode = #tpu.pipeline_mode<synchronous>, transform_indices = @transform_6, window_bounds = array<i64: 32, 64>}, {pipeline_mode = #tpu.pipeline_mode<synchronous>, transform_indices = @transform_7, window_bounds = array<i64: 1, 64>}, {pipeline_mode = #tpu.pipeline_mode<synchronous>, transform_indices = @transform_8, window_bounds = array<i64: 64, 32>}, {transform_indices = @transform_9, window_bounds = array<i64: 1, 8, 32>}]} {
    %c0 = arith.constant 0 : index
    %c0_0 = arith.constant 0 : index
    %c0_1 = arith.constant 0 : index
    %0 = vector.load %arg1[%c0, %c0_0, %c0_1] : memref<1x8x32xf32, #tpu.memory_space<vmem>>, vector<1x8x32xf32>
    %1 = vector.shape_cast %0 : vector<1x8x32xf32> to vector<8x32xf32>
    %c0_2 = arith.constant 0 : index
    %c0_3 = arith.constant 0 : index
    %2 = vector.load %arg2[%c0_2, %c0_3] : memref<5x32xf32, #tpu.memory_space<vmem>>, vector<5x32xf32>
    %3 = vector.extract_strided_slice %2 {offsets = [0, 0], sizes = [1, 32], strides = [1, 1]} : vector<5x32xf32> to vector<1x32xf32>
    %4 = vector.extract_strided_slice %2 {offsets = [1, 0], sizes = [1, 32], strides = [1, 1]} : vector<5x32xf32> to vector<1x32xf32>
    %cst = arith.constant dense<0.000000e+00> : vector<8xf32>
    %5 = vector.multi_reduction <add>, %1, %cst [1] : vector<8x32xf32> to vector<8xf32>
    %6 = vector.shape_cast %5 : vector<8xf32> to vector<8x1xf32>
    %cst_4 = arith.constant 3.200000e+01 : f32
    %7 = vector.broadcast %cst_4 : f32 to vector<8x1xf32>
    %8 = arith.divf %6, %7 : vector<8x1xf32>
    %9 = vector.broadcast %8 : vector<8x1xf32> to vector<8x32xf32>
    %10 = arith.subf %1, %9 : vector<8x32xf32>
    %11 = arith.mulf %10, %10 : vector<8x32xf32>
    %cst_5 = arith.constant dense<0.000000e+00> : vector<8xf32>
    %12 = vector.multi_reduction <add>, %11, %cst_5 [1] : vector<8x32xf32> to vector<8xf32>
    %13 = vector.shape_cast %12 : vector<8xf32> to vector<8x1xf32>
    %cst_6 = arith.constant 3.200000e+01 : f32
    %14 = vector.broadcast %cst_6 : f32 to vector<8x1xf32>
    %15 = arith.divf %13, %14 : vector<8x1xf32>
    %cst_7 = arith.constant 9.99999974E-6 : f32
    %16 = vector.broadcast %cst_7 : f32 to vector<8x1xf32>
    %17 = arith.addf %15, %16 : vector<8x1xf32>
    %18 = math.rsqrt %17 : vector<8x1xf32>
    %19 = vector.broadcast %18 : vector<8x1xf32> to vector<8x32xf32>
    %20 = arith.mulf %10, %19 : vector<8x32xf32>
    %21 = vector.broadcast %3 : vector<1x32xf32> to vector<8x32xf32>
    %22 = arith.mulf %20, %21 : vector<8x32xf32>
    %23 = vector.broadcast %4 : vector<1x32xf32> to vector<8x32xf32>
    %24 = arith.addf %22, %23 : vector<8x32xf32>
    %25 = arith.truncf %24 : vector<8x32xf32> to vector<8x32xbf16>
    %26 = vector.shape_cast %25 : vector<8x32xbf16> to vector<1x8x32xbf16>
    %27 = vector.broadcast %26 : vector<1x8x32xbf16> to vector<4x8x32xbf16>
    %c0_8 = arith.constant 0 : index
    %c0_9 = arith.constant 0 : index
    %c0_10 = arith.constant 0 : index
    %28 = vector.load %arg3[%c0_8, %c0_9, %c0_10] : memref<4x32x8xbf16, #tpu.memory_space<vmem>>, vector<4x32x8xbf16>
    "tpu.trace_start"() <{level = 10 : i32, message = "hnd,hdk->hnk"}> : () -> ()
    %cst_11 = arith.constant dense<0.000000e+00> : vector<4x8x8xf32>
    %29 = tpu.matmul %27, %28, %cst_11 {dimension_numbers = #tpu.dot_dimension_numbers<[2], [1], [1], [2], [0, 0, 0, 1, 1, 2], [0], [0]>} : vector<4x8x32xbf16>, vector<4x32x8xbf16>, vector<4x8x8xf32> -> vector<4x8x8xf32>
    "tpu.trace_stop"() : () -> ()
    %c0_12 = arith.constant 0 : index
    %c0_13 = arith.constant 0 : index
    %c0_14 = arith.constant 0 : index
    %30 = vector.load %arg4[%c0_12, %c0_13, %c0_14] : memref<4x32x8xbf16, #tpu.memory_space<vmem>>, vector<4x32x8xbf16>
    "tpu.trace_start"() <{level = 10 : i32, message = "hnd,hdk->hnk"}> : () -> ()
    %cst_15 = arith.constant dense<0.000000e+00> : vector<4x8x8xf32>
    %31 = tpu.matmul %27, %30, %cst_15 {dimension_numbers = #tpu.dot_dimension_numbers<[2], [1], [1], [2], [0, 0, 0, 1, 1, 2], [0], [0]>} : vector<4x8x32xbf16>, vector<4x32x8xbf16>, vector<4x8x8xf32> -> vector<4x8x8xf32>
    "tpu.trace_stop"() : () -> ()
    %c0_16 = arith.constant 0 : index
    %c0_17 = arith.constant 0 : index
    %c0_18 = arith.constant 0 : index
    %32 = vector.load %arg5[%c0_16, %c0_17, %c0_18] : memref<4x32x8xbf16, #tpu.memory_space<vmem>>, vector<4x32x8xbf16>
    "tpu.trace_start"() <{level = 10 : i32, message = "hnd,hdk->hnk"}> : () -> ()
    %cst_19 = arith.constant dense<0.000000e+00> : vector<4x8x8xf32>
    %33 = tpu.matmul %27, %32, %cst_19 {dimension_numbers = #tpu.dot_dimension_numbers<[2], [1], [1], [2], [0, 0, 0, 1, 1, 2], [0], [0]>} : vector<4x8x32xbf16>, vector<4x32x8xbf16>, vector<4x8x8xf32> -> vector<4x8x8xf32>
    "tpu.trace_stop"() : () -> ()
    %34 = arith.truncf %29 : vector<4x8x8xf32> to vector<4x8x8xbf16>
    %35 = arith.truncf %31 : vector<4x8x8xf32> to vector<4x8x8xbf16>
    "tpu.trace_start"() <{level = 10 : i32, message = "hnk,hmk->hnm"}> : () -> ()
    %cst_20 = arith.constant dense<0.000000e+00> : vector<4x8x8xf32>
    %36 = tpu.matmul %34, %35, %cst_20 {dimension_numbers = #tpu.dot_dimension_numbers<[2], [2], [1], [1], [0, 0, 0, 1, 1, 1], [0], [0]>} : vector<4x8x8xbf16>, vector<4x8x8xbf16>, vector<4x8x8xf32> -> vector<4x8x8xf32>
    "tpu.trace_stop"() : () -> ()
    %cst_21 = arith.constant dense<0xFF800000> : vector<4x8xf32>
    %37 = vector.multi_reduction <maximumf>, %36, %cst_21 [2] : vector<4x8x8xf32> to vector<4x8xf32>
    %38 = vector.shape_cast %37 : vector<4x8xf32> to vector<4x8x1xf32>
    %39 = vector.broadcast %38 : vector<4x8x1xf32> to vector<4x8x8xf32>
    %40 = arith.subf %36, %39 : vector<4x8x8xf32>
    %41 = math.exp %40 : vector<4x8x8xf32>
    %cst_22 = arith.constant dense<0.000000e+00> : vector<4x8xf32>
    %42 = vector.multi_reduction <add>, %41, %cst_22 [2] : vector<4x8x8xf32> to vector<4x8xf32>
    %43 = vector.shape_cast %42 : vector<4x8xf32> to vector<4x8x1xf32>
    %44 = tpu.reciprocal %43 {approx = true} : vector<4x8x1xf32> -> vector<4x8x1xf32>
    %45 = vector.broadcast %44 : vector<4x8x1xf32> to vector<4x8x8xf32>
    %46 = arith.mulf %41, %45 : vector<4x8x8xf32>
    %47 = arith.truncf %46 : vector<4x8x8xf32> to vector<4x8x8xbf16>
    %48 = arith.truncf %33 : vector<4x8x8xf32> to vector<4x8x8xbf16>
    "tpu.trace_start"() <{level = 10 : i32, message = "hnm,hmk->hnk"}> : () -> ()
    %cst_23 = arith.constant dense<0.000000e+00> : vector<4x8x8xf32>
    %49 = tpu.matmul %47, %48, %cst_23 {dimension_numbers = #tpu.dot_dimension_numbers<[2], [1], [1], [2], [0, 0, 0, 1, 1, 2], [0], [0]>} : vector<4x8x8xbf16>, vector<4x8x8xbf16>, vector<4x8x8xf32> -> vector<4x8x8xf32>
    "tpu.trace_stop"() : () -> ()
    %50 = arith.truncf %49 : vector<4x8x8xf32> to vector<4x8x8xbf16>
    %c0_24 = arith.constant 0 : index
    %c0_25 = arith.constant 0 : index
    %c0_26 = arith.constant 0 : index
    %51 = vector.load %arg6[%c0_24, %c0_25, %c0_26] : memref<4x8x32xbf16, #tpu.memory_space<vmem>>, vector<4x8x32xbf16>
    "tpu.trace_start"() <{level = 10 : i32, message = "hnk,hkd->hnd"}> : () -> ()
    %cst_27 = arith.constant dense<0.000000e+00> : vector<4x8x32xf32>
    %52 = tpu.matmul %50, %51, %cst_27 {dimension_numbers = #tpu.dot_dimension_numbers<[2], [1], [1], [2], [0, 0, 0, 1, 1, 2], [0], [0]>} : vector<4x8x8xbf16>, vector<4x8x32xbf16>, vector<4x8x32xf32> -> vector<4x8x32xf32>
    "tpu.trace_stop"() : () -> ()
    %cst_28 = arith.constant dense<0.000000e+00> : vector<8x32xf32>
    %53 = vector.multi_reduction <add>, %52, %cst_28 [0] : vector<4x8x32xf32> to vector<8x32xf32>
    %54 = arith.addf %53, %1 : vector<8x32xf32>
    %55 = vector.extract_strided_slice %2 {offsets = [2, 0], sizes = [1, 32], strides = [1, 1]} : vector<5x32xf32> to vector<1x32xf32>
    %56 = vector.extract_strided_slice %2 {offsets = [3, 0], sizes = [1, 32], strides = [1, 1]} : vector<5x32xf32> to vector<1x32xf32>
    %cst_29 = arith.constant dense<0.000000e+00> : vector<8xf32>
    %57 = vector.multi_reduction <add>, %54, %cst_29 [1] : vector<8x32xf32> to vector<8xf32>
    %58 = vector.shape_cast %57 : vector<8xf32> to vector<8x1xf32>
    %cst_30 = arith.constant 3.200000e+01 : f32
    %59 = vector.broadcast %cst_30 : f32 to vector<8x1xf32>
    %60 = arith.divf %58, %59 : vector<8x1xf32>
    %61 = vector.broadcast %60 : vector<8x1xf32> to vector<8x32xf32>
    %62 = arith.subf %54, %61 : vector<8x32xf32>
    %63 = arith.mulf %62, %62 : vector<8x32xf32>
    %cst_31 = arith.constant dense<0.000000e+00> : vector<8xf32>
    %64 = vector.multi_reduction <add>, %63, %cst_31 [1] : vector<8x32xf32> to vector<8xf32>
    %65 = vector.shape_cast %64 : vector<8xf32> to vector<8x1xf32>
    %cst_32 = arith.constant 3.200000e+01 : f32
    %66 = vector.broadcast %cst_32 : f32 to vector<8x1xf32>
    %67 = arith.divf %65, %66 : vector<8x1xf32>
    %cst_33 = arith.constant 9.99999974E-6 : f32
    %68 = vector.broadcast %cst_33 : f32 to vector<8x1xf32>
    %69 = arith.addf %67, %68 : vector<8x1xf32>
    %70 = math.rsqrt %69 : vector<8x1xf32>
    %71 = vector.broadcast %70 : vector<8x1xf32> to vector<8x32xf32>
    %72 = arith.mulf %62, %71 : vector<8x32xf32>
    %73 = vector.broadcast %55 : vector<1x32xf32> to vector<8x32xf32>
    %74 = arith.mulf %72, %73 : vector<8x32xf32>
    %75 = vector.broadcast %56 : vector<1x32xf32> to vector<8x32xf32>
    %76 = arith.addf %74, %75 : vector<8x32xf32>
    %77 = arith.truncf %76 : vector<8x32xf32> to vector<8x32xbf16>
    %c0_34 = arith.constant 0 : index
    %c0_35 = arith.constant 0 : index
    %78 = vector.load %arg7[%c0_34, %c0_35] : memref<32x64xbf16, #tpu.memory_space<vmem>>, vector<32x64xbf16>
    %cst_36 = arith.constant dense<0.000000e+00> : vector<8x64xf32>
    %79 = tpu.matmul %77, %78, %cst_36 {dimension_numbers = #tpu.dot_dimension_numbers<[1], [0], [0], [1], [0, 0, 1, 1], [], []>} : vector<8x32xbf16>, vector<32x64xbf16>, vector<8x64xf32> -> vector<8x64xf32>
    %c0_37 = arith.constant 0 : index
    %c0_38 = arith.constant 0 : index
    %80 = vector.load %arg8[%c0_37, %c0_38] : memref<1x64xf32, #tpu.memory_space<vmem>>, vector<1x64xf32>
    %81 = vector.broadcast %80 : vector<1x64xf32> to vector<8x64xf32>
    %82 = arith.addf %79, %81 : vector<8x64xf32>
    %cst_39 = arith.constant 5.000000e-01 : f32
    %83 = vector.broadcast %cst_39 : f32 to vector<8x64xf32>
    %84 = arith.mulf %83, %82 : vector<8x64xf32>
    %cst_40 = arith.constant 0.707106769 : f32
    %85 = vector.broadcast %cst_40 : f32 to vector<8x64xf32>
    %86 = arith.mulf %82, %85 : vector<8x64xf32>
    %87 = math.erf %86 : vector<8x64xf32>
    %cst_41 = arith.constant 1.000000e+00 : f32
    %88 = vector.broadcast %cst_41 : f32 to vector<8x64xf32>
    %89 = arith.addf %88, %87 : vector<8x64xf32>
    %90 = arith.mulf %84, %89 : vector<8x64xf32>
    %91 = arith.truncf %90 : vector<8x64xf32> to vector<8x64xbf16>
    %c0_42 = arith.constant 0 : index
    %c0_43 = arith.constant 0 : index
    %92 = vector.load %arg9[%c0_42, %c0_43] : memref<64x32xbf16, #tpu.memory_space<vmem>>, vector<64x32xbf16>
    %cst_44 = arith.constant dense<0.000000e+00> : vector<8x32xf32>
    %93 = tpu.matmul %91, %92, %cst_44 {dimension_numbers = #tpu.dot_dimension_numbers<[1], [0], [0], [1], [0, 0, 1, 1], [], []>} : vector<8x64xbf16>, vector<64x32xbf16>, vector<8x32xf32> -> vector<8x32xf32>
    %94 = vector.extract_strided_slice %2 {offsets = [4, 0], sizes = [1, 32], strides = [1, 1]} : vector<5x32xf32> to vector<1x32xf32>
    %95 = vector.broadcast %94 : vector<1x32xf32> to vector<8x32xf32>
    %96 = arith.addf %93, %95 : vector<8x32xf32>
    %97 = arith.addf %96, %54 : vector<8x32xf32>
    %c0_45 = arith.constant 0 : index
    %c0_46 = arith.constant 0 : index
    %c0_47 = arith.constant 0 : index
    %98 = vector.load %arg10[%c0_45, %c0_46, %c0_47] : memref<1x8x32xf32, #tpu.memory_space<vmem>>, vector<1x8x32xf32>
    %99 = vector.shape_cast %98 : vector<1x8x32xf32> to vector<8x32xf32>
    %100 = vector.shape_cast %97 : vector<8x32xf32> to vector<1x8x32xf32>
    tpu.vector_store %arg10[%c0_45, %c0_46, %c0_47], %100 {strides = array<i32>} : memref<1x8x32xf32, #tpu.memory_space<vmem>>, vector<1x8x32xf32>,
    return
  }
  func.func @transform_0(%arg0: i32) -> (i32, i32, i32) {
    %c0_i32 = arith.constant 0 : i32
    %c0_i32_0 = arith.constant 0 : i32
    %c0_i32_1 = arith.constant 0 : i32
    return %arg0, %c0_i32, %c0_i32_0 : i32, i32, i32
  }
  func.func @transform_1(%arg0: i32) -> (i32, i32) {
    %c0_i32 = arith.constant 0 : i32
    %c0_i32_0 = arith.constant 0 : i32
    %c0_i32_1 = arith.constant 0 : i32
    return %c0_i32, %c0_i32_0 : i32, i32
  }
  func.func @transform_2(%arg0: i32) -> (i32, i32, i32) {
    %c0_i32 = arith.constant 0 : i32
    %c0_i32_0 = arith.constant 0 : i32
    %c0_i32_1 = arith.constant 0 : i32
    %c0_i32_2 = arith.constant 0 : i32
    return %c0_i32, %c0_i32_0, %c0_i32_1 : i32, i32, i32
  }
  func.func @transform_3(%arg0: i32) -> (i32, i32, i32) {
    %c0_i32 = arith.constant 0 : i32
    %c0_i32_0 = arith.constant 0 : i32
    %c0_i32_1 = arith.constant 0 : i32
    %c0_i32_2 = arith.constant 0 : i32
    return %c0_i32, %c0_i32_0, %c0_i32_1 : i32, i32, i32
  }
  func.func @transform_4(%arg0: i32) -> (i32, i32, i32) {
    %c0_i32 = arith.constant 0 : i32
    %c0_i32_0 = arith.constant 0 : i32
    %c0_i32_1 = arith.constant 0 : i32
    %c0_i32_2 = arith.constant 0 : i32
    return %c0_i32, %c0_i32_0, %c0_i32_1 : i32, i32, i32
  }
  func.func @transform_5(%arg0: i32) -> (i32, i32, i32) {
    %c0_i32 = arith.constant 0 : i32
    %c0_i32_0 = arith.constant 0 : i32
    %c0_i32_1 = arith.constant 0 : i32
    %c0_i32_2 = arith.constant 0 : i32
    return %c0_i32, %c0_i32_0, %c0_i32_1 : i32, i32, i32
  }
  func.func @transform_6(%arg0: i32) -> (i32, i32) {
    %c0_i32 = arith.constant 0 : i32
    %c0_i32_0 = arith.constant 0 : i32
    %c0_i32_1 = arith.constant 0 : i32
    return %c0_i32, %c0_i32_0 : i32, i32
  }
  func.func @transform_7(%arg0: i32) -> (i32, i32) {
    %c0_i32 = arith.constant 0 : i32
    %c0_i32_0 = arith.constant 0 : i32
    %c0_i32_1 = arith.constant 0 : i32
    return %c0_i32, %c0_i32_0 : i32, i32
  }
  func.func @transform_8(%arg0: i32) -> (i32, i32) {
    %c0_i32 = arith.constant 0 : i32
    %c0_i32_0 = arith.constant 0 : i32
    %c0_i32_1 = arith.constant 0 : i32
    return %c0_i32, %c0_i32_0 : i32, i32
  }
  func.func @transform_9(%arg0: i32) -> (i32, i32, i32) {
    %c0_i32 = arith.constant 0 : i32
    %c0_i32_0 = arith.constant 0 : i32
    %c0_i32_1 = arith.constant 0 : i32
    return %arg0, %c0_i32, %c0_i32_0 : i32, i32, i32
  }
}

</mosaic_0001>

<llo_original>
// kernel: transformer_forward.3
$region0: #{transformer_forward.3}
  #allocation0 [shape = 'u32[]', space=smem, size = 0x4, offset = 0x4, fixed_abs, tag = 'smem constant byte address 0x4 - core index']
  #allocation1 [shape = 'u32[144,128]{1,0:T(1,128)}', space=vmem, size = 0x12000, scoped, tag = 'internal scratch']
  %s0 = inlined_call_operand.hbm [shape: f32[2,8,32], index: 0, kind: input, shape index: {}, may-alias: {0,9}]
  %s1 = inlined_call_operand.vmem [shape: f32[5,32], index: 1, kind: input, shape index: {}]
  %s2 = inlined_call_operand.vmem [shape: bf16[4,32,8], index: 2, kind: input, shape index: {}]
  %s3 = inlined_call_operand.vmem [shape: bf16[4,32,8], index: 3, kind: input, shape index: {}]
  %s4 = inlined_call_operand.vmem [shape: bf16[4,32,8], index: 4, kind: input, shape index: {}]
  %s5 = inlined_call_operand.vmem [shape: bf16[4,8,32], index: 5, kind: input, shape index: {}]
  %s6 = inlined_call_operand.vmem [shape: bf16[32,64], index: 6, kind: input, shape index: {}]
  %s7 = inlined_call_operand.vmem [shape: f32[1,64], index: 7, kind: input, shape index: {}]
  %s8 = inlined_call_operand.vmem [shape: bf16[64,32], index: 8, kind: input, shape index: {}]
  %s9 = inlined_call_operand.hbm [shape: f32[2,8,32], index: 9, kind: output, shape index: {}, may-alias: {0,9}]
  %s10 = sld [smem:[#allocation0]]
  $region73: #{transformer_forward.3} parent=0
    _
  %s12 = ssub.s32 1, %s10
  %s13 = scalar_select 0, %s12, %s10
  $region1: #{transformer_forward.3} parent=0
    #allocation2 [shape = 'u8[8192]{0}', space=vmem, size = 0x2000, scoped, tag = 'input window, operand 0']
    #allocation3 [shape = 's32[2]{0}', space=sflag, size = 0x8, scoped, tag = 'scoped memory for transformer_forward.3']
    #allocation4 [shape = 's32[2]{0}', space=sflag, size = 0x8, scoped, tag = 'scoped memory for transformer_forward.3']
    #allocation5 [shape = 'u8[8192]{0}', space=vmem, size = 0x2000, scoped, tag = 'output window, operand 0']
    %14 = vsyncpa [#allocation3], 0
    %s15 = scalar_lea.sflag [#allocation3], 1
    %16 = vsyncpa %s15, 0
    %17 = vsyncpa [#allocation4], 0
    %s18 = scalar_lea.sflag [#allocation4], 1
    %19 = vsyncpa %s18, 0
    loop: start=0, step=1, limit=4
    $region2: #{transformer_forward.3} parent=1 // loop_pre_header
      _
    $region3: #{transformer_forward.3} parent=1 // loop_header
      %s21 = sphi 0, %s25
      %p22 = scmp.ge.s32.totalorder %s21, 4
      %s31 = sphi 0, %s33
      %s34 = sphi 0, %s31
      %s35 = sphi 0, %s34
      %s51 = sphi 0, %s35
      %s55 = sphi 0, %s55
      %s57 = sphi 0, %s55
      %s58 = sphi 0, %s57
      %s72 = sphi 0, %s58
      %s76 = sphi 0, %s76
      %s78 = sphi 0, %s76
      %s79 = sphi 0, %s78
      %s93 = sphi 0, %s79
      %s97 = sphi 0, %s97
      %s99 = sphi 0, %s97
      %s100 = sphi 0, %s99
      %s114 = sphi 0, %s100
      %s118 = sphi 0, %s118
      %s120 = sphi 0, %s118
      %s121 = sphi 0, %s120
      %s135 = sphi 0, %s121
      %s139 = sphi 0, %s139
      %s141 = sphi 0, %s139
      %s142 = sphi 0, %s141
      %s156 = sphi 0, %s142
      %s160 = sphi 0, %s160
      %s162 = sphi 0, %s160
      %s163 = sphi 0, %s162
      %s177 = sphi 0, %s163
      %s181 = sphi 0, %s181
      %s183 = sphi 0, %s181
      %s184 = sphi 0, %s183
      %s198 = sphi 0, %s184
      %s202 = sphi 0, %s202
      %s204 = sphi 0, %s202
      %s205 = sphi 0, %s204
      %s219 = sphi 0, %s205
      %s225 = sphi 0, %s227
      %s228 = sphi 0, %s225
      %s229 = sphi 0, %s228
      %s245 = sphi 0, %s229
    $region4: #{transformer_forward.3} parent=1 // loop_header_branch
      %24 = sbr.rel (%p22) target = $region8
    $region5: #{transformer_forward.3} parent=1 // loop_body
      %s26 = ssub.s32 %s21, 1
      %s27 = ssub.s32 %s21, 2
      %s28 = sadd.s32 %s21, 1
      %s29 = ssub.s32 %s21, %s28
      %p30 = scmp.eq.s32.totalorder %s29, 0
      %s32 = sadd.s32 %s31, 1
      %s33 = scalar_select %p30, %s31, %s32
      %p36 = pneg %p30
      %p37 = scmp.eq.s32.totalorder %s21, 1
      %p38 = por %p36, %p37
      %p39 = scmp.ne.s32.totalorder %s31, %s34
      %p40 = scmp.eq.s32.totalorder %s21, 0
      %p41 = por %p39, %p40
      %p42 = scmp.ne.s32.totalorder %s31, %s34
      %p43 = scmp.eq.s32.totalorder %s26, 1
      %p44 = por %p42, %p43
      %p45 = scmp.ne.s32.totalorder %s34, %s35
      %p46 = scmp.eq.s32.totalorder %s26, 0
      %p47 = por %p45, %p46
      %p48 = scmp.ne.s32.totalorder %s34, %s35
      %p49 = scmp.eq.s32.totalorder %s27, 1
      %p50 = por %p48, %p49
      %p52 = scmp.ne.s32.totalorder %s35, %s51
      %p53 = scmp.eq.s32.totalorder %s27, 0
      %p54 = por %p52, %p53
      %s56 = sadd.s32 %s55, 1
      %p59 = scmp.eq.s32.totalorder %s21, 1
      %p60 = scmp.ne.s32.totalorder %s55, %s57
      %p61 = scmp.eq.s32.totalorder %s21, 0
      %p62 = por %p60, %p61
      %p63 = scmp.ne.s32.totalorder %s55, %s57
      %p64 = scmp.eq.s32.totalorder %s26, 1
      %p65 = por %p63, %p64
      %p66 = scmp.ne.s32.totalorder %s57, %s58
      %p67 = scmp.eq.s32.totalorder %s26, 0
      %p68 = por %p66, %p67
      %p69 = scmp.ne.s32.totalorder %s57, %s58
      %p70 = scmp.eq.s32.totalorder %s27, 1
      %p71 = por %p69, %p70
      %p73 = scmp.ne.s32.totalorder %s58, %s72
      %p74 = scmp.eq.s32.totalorder %s27, 0
      %p75 = por %p73, %p74
      %s77 = sadd.s32 %s76, 1
      %p80 = scmp.eq.s32.totalorder %s21, 1
      %p81 = scmp.ne.s32.totalorder %s76, %s78
      %p82 = scmp.eq.s32.totalorder %s21, 0
      %p83 = por %p81, %p82
      %p84 = scmp.ne.s32.totalorder %s76, %s78
      %p85 = scmp.eq.s32.totalorder %s26, 1
      %p86 = por %p84, %p85
      %p87 = scmp.ne.s32.totalorder %s78, %s79
      %p88 = scmp.eq.s32.totalorder %s26, 0
      %p89 = por %p87, %p88
      %p90 = scmp.ne.s32.totalorder %s78, %s79
      %p91 = scmp.eq.s32.totalorder %s27, 1
      %p92 = por %p90, %p91
      %p94 = scmp.ne.s32.totalorder %s79, %s93
      %p95 = scmp.eq.s32.totalorder %s27, 0
      %p96 = por %p94, %p95
      %s98 = sadd.s32 %s97, 1
      %p101 = scmp.eq.s32.totalorder %s21, 1
      %p102 = scmp.ne.s32.totalorder %s97, %s99
      %p103 = scmp.eq.s32.totalorder %s21, 0
      %p104 = por %p102, %p103
      %p105 = scmp.ne.s32.totalorder %s97, %s99
      %p106 = scmp.eq.s32.totalorder %s26, 1
      %p107 = por %p105, %p106
      %p108 = scmp.ne.s32.totalorder %s99, %s100
      %p109 = scmp.eq.s32.totalorder %s26, 0
      %p110 = por %p108, %p109
      %p111 = scmp.ne.s32.totalorder %s99, %s100
      %p112 = scmp.eq.s32.totalorder %s27, 1
      %p113 = por %p111, %p112
      %p115 = scmp.ne.s32.totalorder %s100, %s114
      %p116 = scmp.eq.s32.totalorder %s27, 0
      %p117 = por %p115, %p116
      %s119 = sadd.s32 %s118, 1
      %p122 = scmp.eq.s32.totalorder %s21, 1
      %p123 = scmp.ne.s32.totalorder %s118, %s120
      %p124 = scmp.eq.s32.totalorder %s21, 0
      %p125 = por %p123, %p124
      %p126 = scmp.ne.s32.totalorder %s118, %s120
      %p127 = scmp.eq.s32.totalorder %s26, 1
      %p128 = por %p126, %p127
      %p129 = scmp.ne.s32.totalorder %s120, %s121
      %p130 = scmp.eq.s32.totalorder %s26, 0
      %p131 = por %p129, %p130
      %p132 = scmp.ne.s32.totalorder %s120, %s121
      %p133 = scmp.eq.s32.totalorder %s27, 1
      %p134 = por %p132, %p133
      %p136 = scmp.ne.s32.totalorder %s121, %s135
      %p137 = scmp.eq.s32.totalorder %s27, 0
      %p138 = por %p136, %p137
      %s140 = sadd.s32 %s139, 1
      %p143 = scmp.eq.s32.totalorder %s21, 1
      %p144 = scmp.ne.s32.totalorder %s139, %s141
      %p145 = scmp.eq.s32.totalorder %s21, 0
      %p146 = por %p144, %p145
      %p147 = scmp.ne.s32.totalorder %s139, %s141
      %p148 = scmp.eq.s32.totalorder %s26, 1
      %p149 = por %p147, %p148
      %p150 = scmp.ne.s32.totalorder %s141, %s142
      %p151 = scmp.eq.s32.totalorder %s26, 0
      %p152 = por %p150, %p151
      %p153 = scmp.ne.s32.totalorder %s141, %s142
      %p154 = scmp.eq.s32.totalorder %s27, 1
      %p155 = por %p153, %p154
      %p157 = scmp.ne.s32.totalorder %s142, %s156
      %p158 = scmp.eq.s32.totalorder %s27, 0
      %p159 = por %p157, %p158
      %s161 = sadd.s32 %s160, 1
      %p164 = scmp.eq.s32.totalorder %s21, 1
      %p165 = scmp.ne.s32.totalorder %s160, %s162
      %p166 = scmp.eq.s32.totalorder %s21, 0
      %p167 = por %p165, %p166
      %p168 = scmp.ne.s32.totalorder %s160, %s162
      %p169 = scmp.eq.s32.totalorder %s26, 1
      %p170 = por %p168, %p169
      %p171 = scmp.ne.s32.totalorder %s162, %s163
      %p172 = scmp.eq.s32.totalorder %s26, 0
      %p173 = por %p171, %p172
      %p174 = scmp.ne.s32.totalorder %s162, %s163
      %p175 = scmp.eq.s32.totalorder %s27, 1
      %p176 = por %p174, %p175
      %p178 = scmp.ne.s32.totalorder %s163, %s177
      %p179 = scmp.eq.s32.totalorder %s27, 0
      %p180 = por %p178, %p179
      %s182 = sadd.s32 %s181, 1
      %p185 = scmp.eq.s32.totalorder %s21, 1
      %p186 = scmp.ne.s32.totalorder %s181, %s183
      %p187 = scmp.eq.s32.totalorder %s21, 0
      %p188 = por %p186, %p187
      %p189 = scmp.ne.s32.totalorder %s181, %s183
      %p190 = scmp.eq.s32.totalorder %s26, 1
      %p191 = por %p189, %p190
      %p192 = scmp.ne.s32.totalorder %s183, %s184
      %p193 = scmp.eq.s32.totalorder %s26, 0
      %p194 = por %p192, %p193
      %p195 = scmp.ne.s32.totalorder %s183, %s184
      %p196 = scmp.eq.s32.totalorder %s27, 1
      %p197 = por %p195, %p196
      %p199 = scmp.ne.s32.totalorder %s184, %s198
      %p200 = scmp.eq.s32.totalorder %s27, 0
      %p201 = por %p199, %p200
      %s203 = sadd.s32 %s202, 1
      %p206 = scmp.eq.s32.totalorder %s21, 1
      %p207 = scmp.ne.s32.totalorder %s202, %s204
      %p208 = scmp.eq.s32.totalorder %s21, 0
      %p209 = por %p207, %p208
      %p210 = scmp.ne.s32.totalorder %s202, %s204
      %p211 = scmp.eq.s32.totalorder %s26, 1
      %p212 = por %p210, %p211
      %p213 = scmp.ne.s32.totalorder %s204, %s205
      %p214 = scmp.eq.s32.totalorder %s26, 0
      %p215 = por %p213, %p214
      %p216 = scmp.ne.s32.totalorder %s204, %s205
      %p217 = scmp.eq.s32.totalorder %s27, 1
      %p218 = por %p216, %p217
      %p220 = scmp.ne.s32.totalorder %s205, %s219
      %p221 = scmp.eq.s32.totalorder %s27, 0
      %p222 = por %p220, %p221
      %s223 = ssub.s32 %s21, %s28
      %p224 = scmp.eq.s32.totalorder %s223, 0
      %s226 = sadd.s32 %s225, 1
      %s227 = scalar_select %p224, %s225, %s226
      %p230 = pneg %p224
      %p231 = scmp.eq.s32.totalorder %s21, 1
      %p232 = por %p230, %p231
      %p233 = scmp.ne.s32.totalorder %s225, %s228
      %p234 = scmp.eq.s32.totalorder %s21, 0
      %p235 = por %p233, %p234
      %p236 = scmp.ne.s32.totalorder %s225, %s228
      %p237 = scmp.eq.s32.totalorder %s26, 1
      %p238 = por %p236, %p237
      %p239 = scmp.ne.s32.totalorder %s228, %s229
      %p240 = scmp.eq.s32.totalorder %s26, 0
      %p241 = por %p239, %p240
      %p242 = scmp.ne.s32.totalorder %s228, %s229
      %p243 = scmp.eq.s32.totalorder %s27, 1
      %p244 = por %p242, %p243
      %p246 = scmp.ne.s32.totalorder %s229, %s245
      %p247 = scmp.eq.s32.totalorder %s27, 0
      %p248 = por %p246, %p247
      %p249 = scmp.le.s32.totalorder 1, %s21
      %p250 = scmp.lt.s32.totalorder %s21, 3
      %p251 = pnand %p249, %p250
      %p252 = pneg %p251
      // Predicated region
      $region9: #{transformer_forward.3} parent=5 // pred_check
        _
      $region10: #{transformer_forward.3} parent=5 // pred_check_branch
        %254 = sbr.rel (%p251) target = $region12
      $region11: #{transformer_forward.3} parent=5 // pred_region
        %s255 = ssub.s32 %s21, 1
        // Predicated region
        $region13: #{transformer_forward.3} parent=11 // pred_check
          %p256 = pneg %p68
        $region14: #{transformer_forward.3} parent=11 // pred_check_branch
          %258 = sbr.rel (%p256) target = $region16
        $region15: #{transformer_forward.3} parent=11 // pred_region
          _
        $region16: #{transformer_forward.3} parent=11 // pred_fallthru
          _
        // Predicated region
        $region17: #{transformer_forward.3} parent=11 // pred_check
          %p259 = pneg %p89
        $region18: #{transformer_forward.3} parent=11 // pred_check_branch
          %261 = sbr.rel (%p259) target = $region20
        $region19: #{transformer_forward.3} parent=11 // pred_region
          _
        $region20: #{transformer_forward.3} parent=11 // pred_fallthru
          _
        // Predicated region
        $region21: #{transformer_forward.3} parent=11 // pred_check
          %p262 = pneg %p110
        $region22: #{transformer_forward.3} parent=11 // pred_check_branch
          %264 = sbr.rel (%p262) target = $region24
        $region23: #{transformer_forward.3} parent=11 // pred_region
          _
        $region24: #{transformer_forward.3} parent=11 // pred_fallthru
          _
        // Predicated region
        $region25: #{transformer_forward.3} parent=11 // pred_check
          %p265 = pneg %p131
        $region26: #{transformer_forward.3} parent=11 // pred_check_branch
          %267 = sbr.rel (%p265) target = $region28
        $region27: #{transformer_forward.3} parent=11 // pred_region
          _
        $region28: #{transformer_forward.3} parent=11 // pred_fallthru
          _
        // Predicated region
        $region29: #{transformer_forward.3} parent=11 // pred_check
          %p268 = pneg %p152
        $region30: #{transformer_forward.3} parent=11 // pred_check_branch
          %270 = sbr.rel (%p268) target = $region32
        $region31: #{transformer_forward.3} parent=11 // pred_region
          _
        $region32: #{transformer_forward.3} parent=11 // pred_fallthru
          _
        // Predicated region
        $region33: #{transformer_forward.3} parent=11 // pred_check
          %p271 = pneg %p173
        $region34: #{transformer_forward.3} parent=11 // pred_check_branch
          %273 = sbr.rel (%p271) target = $region36
        $region35: #{transformer_forward.3} parent=11 // pred_region
          _
        $region36: #{transformer_forward.3} parent=11 // pred_fallthru
          _
        // Predicated region
        $region37: #{transformer_forward.3} parent=11 // pred_check
          %p274 = pneg %p194
        $region38: #{transformer_forward.3} parent=11 // pred_check_branch
          %276 = sbr.rel (%p274) target = $region40
        $region39: #{transformer_forward.3} parent=11 // pred_region
          _
        $region40: #{transformer_forward.3} parent=11 // pred_fallthru
          _
        // Predicated region
        $region41: #{transformer_forward.3} parent=11 // pred_check
          %p277 = pneg %p215
        $region42: #{transformer_forward.3} parent=11 // pred_check_branch
          %279 = sbr.rel (%p277) target = $region44
        $region43: #{transformer_forward.3} parent=11 // pred_region
          _
        $region44: #{transformer_forward.3} parent=11 // pred_fallthru
          _
      $region12: #{transformer_forward.3} parent=5 // pred_fallthru
        _
      %p280 = scmp.lt.s32.totalorder %s21, 2
      // Predicated region
      $region45: #{transformer_forward.3} parent=5 // pred_check
        %p281 = pneg %p280
      $region46: #{transformer_forward.3} parent=5 // pred_check_branch
        %283 = sbr.rel (%p281) target = $region48
      $region47: #{transformer_forward.3} parent=5 // pred_region
        // Predicated region
        $region49: #{transformer_forward.3} parent=47 // pred_check
          %p284 = pneg %p41
        $region50: #{transformer_forward.3} parent=47 // pred_check_branch
          %286 = sbr.rel (%p284) target = $region52
        $region51: #{transformer_forward.3} parent=47 // pred_region
          %s287 = sand.u32 %s31, 1
          %s288 = scalar_lea.sflag [#allocation3], %s287
          %s289 = sand.u32 %s31, 1
          %s290 = smul.addr %s289, 8
          %s291 = scalar_lea.vmem [#allocation2], %s290
          %s293 = ssub.s32 128, 128
          %294 = vsyncadd %s288, %s293
          %s295 = smul.addr %s21, 128
          %s296 = scalar_lea.hbm %s0, %s295
          %s298 = sshll.u32 %s291, 4
          %s299 = int_to_ptr.vmem [resolvable:$true] %s298
          %301 = dma.hbm_to_vmem [thread:$0]  %s296, 128, %s299, %s288
        $region52: #{transformer_forward.3} parent=47 // pred_fallthru
          _
      $region48: #{transformer_forward.3} parent=5 // pred_fallthru
        _
      %p302 = scmp.le.s32.totalorder 1, %s21
      %p303 = scmp.lt.s32.totalorder %s21, 3
      %p304 = pnand %p302, %p303
      %p305 = pneg %p304
      // Predicated region
      $region53: #{transformer_forward.3} parent=5 // pred_check
        _
      $region54: #{transformer_forward.3} parent=5 // pred_check_branch
        %307 = sbr.rel (%p304) target = $region56
      $region55: #{transformer_forward.3} parent=5 // pred_region
        %s308 = ssub.s32 %s21, 1
        %s309 = sand.u32 %s34, 1
        %s310 = scalar_lea.sflag [#allocation3], %s309
        %s311 = sand.u32 %s34, 1
        %s312 = smul.addr %s311, 8
        %s313 = scalar_lea.vmem [#allocation2], %s312
        // Predicated region
        $region57: #{transformer_forward.3} parent=55 // pred_check
          %p314 = pneg %p47
        $region58: #{transformer_forward.3} parent=55 // pred_check_branch
          %316 = sbr.rel (%p314) target = $region60
        $region59: #{transformer_forward.3} parent=55 // pred_region
          %317 = dma.done %s310, 128
        $region60: #{transformer_forward.3} parent=55 // pred_fallthru
          _
        %s318 = sand.u32 %s34, 1
        %s319 = scalar_lea.sflag [#allocation3], %s318
        %s320 = sand.u32 %s34, 1
        %s321 = smul.addr %s320, 8
        %s322 = scalar_lea.vmem [#allocation2], %s321
        %p323 = pneg %p47
        %p324 = pneg %p44
        %p325 = pneg %p68
        %p326 = pneg %p65
        %p327 = pneg %p89
        %p328 = pneg %p86
        %p329 = pneg %p110
        %p330 = pneg %p107
        %p331 = pneg %p131
        %p332 = pneg %p128
        %p333 = pneg %p152
        %p334 = pneg %p149
        %p335 = pneg %p173
        %p336 = pneg %p170
        %p337 = pneg %p194
        %p338 = pneg %p191
        %p339 = pneg %p215
        %p340 = pneg %p212
        %p341 = pneg %p241
        %p342 = pneg %p238
        %s343 = sand.u32 %s228, 1
        %s344 = scalar_lea.sflag [#allocation4], %s343
        %s345 = sand.u32 %s228, 1
        %s346 = smul.addr %s345, 8
        %s347 = scalar_lea.vmem [#allocation5], %s346
        %v349 = vld [vmem:[%s313] sm:$0xff]
        %v350 = vld [vmem:[%s1] sm:$0x1f]
        %vm351 = vcmask 261120
        %v352 = vsel %vm351, %v349, 0.0
        %353 = vadd.xlane.f32.xlu0 %v352
        %v354 = vpop.xlane.xlu0 %353
        %v355 = vrcp.pop 32.0
        %v356 = vmul.f32 %v354, %v355
        %v357 = vsub.f32 %v349, %v356
        %v358 = vmul.f32 %v357, %v357
        %v359 = vsel %vm351, %v358, 0.0
        %360 = vadd.xlane.f32.xlu0 %v359
        %v361 = vpop.xlane.xlu0 %360
        %v362 = vmul.f32 %v361, %v355
        %v363 = vadd.f32 %v362, 1e-05
        %v364 = vrsqrt.pop %v363
        %v365 = vmul.f32 %v357, %v364
        %v366 = vlaneseq
        %v367 = vshrl.u32 %v366, 7
        %v368 = vsub.s32 0, %v367
        %v369 = vrot.slane %v350, %v368
        %v370 = vmul.f32 %v365, %v369
        %v371 = vlaneseq
        %v372 = vshrl.u32 %v371, 7
        %v373 = vsub.s32 1, %v372
        %v374 = vrot.slane %v350, %v373
        %v375 = vadd.f32 %v370, %v374
        %v376 = vpack.c.bf16 %v375, %v375
        %v377 = vld [vmem:[%s2] sm:$0xf]
        %v378 = vld [vmem:[%s2 + $0x4] sm:$0xf]
        %v379 = vld [vmem:[%s2 + $0x8] sm:$0xf]
        %v380 = vld [vmem:[%s2 + $0xc] sm:$0xf]
        %v381 = vld [vmem:[%s2 + $0x10] sm:$0xf]
        %v382 = vld [vmem:[%s2 + $0x14] sm:$0xf]
        %v383 = vld [vmem:[%s2 + $0x18] sm:$0xf]
        %v384 = vld [vmem:[%s2 + $0x1c] sm:$0xf]
        %v385 = vld [vmem:[%s2 + $0x20] sm:$0xf]
        %v386 = vld [vmem:[%s2 + $0x24] sm:$0xf]
        %v387 = vld [vmem:[%s2 + $0x28] sm:$0xf]
        %v388 = vld [vmem:[%s2 + $0x2c] sm:$0xf]
        %v389 = vld [vmem:[%s2 + $0x30] sm:$0xf]
        %v390 = vld [vmem:[%s2 + $0x34] sm:$0xf]
        %v391 = vld [vmem:[%s2 + $0x38] sm:$0xf]
        %v392 = vld [vmem:[%s2 + $0x3c] sm:$0xf]
        %v397 = vunpack.c.l.b16 %v377
        %v398 = vunpack.c.l.b16 %v378
        %v399 = vunpack.c.l.b16 %v379
        %v400 = vunpack.c.l.b16 %v380
        %v401 = vpack.c.b16 %v398, %v397
        %v402 = vpack.c.b16 %v400, %v399
        %v406 = vsel %vm351, %v376, 0
        %408 = vmatprep.subr.bf16.mxu0 0
        %409 = vmatpush1.bf16.msra.mxu0 %v401
        %410 = vmatprep.subr.bf16.mxu0 0
        %411 = vmatpush1.bf16.msra.mxu0 %v402
        %412 = vmatprep.subr.bf16.mxu0 0
        %413 = vmatpush1.bf16.msra.mxu0 0
        %414 = vmatprep.subr.bf16.mxu0 0
        %415 = vmatpush1.bf16.msra.mxu0 0
        %416 = vmatprep.subr.bf16.mxu0 0
        %417 = vmatpush1.bf16.msra.mxu0 0
        %418 = vmatprep.subr.bf16.mxu0 0
        %419 = vmatpush1.bf16.msra.mxu0 0
        %420 = vmatprep.subr.bf16.mxu0 0
        %421 = vmatpush1.bf16.msra.mxu0 0
        %422 = vmatprep.subr.bf16.mxu0 0
        %423 = vmatpush1.bf16.msra.mxu0 0
        %424 = vmatprep.subr.bf16.mxu0 0
        %425 = vmatpush1.bf16.msra.mxu0 0
        %426 = vmatprep.subr.bf16.mxu0 0
        %427 = vmatpush1.bf16.msra.mxu0 0
        %428 = vmatprep.subr.bf16.mxu0 0
        %429 = vmatpush1.bf16.msra.mxu0 0
        %430 = vmatprep.subr.bf16.mxu0 0
        %431 = vmatpush1.bf16.msra.mxu0 0
        %432 = vmatprep.subr.bf16.mxu0 0
        %433 = vmatpush1.bf16.msra.mxu0 0
        %434 = vmatprep.subr.bf16.mxu0 0
        %435 = vmatpush1.bf16.msra.mxu0 0
        %436 = vmatprep.subr.bf16.mxu0 0
        %437 = vmatpush1.bf16.msra.mxu0 0
        %438 = vmatprep.subr.bf16.mxu0 0
        %439 = vmatpush1.bf16.msra.mxu0 0
        %440 = vmatprep.mubr.bf16.mxu0 0
        %441 = vmatmul.mubr.bf16.gmra.mrb[0].mxu0 %v406
        %v442 = vpop.f32.mrb[0].mxu0
        %v443 = vadd.f32 0.0, %v442
        %v444 = vpop.f32.mrb[0].mxu0
        %v445 = vpop.f32.mrb[0].mxu0
        %v446 = vpop.f32.mrb[0].mxu0
        %447 = vdwg.mxu0
        %v452 = vunpack.c.l.b16 %v381
        %v453 = vunpack.c.l.b16 %v382
        %v454 = vunpack.c.l.b16 %v383
        %v455 = vunpack.c.l.b16 %v384
        %v456 = vpack.c.b16 %v453, %v452
        %v457 = vpack.c.b16 %v455, %v454
        %460 = vmatprep.subr.bf16.mxu0 0
        %461 = vmatpush1.bf16.msra.mxu0 %v456
        %462 = vmatprep.subr.bf16.mxu0 0
        %463 = vmatpush1.bf16.msra.mxu0 %v457
        %464 = vmatprep.subr.bf16.mxu0 0
        %465 = vmatpush1.bf16.msra.mxu0 0
        %466 = vmatprep.subr.bf16.mxu0 0
        %467 = vmatpush1.bf16.msra.mxu0 0
        %468 = vmatprep.subr.bf16.mxu0 0
        %469 = vmatpush1.bf16.msra.mxu0 0
        %470 = vmatprep.subr.bf16.mxu0 0
        %471 = vmatpush1.bf16.msra.mxu0 0
        %472 = vmatprep.subr.bf16.mxu0 0
        %473 = vmatpush1.bf16.msra.mxu0 0
        %474 = vmatprep.subr.bf16.mxu0 0
        %475 = vmatpush1.bf16.msra.mxu0 0
        %476 = vmatprep.subr.bf16.mxu0 0
        %477 = vmatpush1.bf16.msra.mxu0 0
        %478 = vmatprep.subr.bf16.mxu0 0
        %479 = vmatpush1.bf16.msra.mxu0 0
        %480 = vmatprep.subr.bf16.mxu0 0
        %481 = vmatpush1.bf16.msra.mxu0 0
        %482 = vmatprep.subr.bf16.mxu0 0
        %483 = vmatpush1.bf16.msra.mxu0 0
        %484 = vmatprep.subr.bf16.mxu0 0
        %485 = vmatpush1.bf16.msra.mxu0 0
        %486 = vmatprep.subr.bf16.mxu0 0
        %487 = vmatpush1.bf16.msra.mxu0 0
        %488 = vmatprep.subr.bf16.mxu0 0
        %489 = vmatpush1.bf16.msra.mxu0 0
        %490 = vmatprep.subr.bf16.mxu0 0
        %491 = vmatpush1.bf16.msra.mxu0 0
        %492 = vmatprep.mubr.bf16.mxu0 0
        %493 = vmatmul.mubr.bf16.gmra.mrb[0].mxu0 %v406
        %v494 = vpop.f32.mrb[0].mxu0
        %v495 = vadd.f32 0.0, %v494
        %v496 = vpop.f32.mrb[0].mxu0
        %v497 = vpop.f32.mrb[0].mxu0
        %v498 = vpop.f32.mrb[0].mxu0
        %499 = vdwg.mxu0
        %v504 = vunpack.c.l.b16 %v385
        %v505 = vunpack.c.l.b16 %v386
        %v506 = vunpack.c.l.b16 %v387
        %v507 = vunpack.c.l.b16 %v388
        %v508 = vpack.c.b16 %v505, %v504
        %v509 = vpack.c.b16 %v507, %v506
        %512 = vmatprep.subr.bf16.mxu0 0
        %513 = vmatpush1.bf16.msra.mxu0 %v508
        %514 = vmatprep.subr.bf16.mxu0 0
        %515 = vmatpush1.bf16.msra.mxu0 %v509
        %516 = vmatprep.subr.bf16.mxu0 0
        %517 = vmatpush1.bf16.msra.mxu0 0
        %518 = vmatprep.subr.bf16.mxu0 0
        %519 = vmatpush1.bf16.msra.mxu0 0
        %520 = vmatprep.subr.bf16.mxu0 0
        %521 = vmatpush1.bf16.msra.mxu0 0
        %522 = vmatprep.subr.bf16.mxu0 0
        %523 = vmatpush1.bf16.msra.mxu0 0
        %524 = vmatprep.subr.bf16.mxu0 0
        %525 = vmatpush1.bf16.msra.mxu0 0
        %526 = vmatprep.subr.bf16.mxu0 0
        %527 = vmatpush1.bf16.msra.mxu0 0
        %528 = vmatprep.subr.bf16.mxu0 0
        %529 = vmatpush1.bf16.msra.mxu0 0
        %530 = vmatprep.subr.bf16.mxu0 0
        %531 = vmatpush1.bf16.msra.mxu0 0
        %532 = vmatprep.subr.bf16.mxu0 0
        %533 = vmatpush1.bf16.msra.mxu0 0
        %534 = vmatprep.subr.bf16.mxu0 0
        %535 = vmatpush1.bf16.msra.mxu0 0
        %536 = vmatprep.subr.bf16.mxu0 0
        %537 = vmatpush1.bf16.msra.mxu0 0
        %538 = vmatprep.subr.bf16.mxu0 0
        %539 = vmatpush1.bf16.msra.mxu0 0
        %540 = vmatprep.subr.bf16.mxu0 0
        %541 = vmatpush1.bf16.msra.mxu0 0
        %542 = vmatprep.subr.bf16.mxu0 0
        %543 = vmatpush1.bf16.msra.mxu0 0
        %544 = vmatprep.mubr.bf16.mxu0 0
        %545 = vmatmul.mubr.bf16.gmra.mrb[0].mxu0 %v406
        %v546 = vpop.f32.mrb[0].mxu0
        %v547 = vadd.f32 0.0, %v546
        %v548 = vpop.f32.mrb[0].mxu0
        %v549 = vpop.f32.mrb[0].mxu0
        %v550 = vpop.f32.mrb[0].mxu0
        %551 = vdwg.mxu0
        %v556 = vunpack.c.l.b16 %v389
        %v557 = vunpack.c.l.b16 %v390
        %v558 = vunpack.c.l.b16 %v391
        %v559 = vunpack.c.l.b16 %v392
        %v560 = vpack.c.b16 %v557, %v556
        %v561 = vpack.c.b16 %v559, %v558
        %564 = vmatprep.subr.bf16.mxu0 0
        %565 = vmatpush1.bf16.msra.mxu0 %v560
        %566 = vmatprep.subr.bf16.mxu0 0
        %567 = vmatpush1.bf16.msra.mxu0 %v561
        %568 = vmatprep.subr.bf16.mxu0 0
        %569 = vmatpush1.bf16.msra.mxu0 0
        %570 = vmatprep.subr.bf16.mxu0 0
        %571 = vmatpush1.bf16.msra.mxu0 0
        %572 = vmatprep.subr.bf16.mxu0 0
        %573 = vmatpush1.bf16.msra.mxu0 0
        %574 = vmatprep.subr.bf16.mxu0 0
        %575 = vmatpush1.bf16.msra.mxu0 0
        %576 = vmatprep.subr.bf16.mxu0 0
        %577 = vmatpush1.bf16.msra.mxu0 0
        %578 = vmatprep.subr.bf16.mxu0 0
        %579 = vmatpush1.bf16.msra.mxu0 0
        %580 = vmatprep.subr.bf16.mxu0 0
        %581 = vmatpush1.bf16.msra.mxu0 0
        %582 = vmatprep.subr.bf16.mxu0 0
        %583 = vmatpush1.bf16.msra.mxu0 0
        %584 = vmatprep.subr.bf16.mxu0 0
        %585 = vmatpush1.bf16.msra.mxu0 0
        %586 = vmatprep.subr.bf16.mxu0 0
        %587 = vmatpush1.bf16.msra.mxu0 0
        %588 = vmatprep.subr.bf16.mxu0 0
        %589 = vmatpush1.bf16.msra.mxu0 0
        %590 = vmatprep.subr.bf16.mxu0 0
        %591 = vmatpush1.bf16.msra.mxu0 0
        %592 = vmatprep.subr.bf16.mxu0 0
        %593 = vmatpush1.bf16.msra.mxu0 0
        %594 = vmatprep.subr.bf16.mxu0 0
        %595 = vmatpush1.bf16.msra.mxu0 0
        %596 = vmatprep.mubr.bf16.mxu0 0
        %597 = vmatmul.mubr.bf16.gmra.mrb[0].mxu0 %v406
        %v598 = vpop.f32.mrb[0].mxu0
        %v599 = vadd.f32 0.0, %v598
        %v600 = vpop.f32.mrb[0].mxu0
        %v601 = vpop.f32.mrb[0].mxu0
        %v602 = vpop.f32.mrb[0].mxu0
        %603 = vdwg.mxu0
        %v604 = vld [vmem:[%s3] sm:$0xf]
        %v605 = vld [vmem:[%s3 + $0x4] sm:$0xf]
        %v606 = vld [vmem:[%s3 + $0x8] sm:$0xf]
        %v607 = vld [vmem:[%s3 + $0xc] sm:$0xf]
        %v608 = vld [vmem:[%s3 + $0x10] sm:$0xf]
        %v609 = vld [vmem:[%s3 + $0x14] sm:$0xf]
        %v610 = vld [vmem:[%s3 + $0x18] sm:$0xf]
        %v611 = vld [vmem:[%s3 + $0x1c] sm:$0xf]
        %v612 = vld [vmem:[%s3 + $0x20] sm:$0xf]
        %v613 = vld [vmem:[%s3 + $0x24] sm:$0xf]
        %v614 = vld [vmem:[%s3 + $0x28] sm:$0xf]
        %v615 = vld [vmem:[%s3 + $0x2c] sm:$0xf]
        %v616 = vld [vmem:[%s3 + $0x30] sm:$0xf]
        %v617 = vld [vmem:[%s3 + $0x34] sm:$0xf]
        %v618 = vld [vmem:[%s3 + $0x38] sm:$0xf]
        %v619 = vld [vmem:[%s3 + $0x3c] sm:$0xf]
        %v624 = vunpack.c.l.b16 %v604
        %v625 = vunpack.c.l.b16 %v605
        %v626 = vunpack.c.l.b16 %v606
        %v627 = vunpack.c.l.b16 %v607
        %v628 = vpack.c.b16 %v625, %v624
        %v629 = vpack.c.b16 %v627, %v626
        %632 = vmatprep.subr.bf16.mxu0 0
        %633 = vmatpush1.bf16.msra.mxu0 %v628
        %634 = vmatprep.subr.bf16.mxu0 0
        %635 = vmatpush1.bf16.msra.mxu0 %v629
        %636 = vmatprep.subr.bf16.mxu0 0
        %637 = vmatpush1.bf16.msra.mxu0 0
        %638 = vmatprep.subr.bf16.mxu0 0
        %639 = vmatpush1.bf16.msra.mxu0 0
        %640 = vmatprep.subr.bf16.mxu0 0
        %641 = vmatpush1.bf16.msra.mxu0 0
        %642 = vmatprep.subr.bf16.mxu0 0
        %643 = vmatpush1.bf16.msra.mxu0 0
        %644 = vmatprep.subr.bf16.mxu0 0
        %645 = vmatpush1.bf16.msra.mxu0 0
        %646 = vmatprep.subr.bf16.mxu0 0
        %647 = vmatpush1.bf16.msra.mxu0 0
        %648 = vmatprep.subr.bf16.mxu0 0
        %649 = vmatpush1.bf16.msra.mxu0 0
        %650 = vmatprep.subr.bf16.mxu0 0
        %651 = vmatpush1.bf16.msra.mxu0 0
        %652 = vmatprep.subr.bf16.mxu0 0
        %653 = vmatpush1.bf16.msra.mxu0 0
        %654 = vmatprep.subr.bf16.mxu0 0
        %655 = vmatpush1.bf16.msra.mxu0 0
        %656 = vmatprep.subr.bf16.mxu0 0
        %657 = vmatpush1.bf16.msra.mxu0 0
        %658 = vmatprep.subr.bf16.mxu0 0
        %659 = vmatpush1.bf16.msra.mxu0 0
        %660 = vmatprep.subr.bf16.mxu0 0
        %661 = vmatpush1.bf16.msra.mxu0 0
        %662 = vmatprep.subr.bf16.mxu0 0
        %663 = vmatpush1.bf16.msra.mxu0 0
        %664 = vmatprep.mubr.bf16.mxu0 0
        %665 = vmatmul.mubr.bf16.gmra.mrb[0].mxu0 %v406
        %v666 = vpop.f32.mrb[0].mxu0
        %v667 = vadd.f32 0.0, %v666
        %v668 = vpop.f32.mrb[0].mxu0
        %v669 = vpop.f32.mrb[0].mxu0
        %v670 = vpop.f32.mrb[0].mxu0
        %671 = vdwg.mxu0
        %v676 = vunpack.c.l.b16 %v608
        %v677 = vunpack.c.l.b16 %v609
        %v678 = vunpack.c.l.b16 %v610
        %v679 = vunpack.c.l.b16 %v611
        %v680 = vpack.c.b16 %v677, %v676
        %v681 = vpack.c.b16 %v679, %v678
        %684 = vmatprep.subr.bf16.mxu0 0
        %685 = vmatpush1.bf16.msra.mxu0 %v680
        %686 = vmatprep.subr.bf16.mxu0 0
        %687 = vmatpush1.bf16.msra.mxu0 %v681
        %688 = vmatprep.subr.bf16.mxu0 0
        %689 = vmatpush1.bf16.msra.mxu0 0
        %690 = vmatprep.subr.bf16.mxu0 0
        %691 = vmatpush1.bf16.msra.mxu0 0
        %692 = vmatprep.subr.bf16.mxu0 0
        %693 = vmatpush1.bf16.msra.mxu0 0
        %694 = vmatprep.subr.bf16.mxu0 0
        %695 = vmatpush1.bf16.msra.mxu0 0
        %696 = vmatprep.subr.bf16.mxu0 0
        %697 = vmatpush1.bf16.msra.mxu0 0
        %698 = vmatprep.subr.bf16.mxu0 0
        %699 = vmatpush1.bf16.msra.mxu0 0
        %700 = vmatprep.subr.bf16.mxu0 0
        %701 = vmatpush1.bf16.msra.mxu0 0
        %702 = vmatprep.subr.bf16.mxu0 0
        %703 = vmatpush1.bf16.msra.mxu0 0
        %704 = vmatprep.subr.bf16.mxu0 0
        %705 = vmatpush1.bf16.msra.mxu0 0
        %706 = vmatprep.subr.bf16.mxu0 0
        %707 = vmatpush1.bf16.msra.mxu0 0
        %708 = vmatprep.subr.bf16.mxu0 0
        %709 = vmatpush1.bf16.msra.mxu0 0
        %710 = vmatprep.subr.bf16.mxu0 0
        %711 = vmatpush1.bf16.msra.mxu0 0
        %712 = vmatprep.subr.bf16.mxu0 0
        %713 = vmatpush1.bf16.msra.mxu0 0
        %714 = vmatprep.subr.bf16.mxu0 0
        %715 = vmatpush1.bf16.msra.mxu0 0
        %716 = vmatprep.mubr.bf16.mxu0 0
        %717 = vmatmul.mubr.bf16.gmra.mrb[0].mxu0 %v406
        %v718 = vpop.f32.mrb[0].mxu0
        %v719 = vadd.f32 0.0, %v718
        %v720 = vpop.f32.mrb[0].mxu0
        %v721 = vpop.f32.mrb[0].mxu0
        %v722 = vpop.f32.mrb[0].mxu0
        %723 = vdwg.mxu0
        %v728 = vunpack.c.l.b16 %v612
        %v729 = vunpack.c.l.b16 %v613
        %v730 = vunpack.c.l.b16 %v614
        %v731 = vunpack.c.l.b16 %v615
        %v732 = vpack.c.b16 %v729, %v728
        %v733 = vpack.c.b16 %v731, %v730
        %736 = vmatprep.subr.bf16.mxu0 0
        %737 = vmatpush1.bf16.msra.mxu0 %v732
        %738 = vmatprep.subr.bf16.mxu0 0
        %739 = vmatpush1.bf16.msra.mxu0 %v733
        %740 = vmatprep.subr.bf16.mxu0 0
        %741 = vmatpush1.bf16.msra.mxu0 0
        %742 = vmatprep.subr.bf16.mxu0 0
        %743 = vmatpush1.bf16.msra.mxu0 0
        %744 = vmatprep.subr.bf16.mxu0 0
        %745 = vmatpush1.bf16.msra.mxu0 0
        %746 = vmatprep.subr.bf16.mxu0 0
        %747 = vmatpush1.bf16.msra.mxu0 0
        %748 = vmatprep.subr.bf16.mxu0 0
        %749 = vmatpush1.bf16.msra.mxu0 0
        %750 = vmatprep.subr.bf16.mxu0 0
        %751 = vmatpush1.bf16.msra.mxu0 0
        %752 = vmatprep.subr.bf16.mxu0 0
        %753 = vmatpush1.bf16.msra.mxu0 0
        %754 = vmatprep.subr.bf16.mxu0 0
        %755 = vmatpush1.bf16.msra.mxu0 0
        %756 = vmatprep.subr.bf16.mxu0 0
        %757 = vmatpush1.bf16.msra.mxu0 0
        %758 = vmatprep.subr.bf16.mxu0 0
        %759 = vmatpush1.bf16.msra.mxu0 0
        %760 = vmatprep.subr.bf16.mxu0 0
        %761 = vmatpush1.bf16.msra.mxu0 0
        %762 = vmatprep.subr.bf16.mxu0 0
        %763 = vmatpush1.bf16.msra.mxu0 0
        %764 = vmatprep.subr.bf16.mxu0 0
        %765 = vmatpush1.bf16.msra.mxu0 0
        %766 = vmatprep.subr.bf16.mxu0 0
        %767 = vmatpush1.bf16.msra.mxu0 0
        %768 = vmatprep.mubr.bf16.mxu0 0
        %769 = vmatmul.mubr.bf16.gmra.mrb[0].mxu0 %v406
        %v770 = vpop.f32.mrb[0].mxu0
        %v771 = vadd.f32 0.0, %v770
        %v772 = vpop.f32.mrb[0].mxu0
        %v773 = vpop.f32.mrb[0].mxu0
        %v774 = vpop.f32.mrb[0].mxu0
        %775 = vdwg.mxu0
        %v780 = vunpack.c.l.b16 %v616
        %v781 = vunpack.c.l.b16 %v617
        %v782 = vunpack.c.l.b16 %v618
        %v783 = vunpack.c.l.b16 %v619
        %v784 = vpack.c.b16 %v781, %v780
        %v785 = vpack.c.b16 %v783, %v782
        %788 = vmatprep.subr.bf16.mxu0 0
        %789 = vmatpush1.bf16.msra.mxu0 %v784
        %790 = vmatprep.subr.bf16.mxu0 0
        %791 = vmatpush1.bf16.msra.mxu0 %v785
        %792 = vmatprep.subr.bf16.mxu0 0
        %793 = vmatpush1.bf16.msra.mxu0 0
        %794 = vmatprep.subr.bf16.mxu0 0
        %795 = vmatpush1.bf16.msra.mxu0 0
        %796 = vmatprep.subr.bf16.mxu0 0
        %797 = vmatpush1.bf16.msra.mxu0 0
        %798 = vmatprep.subr.bf16.mxu0 0
        %799 = vmatpush1.bf16.msra.mxu0 0
        %800 = vmatprep.subr.bf16.mxu0 0
        %801 = vmatpush1.bf16.msra.mxu0 0
        %802 = vmatprep.subr.bf16.mxu0 0
        %803 = vmatpush1.bf16.msra.mxu0 0
        %804 = vmatprep.subr.bf16.mxu0 0
        %805 = vmatpush1.bf16.msra.mxu0 0
        %806 = vmatprep.subr.bf16.mxu0 0
        %807 = vmatpush1.bf16.msra.mxu0 0
        %808 = vmatprep.subr.bf16.mxu0 0
        %809 = vmatpush1.bf16.msra.mxu0 0
        %810 = vmatprep.subr.bf16.mxu0 0
        %811 = vmatpush1.bf16.msra.mxu0 0
        %812 = vmatprep.subr.bf16.mxu0 0
        %813 = vmatpush1.bf16.msra.mxu0 0
        %814 = vmatprep.subr.bf16.mxu0 0
        %815 = vmatpush1.bf16.msra.mxu0 0
        %816 = vmatprep.subr.bf16.mxu0 0
        %817 = vmatpush1.bf16.msra.mxu0 0
        %818 = vmatprep.subr.bf16.mxu0 0
        %819 = vmatpush1.bf16.msra.mxu0 0
        %820 = vmatprep.mubr.bf16.mxu0 0
        %821 = vmatmul.mubr.bf16.gmra.mrb[0].mxu0 %v406
        %v822 = vpop.f32.mrb[0].mxu0
        %v823 = vadd.f32 0.0, %v822
        %v824 = vpop.f32.mrb[0].mxu0
        %v825 = vpop.f32.mrb[0].mxu0
        %v826 = vpop.f32.mrb[0].mxu0
        %827 = vdwg.mxu0
        %v828 = vld [vmem:[%s4] sm:$0xf]
        %v829 = vld [vmem:[%s4 + $0x4] sm:$0xf]
        %v830 = vld [vmem:[%s4 + $0x8] sm:$0xf]
        %v831 = vld [vmem:[%s4 + $0xc] sm:$0xf]
        %v832 = vld [vmem:[%s4 + $0x10] sm:$0xf]
        %v833 = vld [vmem:[%s4 + $0x14] sm:$0xf]
        %v834 = vld [vmem:[%s4 + $0x18] sm:$0xf]
        %v835 = vld [vmem:[%s4 + $0x1c] sm:$0xf]
        %v836 = vld [vmem:[%s4 + $0x20] sm:$0xf]
        %v837 = vld [vmem:[%s4 + $0x24] sm:$0xf]
        %v838 = vld [vmem:[%s4 + $0x28] sm:$0xf]
        %v839 = vld [vmem:[%s4 + $0x2c] sm:$0xf]
        %v840 = vld [vmem:[%s4 + $0x30] sm:$0xf]
        %v841 = vld [vmem:[%s4 + $0x34] sm:$0xf]
        %v842 = vld [vmem:[%s4 + $0x38] sm:$0xf]
        %v843 = vld [vmem:[%s4 + $0x3c] sm:$0xf]
        %v848 = vunpack.c.l.b16 %v828
        %v849 = vunpack.c.l.b16 %v829
        %v850 = vunpack.c.l.b16 %v830
        %v851 = vunpack.c.l.b16 %v831
        %v852 = vpack.c.b16 %v849, %v848
        %v853 = vpack.c.b16 %v851, %v850
        %856 = vmatprep.subr.bf16.mxu0 0
        %857 = vmatpush1.bf16.msra.mxu0 %v852
        %858 = vmatprep.subr.bf16.mxu0 0
        %859 = vmatpush1.bf16.msra.mxu0 %v853
        %860 = vmatprep.subr.bf16.mxu0 0
        %861 = vmatpush1.bf16.msra.mxu0 0
        %862 = vmatprep.subr.bf16.mxu0 0
        %863 = vmatpush1.bf16.msra.mxu0 0
        %864 = vmatprep.subr.bf16.mxu0 0
        %865 = vmatpush1.bf16.msra.mxu0 0
        %866 = vmatprep.subr.bf16.mxu0 0
        %867 = vmatpush1.bf16.msra.mxu0 0
        %868 = vmatprep.subr.bf16.mxu0 0
        %869 = vmatpush1.bf16.msra.mxu0 0
        %870 = vmatprep.subr.bf16.mxu0 0
        %871 = vmatpush1.bf16.msra.mxu0 0
        %872 = vmatprep.subr.bf16.mxu0 0
        %873 = vmatpush1.bf16.msra.mxu0 0
        %874 = vmatprep.subr.bf16.mxu0 0
        %875 = vmatpush1.bf16.msra.mxu0 0
        %876 = vmatprep.subr.bf16.mxu0 0
        %877 = vmatpush1.bf16.msra.mxu0 0
        %878 = vmatprep.subr.bf16.mxu0 0
        %879 = vmatpush1.bf16.msra.mxu0 0
        %880 = vmatprep.subr.bf16.mxu0 0
        %881 = vmatpush1.bf16.msra.mxu0 0
        %882 = vmatprep.subr.bf16.mxu0 0
        %883 = vmatpush1.bf16.msra.mxu0 0
        %884 = vmatprep.subr.bf16.mxu0 0
        %885 = vmatpush1.bf16.msra.mxu0 0
        %886 = vmatprep.subr.bf16.mxu0 0
        %887 = vmatpush1.bf16.msra.mxu0 0
        %888 = vmatprep.mubr.bf16.mxu0 0
        %889 = vmatmul.mubr.bf16.gmra.mrb[0].mxu0 %v406
        %v890 = vpop.f32.mrb[0].mxu0
        %v891 = vadd.f32 0.0, %v890
        %v892 = vpop.f32.mrb[0].mxu0
        %v893 = vpop.f32.mrb[0].mxu0
        %v894 = vpop.f32.mrb[0].mxu0
        %895 = vdwg.mxu0
        %v900 = vunpack.c.l.b16 %v832
        %v901 = vunpack.c.l.b16 %v833
        %v902 = vunpack.c.l.b16 %v834
        %v903 = vunpack.c.l.b16 %v835
        %v904 = vpack.c.b16 %v901, %v900
        %v905 = vpack.c.b16 %v903, %v902
        %908 = vmatprep.subr.bf16.mxu0 0
        %909 = vmatpush1.bf16.msra.mxu0 %v904
        %910 = vmatprep.subr.bf16.mxu0 0
        %911 = vmatpush1.bf16.msra.mxu0 %v905
        %912 = vmatprep.subr.bf16.mxu0 0
        %913 = vmatpush1.bf16.msra.mxu0 0
        %914 = vmatprep.subr.bf16.mxu0 0
        %915 = vmatpush1.bf16.msra.mxu0 0
        %916 = vmatprep.subr.bf16.mxu0 0
        %917 = vmatpush1.bf16.msra.mxu0 0
        %918 = vmatprep.subr.bf16.mxu0 0
        %919 = vmatpush1.bf16.msra.mxu0 0
        %920 = vmatprep.subr.bf16.mxu0 0
        %921 = vmatpush1.bf16.msra.mxu0 0
        %922 = vmatprep.subr.bf16.mxu0 0
        %923 = vmatpush1.bf16.msra.mxu0 0
        %924 = vmatprep.subr.bf16.mxu0 0
        %925 = vmatpush1.bf16.msra.mxu0 0
        %926 = vmatprep.subr.bf16.mxu0 0
        %927 = vmatpush1.bf16.msra.mxu0 0
        %928 = vmatprep.subr.bf16.mxu0 0
        %929 = vmatpush1.bf16.msra.mxu0 0
        %930 = vmatprep.subr.bf16.mxu0 0
        %931 = vmatpush1.bf16.msra.mxu0 0
        %932 = vmatprep.subr.bf16.mxu0 0
        %933 = vmatpush1.bf16.msra.mxu0 0
        %934 = vmatprep.subr.bf16.mxu0 0
        %935 = vmatpush1.bf16.msra.mxu0 0
        %936 = vmatprep.subr.bf16.mxu0 0
        %937 = vmatpush1.bf16.msra.mxu0 0
        %938 = vmatprep.subr.bf16.mxu0 0
        %939 = vmatpush1.bf16.msra.mxu0 0
        %940 = vmatprep.mubr.bf16.mxu0 0
        %941 = vmatmul.mubr.bf16.gmra.mrb[0].mxu0 %v406
        %v942 = vpop.f32.mrb[0].mxu0
        %v943 = vadd.f32 0.0, %v942
        %v944 = vpop.f32.mrb[0].mxu0
        %v945 = vpop.f32.mrb[0].mxu0
        %v946 = vpop.f32.mrb[0].mxu0
        %947 = vdwg.mxu0
        %v952 = vunpack.c.l.b16 %v836
        %v953 = vunpack.c.l.b16 %v837
        %v954 = vunpack.c.l.b16 %v838
        %v955 = vunpack.c.l.b16 %v839
        %v956 = vpack.c.b16 %v953, %v952
        %v957 = vpack.c.b16 %v955, %v954
        %960 = vmatprep.subr.bf16.mxu0 0
        %961 = vmatpush1.bf16.msra.mxu0 %v956
        %962 = vmatprep.subr.bf16.mxu0 0
        %963 = vmatpush1.bf16.msra.mxu0 %v957
        %964 = vmatprep.subr.bf16.mxu0 0
        %965 = vmatpush1.bf16.msra.mxu0 0
        %966 = vmatprep.subr.bf16.mxu0 0
        %967 = vmatpush1.bf16.msra.mxu0 0
        %968 = vmatprep.subr.bf16.mxu0 0
        %969 = vmatpush1.bf16.msra.mxu0 0
        %970 = vmatprep.subr.bf16.mxu0 0
        %971 = vmatpush1.bf16.msra.mxu0 0
        %972 = vmatprep.subr.bf16.mxu0 0
        %973 = vmatpush1.bf16.msra.mxu0 0
        %974 = vmatprep.subr.bf16.mxu0 0
        %975 = vmatpush1.bf16.msra.mxu0 0
        %976 = vmatprep.subr.bf16.mxu0 0
        %977 = vmatpush1.bf16.msra.mxu0 0
        %978 = vmatprep.subr.bf16.mxu0 0
        %979 = vmatpush1.bf16.msra.mxu0 0
        %980 = vmatprep.subr.bf16.mxu0 0
        %981 = vmatpush1.bf16.msra.mxu0 0
        %982 = vmatprep.subr.bf16.mxu0 0
        %983 = vmatpush1.bf16.msra.mxu0 0
        %984 = vmatprep.subr.bf16.mxu0 0
        %985 = vmatpush1.bf16.msra.mxu0 0
        %986 = vmatprep.subr.bf16.mxu0 0
        %987 = vmatpush1.bf16.msra.mxu0 0
        %988 = vmatprep.subr.bf16.mxu0 0
        %989 = vmatpush1.bf16.msra.mxu0 0
        %990 = vmatprep.subr.bf16.mxu0 0
        %991 = vmatpush1.bf16.msra.mxu0 0
        %992 = vmatprep.mubr.bf16.mxu0 0
        %993 = vmatmul.mubr.bf16.gmra.mrb[0].mxu0 %v406
        %v994 = vpop.f32.mrb[0].mxu0
        %v995 = vadd.f32 0.0, %v994
        %v996 = vpop.f32.mrb[0].mxu0
        %v997 = vpop.f32.mrb[0].mxu0
        %v998 = vpop.f32.mrb[0].mxu0
        %999 = vdwg.mxu0
        %v1004 = vunpack.c.l.b16 %v840
        %v1005 = vunpack.c.l.b16 %v841
        %v1006 = vunpack.c.l.b16 %v842
        %v1007 = vunpack.c.l.b16 %v843
        %v1008 = vpack.c.b16 %v1005, %v1004
        %v1009 = vpack.c.b16 %v1007, %v1006
        %1012 = vmatprep.subr.bf16.mxu0 0
        %1013 = vmatpush1.bf16.msra.mxu0 %v1008
        %1014 = vmatprep.subr.bf16.mxu0 0
        %1015 = vmatpush1.bf16.msra.mxu0 %v1009
        %1016 = vmatprep.subr.bf16.mxu0 0
        %1017 = vmatpush1.bf16.msra.mxu0 0
        %1018 = vmatprep.subr.bf16.mxu0 0
        %1019 = vmatpush1.bf16.msra.mxu0 0
        %1020 = vmatprep.subr.bf16.mxu0 0
        %1021 = vmatpush1.bf16.msra.mxu0 0
        %1022 = vmatprep.subr.bf16.mxu0 0
        %1023 = vmatpush1.bf16.msra.mxu0 0
        %1024 = vmatprep.subr.bf16.mxu0 0
        %1025 = vmatpush1.bf16.msra.mxu0 0
        %1026 = vmatprep.subr.bf16.mxu0 0
        %1027 = vmatpush1.bf16.msra.mxu0 0
        %1028 = vmatprep.subr.bf16.mxu0 0
        %1029 = vmatpush1.bf16.msra.mxu0 0
        %1030 = vmatprep.subr.bf16.mxu0 0
        %1031 = vmatpush1.bf16.msra.mxu0 0
        %1032 = vmatprep.subr.bf16.mxu0 0
        %1033 = vmatpush1.bf16.msra.mxu0 0
        %1034 = vmatprep.subr.bf16.mxu0 0
        %1035 = vmatpush1.bf16.msra.mxu0 0
        %1036 = vmatprep.subr.bf16.mxu0 0
        %1037 = vmatpush1.bf16.msra.mxu0 0
        %1038 = vmatprep.subr.bf16.mxu0 0
        %1039 = vmatpush1.bf16.msra.mxu0 0
        %1040 = vmatprep.subr.bf16.mxu0 0
        %1041 = vmatpush1.bf16.msra.mxu0 0
        %1042 = vmatprep.subr.bf16.mxu0 0
        %1043 = vmatpush1.bf16.msra.mxu0 0
        %1044 = vmatprep.mubr.bf16.mxu0 0
        %1045 = vmatmul.mubr.bf16.gmra.mrb[0].mxu0 %v406
        %v1046 = vpop.f32.mrb[0].mxu0
        %v1047 = vadd.f32 0.0, %v1046
        %v1048 = vpop.f32.mrb[0].mxu0
        %v1049 = vpop.f32.mrb[0].mxu0
        %v1050 = vpop.f32.mrb[0].mxu0
        %1051 = vdwg.mxu0
        %v1052 = vpack.c.bf16 %v443, %v443
        %v1053 = vpack.c.bf16 %v495, %v495
        %v1054 = vpack.c.bf16 %v547, %v547
        %v1055 = vpack.c.bf16 %v599, %v599
        %v1056 = vpack.c.bf16 %v667, %v667
        %v1057 = vpack.c.bf16 %v719, %v719
        %v1058 = vpack.c.bf16 %v771, %v771
        %v1059 = vpack.c.bf16 %v823, %v823
        %vm1060 = vcmask 64512
        %v1062 = vsel %vm1060, %v1052, 0
        %v1065 = vsel %vm1060, %v1056, 0
        %1067 = vmatprep.subr.bf16.mxu0 0
        %1068 = vmatpush1.bf16.xpose.msra.mxu0 %v1065
        %1069 = vmatprep.subr.bf16.mxu0 0
        %1070 = vmatpush1.bf16.xpose.msra.mxu0 0
        %1071 = vmatprep.subr.bf16.mxu0 0
        %1072 = vmatpush1.bf16.xpose.msra.mxu0 0
        %1073 = vmatprep.subr.bf16.mxu0 0
        %1074 = vmatpush1.bf16.xpose.msra.mxu0 0
        %1075 = vmatprep.subr.bf16.mxu0 0
        %1076 = vmatpush1.bf16.xpose.msra.mxu0 0
        %1077 = vmatprep.subr.bf16.mxu0 0
        %1078 = vmatpush1.bf16.xpose.msra.mxu0 0
        %1079 = vmatprep.subr.bf16.mxu0 0
        %1080 = vmatpush1.bf16.xpose.msra.mxu0 0
        %1081 = vmatprep.subr.bf16.mxu0 0
        %1082 = vmatpush1.bf16.xpose.msra.mxu0 0
        %1083 = vmatprep.subr.bf16.mxu0 0
        %1084 = vmatpush1.bf16.xpose.msra.mxu0 0
        %1085 = vmatprep.subr.bf16.mxu0 0
        %1086 = vmatpush1.bf16.xpose.msra.mxu0 0
        %1087 = vmatprep.subr.bf16.mxu0 0
        %1088 = vmatpush1.bf16.xpose.msra.mxu0 0
        %1089 = vmatprep.subr.bf16.mxu0 0
        %1090 = vmatpush1.bf16.xpose.msra.mxu0 0
        %1091 = vmatprep.subr.bf16.mxu0 0
        %1092 = vmatpush1.bf16.xpose.msra.mxu0 0
        %1093 = vmatprep.subr.bf16.mxu0 0
        %1094 = vmatpush1.bf16.xpose.msra.mxu0 0
        %1095 = vmatprep.subr.bf16.mxu0 0
        %1096 = vmatpush1.bf16.xpose.msra.mxu0 0
        %1097 = vmatprep.subr.bf16.mxu0 0
        %1098 = vmatpush1.bf16.xpose.msra.mxu0 0
        %1099 = vmatprep.mubr.bf16.mxu0 0
        %1100 = vmatmul.mubr.bf16.gmra.mrb[0].mxu0 %v1062
        %v1101 = vpop.f32.mrb[0].mxu0
        %v1102 = vadd.f32 0.0, %v1101
        %v1103 = vpop.f32.mrb[0].mxu0
        %v1104 = vpop.f32.mrb[0].mxu0
        %v1105 = vpop.f32.mrb[0].mxu0
        %1106 = vdwg.mxu0
        %v1108 = vsel %vm1060, %v1053, 0
        %v1111 = vsel %vm1060, %v1057, 0
        %1113 = vmatprep.subr.bf16.mxu0 0
        %1114 = vmatpush1.bf16.xpose.msra.mxu0 %v1111
        %1115 = vmatprep.subr.bf16.mxu0 0
        %1116 = vmatpush1.bf16.xpose.msra.mxu0 0
        %1117 = vmatprep.subr.bf16.mxu0 0
        %1118 = vmatpush1.bf16.xpose.msra.mxu0 0
        %1119 = vmatprep.subr.bf16.mxu0 0
        %1120 = vmatpush1.bf16.xpose.msra.mxu0 0
        %1121 = vmatprep.subr.bf16.mxu0 0
        %1122 = vmatpush1.bf16.xpose.msra.mxu0 0
        %1123 = vmatprep.subr.bf16.mxu0 0
        %1124 = vmatpush1.bf16.xpose.msra.mxu0 0
        %1125 = vmatprep.subr.bf16.mxu0 0
        %1126 = vmatpush1.bf16.xpose.msra.mxu0 0
        %1127 = vmatprep.subr.bf16.mxu0 0
        %1128 = vmatpush1.bf16.xpose.msra.mxu0 0
        %1129 = vmatprep.subr.bf16.mxu0 0
        %1130 = vmatpush1.bf16.xpose.msra.mxu0 0
        %1131 = vmatprep.subr.bf16.mxu0 0
        %1132 = vmatpush1.bf16.xpose.msra.mxu0 0
        %1133 = vmatprep.subr.bf16.mxu0 0
        %1134 = vmatpush1.bf16.xpose.msra.mxu0 0
        %1135 = vmatprep.subr.bf16.mxu0 0
        %1136 = vmatpush1.bf16.xpose.msra.mxu0 0
        %1137 = vmatprep.subr.bf16.mxu0 0
        %1138 = vmatpush1.bf16.xpose.msra.mxu0 0
        %1139 = vmatprep.subr.bf16.mxu0 0
        %1140 = vmatpush1.bf16.xpose.msra.mxu0 0
        %1141 = vmatprep.subr.bf16.mxu0 0
        %1142 = vmatpush1.bf16.xpose.msra.mxu0 0
        %1143 = vmatprep.subr.bf16.mxu0 0
        %1144 = vmatpush1.bf16.xpose.msra.mxu0 0
        %1145 = vmatprep.mubr.bf16.mxu0 0
        %1146 = vmatmul.mubr.bf16.gmra.mrb[0].mxu0 %v1108
        %v1147 = vpop.f32.mrb[0].mxu0
        %v1148 = vadd.f32 0.0, %v1147
        %v1149 = vpop.f32.mrb[0].mxu0
        %v1150 = vpop.f32.mrb[0].mxu0
        %v1151 = vpop.f32.mrb[0].mxu0
        %1152 = vdwg.mxu0
        %v1154 = vsel %vm1060, %v1054, 0
        %v1157 = vsel %vm1060, %v1058, 0
        %1159 = vmatprep.subr.bf16.mxu0 0
        %1160 = vmatpush1.bf16.xpose.msra.mxu0 %v1157
        %1161 = vmatprep.subr.bf16.mxu0 0
        %1162 = vmatpush1.bf16.xpose.msra.mxu0 0
        %1163 = vmatprep.subr.bf16.mxu0 0
        %1164 = vmatpush1.bf16.xpose.msra.mxu0 0
        %1165 = vmatprep.subr.bf16.mxu0 0
        %1166 = vmatpush1.bf16.xpose.msra.mxu0 0
        %1167 = vmatprep.subr.bf16.mxu0 0
        %1168 = vmatpush1.bf16.xpose.msra.mxu0 0
        %1169 = vmatprep.subr.bf16.mxu0 0
        %1170 = vmatpush1.bf16.xpose.msra.mxu0 0
        %1171 = vmatprep.subr.bf16.mxu0 0
        %1172 = vmatpush1.bf16.xpose.msra.mxu0 0
        %1173 = vmatprep.subr.bf16.mxu0 0
        %1174 = vmatpush1.bf16.xpose.msra.mxu0 0
        %1175 = vmatprep.subr.bf16.mxu0 0
        %1176 = vmatpush1.bf16.xpose.msra.mxu0 0
        %1177 = vmatprep.subr.bf16.mxu0 0
        %1178 = vmatpush1.bf16.xpose.msra.mxu0 0
        %1179 = vmatprep.subr.bf16.mxu0 0
        %1180 = vmatpush1.bf16.xpose.msra.mxu0 0
        %1181 = vmatprep.subr.bf16.mxu0 0
        %1182 = vmatpush1.bf16.xpose.msra.mxu0 0
        %1183 = vmatprep.subr.bf16.mxu0 0
        %1184 = vmatpush1.bf16.xpose.msra.mxu0 0
        %1185 = vmatprep.subr.bf16.mxu0 0
        %1186 = vmatpush1.bf16.xpose.msra.mxu0 0
        %1187 = vmatprep.subr.bf16.mxu0 0
        %1188 = vmatpush1.bf16.xpose.msra.mxu0 0
        %1189 = vmatprep.subr.bf16.mxu0 0
        %1190 = vmatpush1.bf16.xpose.msra.mxu0 0
        %1191 = vmatprep.mubr.bf16.mxu0 0
        %1192 = vmatmul.mubr.bf16.gmra.mrb[0].mxu0 %v1154
        %v1193 = vpop.f32.mrb[0].mxu0
        %v1194 = vadd.f32 0.0, %v1193
        %v1195 = vpop.f32.mrb[0].mxu0
        %v1196 = vpop.f32.mrb[0].mxu0
        %v1197 = vpop.f32.mrb[0].mxu0
        %1198 = vdwg.mxu0
        %v1200 = vsel %vm1060, %v1055, 0
        %v1203 = vsel %vm1060, %v1059, 0
        %1205 = vmatprep.subr.bf16.mxu0 0
        %1206 = vmatpush1.bf16.xpose.msra.mxu0 %v1203
        %1207 = vmatprep.subr.bf16.mxu0 0
        %1208 = vmatpush1.bf16.xpose.msra.mxu0 0
        %1209 = vmatprep.subr.bf16.mxu0 0
        %1210 = vmatpush1.bf16.xpose.msra.mxu0 0
        %1211 = vmatprep.subr.bf16.mxu0 0
        %1212 = vmatpush1.bf16.xpose.msra.mxu0 0
        %1213 = vmatprep.subr.bf16.mxu0 0
        %1214 = vmatpush1.bf16.xpose.msra.mxu0 0
        %1215 = vmatprep.subr.bf16.mxu0 0
        %1216 = vmatpush1.bf16.xpose.msra.mxu0 0
        %1217 = vmatprep.subr.bf16.mxu0 0
        %1218 = vmatpush1.bf16.xpose.msra.mxu0 0
        %1219 = vmatprep.subr.bf16.mxu0 0
        %1220 = vmatpush1.bf16.xpose.msra.mxu0 0
        %1221 = vmatprep.subr.bf16.mxu0 0
        %1222 = vmatpush1.bf16.xpose.msra.mxu0 0
        %1223 = vmatprep.subr.bf16.mxu0 0
        %1224 = vmatpush1.bf16.xpose.msra.mxu0 0
        %1225 = vmatprep.subr.bf16.mxu0 0
        %1226 = vmatpush1.bf16.xpose.msra.mxu0 0
        %1227 = vmatprep.subr.bf16.mxu0 0
        %1228 = vmatpush1.bf16.xpose.msra.mxu0 0
        %1229 = vmatprep.subr.bf16.mxu0 0
        %1230 = vmatpush1.bf16.xpose.msra.mxu0 0
        %1231 = vmatprep.subr.bf16.mxu0 0
        %1232 = vmatpush1.bf16.xpose.msra.mxu0 0
        %1233 = vmatprep.subr.bf16.mxu0 0
        %1234 = vmatpush1.bf16.xpose.msra.mxu0 0
        %1235 = vmatprep.subr.bf16.mxu0 0
        %1236 = vmatpush1.bf16.xpose.msra.mxu0 0
        %1237 = vmatprep.mubr.bf16.mxu0 0
        %1238 = vmatmul.mubr.bf16.gmra.mrb[0].mxu0 %v1200
        %v1239 = vpop.f32.mrb[0].mxu0
        %v1240 = vadd.f32 0.0, %v1239
        %v1241 = vpop.f32.mrb[0].mxu0
        %v1242 = vpop.f32.mrb[0].mxu0
        %v1243 = vpop.f32.mrb[0].mxu0
        %1244 = vdwg.mxu0
        %v1245 = vsel %vm1060, %v1102, -inf
        %1246 = vmax.xlane.f32.xlu0 %v1245
        %v1247 = vpop.xlane.xlu0 %1246
        %v1248 = vsel %vm1060, %v1148, -inf
        %1249 = vmax.xlane.f32.xlu0 %v1248
        %v1250 = vpop.xlane.xlu0 %1249
        %v1251 = vsel %vm1060, %v1194, -inf
        %1252 = vmax.xlane.f32.xlu0 %v1251
        %v1253 = vpop.xlane.xlu0 %1252
        %v1254 = vsel %vm1060, %v1240, -inf
        %1255 = vmax.xlane.f32.xlu0 %v1254
        %v1256 = vpop.xlane.xlu0 %1255
        %v1257 = vsub.f32 %v1102, %v1247
        %v1258 = vsub.f32 %v1148, %v1250
        %v1259 = vsub.f32 %v1194, %v1253
        %v1260 = vsub.f32 %v1240, %v1256
        %v1261 = vmul.f32 %v1257, 1.442695
        %v1262 = vpow.pop %v1261
        %v1263 = vmul.f32 %v1258, 1.442695
        %v1264 = vpow.pop %v1263
        %v1265 = vmul.f32 %v1259, 1.442695
        %v1266 = vpow.pop %v1265
        %v1267 = vmul.f32 %v1260, 1.442695
        %v1268 = vpow.pop %v1267
        %v1269 = vsel %vm1060, %v1262, 0.0
        %1270 = vadd.xlane.f32.xlu0 %v1269
        %v1271 = vpop.xlane.xlu0 %1270
        %v1272 = vsel %vm1060, %v1264, 0.0
        %1273 = vadd.xlane.f32.xlu0 %v1272
        %v1274 = vpop.xlane.xlu0 %1273
        %v1275 = vsel %vm1060, %v1266, 0.0
        %1276 = vadd.xlane.f32.xlu0 %v1275
        %v1277 = vpop.xlane.xlu0 %1276
        %v1278 = vsel %vm1060, %v1268, 0.0
        %1279 = vadd.xlane.f32.xlu0 %v1278
        %v1280 = vpop.xlane.xlu0 %1279
        %v1281 = vrcp.pop %v1271
        %v1282 = vrcp.pop %v1274
        %v1283 = vrcp.pop %v1277
        %v1284 = vrcp.pop %v1280
        %v1285 = vmul.f32 %v1262, %v1281
        %v1286 = vmul.f32 %v1264, %v1282
        %v1287 = vmul.f32 %v1266, %v1283
        %v1288 = vmul.f32 %v1268, %v1284
        %v1289 = vpack.c.bf16 %v1285, %v1285
        %v1290 = vpack.c.bf16 %v1286, %v1286
        %v1291 = vpack.c.bf16 %v1287, %v1287
        %v1292 = vpack.c.bf16 %v1288, %v1288
        %v1293 = vpack.c.bf16 %v891, %v891
        %v1294 = vpack.c.bf16 %v943, %v943
        %v1295 = vpack.c.bf16 %v995, %v995
        %v1296 = vpack.c.bf16 %v1047, %v1047
        %v1298 = vsel %vm1060, %v1289, 0
        %vm1300 = vcmask 1043456
        %v1302 = vsel %vm1300, %v1293, 0
        %1304 = vmatprep.subr.bf16.mxu0 0
        %1305 = vmatpush1.bf16.msra.mxu0 %v1302
        %1306 = vmatprep.subr.bf16.mxu0 0
        %1307 = vmatpush1.bf16.msra.mxu0 0
        %1308 = vmatprep.subr.bf16.mxu0 0
        %1309 = vmatpush1.bf16.msra.mxu0 0
        %1310 = vmatprep.subr.bf16.mxu0 0
        %1311 = vmatpush1.bf16.msra.mxu0 0
        %1312 = vmatprep.subr.bf16.mxu0 0
        %1313 = vmatpush1.bf16.msra.mxu0 0
        %1314 = vmatprep.subr.bf16.mxu0 0
        %1315 = vmatpush1.bf16.msra.mxu0 0
        %1316 = vmatprep.subr.bf16.mxu0 0
        %1317 = vmatpush1.bf16.msra.mxu0 0
        %1318 = vmatprep.subr.bf16.mxu0 0
        %1319 = vmatpush1.bf16.msra.mxu0 0
        %1320 = vmatprep.subr.bf16.mxu0 0
        %1321 = vmatpush1.bf16.msra.mxu0 0
        %1322 = vmatprep.subr.bf16.mxu0 0
        %1323 = vmatpush1.bf16.msra.mxu0 0
        %1324 = vmatprep.subr.bf16.mxu0 0
        %1325 = vmatpush1.bf16.msra.mxu0 0
        %1326 = vmatprep.subr.bf16.mxu0 0
        %1327 = vmatpush1.bf16.msra.mxu0 0
        %1328 = vmatprep.subr.bf16.mxu0 0
        %1329 = vmatpush1.bf16.msra.mxu0 0
        %1330 = vmatprep.subr.bf16.mxu0 0
        %1331 = vmatpush1.bf16.msra.mxu0 0
        %1332 = vmatprep.subr.bf16.mxu0 0
        %1333 = vmatpush1.bf16.msra.mxu0 0
        %1334 = vmatprep.subr.bf16.mxu0 0
        %1335 = vmatpush1.bf16.msra.mxu0 0
        %1336 = vmatprep.mubr.bf16.mxu0 0
        %1337 = vmatmul.mubr.bf16.gmra.mrb[0].mxu0 %v1298
        %v1338 = vpop.f32.mrb[0].mxu0
        %v1339 = vadd.f32 0.0, %v1338
        %v1340 = vpop.f32.mrb[0].mxu0
        %v1341 = vpop.f32.mrb[0].mxu0
        %v1342 = vpop.f32.mrb[0].mxu0
        %1343 = vdwg.mxu0
        %v1345 = vsel %vm1060, %v1290, 0
        %v1348 = vsel %vm1300, %v1294, 0
        %1350 = vmatprep.subr.bf16.mxu0 0
        %1351 = vmatpush1.bf16.msra.mxu0 %v1348
        %1352 = vmatprep.subr.bf16.mxu0 0
        %1353 = vmatpush1.bf16.msra.mxu0 0
        %1354 = vmatprep.subr.bf16.mxu0 0
        %1355 = vmatpush1.bf16.msra.mxu0 0
        %1356 = vmatprep.subr.bf16.mxu0 0
        %1357 = vmatpush1.bf16.msra.mxu0 0
        %1358 = vmatprep.subr.bf16.mxu0 0
        %1359 = vmatpush1.bf16.msra.mxu0 0
        %1360 = vmatprep.subr.bf16.mxu0 0
        %1361 = vmatpush1.bf16.msra.mxu0 0
        %1362 = vmatprep.subr.bf16.mxu0 0
        %1363 = vmatpush1.bf16.msra.mxu0 0
        %1364 = vmatprep.subr.bf16.mxu0 0
        %1365 = vmatpush1.bf16.msra.mxu0 0
        %1366 = vmatprep.subr.bf16.mxu0 0
        %1367 = vmatpush1.bf16.msra.mxu0 0
        %1368 = vmatprep.subr.bf16.mxu0 0
        %1369 = vmatpush1.bf16.msra.mxu0 0
        %1370 = vmatprep.subr.bf16.mxu0 0
        %1371 = vmatpush1.bf16.msra.mxu0 0
        %1372 = vmatprep.subr.bf16.mxu0 0
        %1373 = vmatpush1.bf16.msra.mxu0 0
        %1374 = vmatprep.subr.bf16.mxu0 0
        %1375 = vmatpush1.bf16.msra.mxu0 0
        %1376 = vmatprep.subr.bf16.mxu0 0
        %1377 = vmatpush1.bf16.msra.mxu0 0
        %1378 = vmatprep.subr.bf16.mxu0 0
        %1379 = vmatpush1.bf16.msra.mxu0 0
        %1380 = vmatprep.subr.bf16.mxu0 0
        %1381 = vmatpush1.bf16.msra.mxu0 0
        %1382 = vmatprep.mubr.bf16.mxu0 0
        %1383 = vmatmul.mubr.bf16.gmra.mrb[0].mxu0 %v1345
        %v1384 = vpop.f32.mrb[0].mxu0
        %v1385 = vadd.f32 0.0, %v1384
        %v1386 = vpop.f32.mrb[0].mxu0
        %v1387 = vpop.f32.mrb[0].mxu0
        %v1388 = vpop.f32.mrb[0].mxu0
        %1389 = vdwg.mxu0
        %v1391 = vsel %vm1060, %v1291, 0
        %v1394 = vsel %vm1300, %v1295, 0
        %1396 = vmatprep.subr.bf16.mxu0 0
        %1397 = vmatpush1.bf16.msra.mxu0 %v1394
        %1398 = vmatprep.subr.bf16.mxu0 0
        %1399 = vmatpush1.bf16.msra.mxu0 0
        %1400 = vmatprep.subr.bf16.mxu0 0
        %1401 = vmatpush1.bf16.msra.mxu0 0
        %1402 = vmatprep.subr.bf16.mxu0 0
        %1403 = vmatpush1.bf16.msra.mxu0 0
        %1404 = vmatprep.subr.bf16.mxu0 0
        %1405 = vmatpush1.bf16.msra.mxu0 0
        %1406 = vmatprep.subr.bf16.mxu0 0
        %1407 = vmatpush1.bf16.msra.mxu0 0
        %1408 = vmatprep.subr.bf16.mxu0 0
        %1409 = vmatpush1.bf16.msra.mxu0 0
        %1410 = vmatprep.subr.bf16.mxu0 0
        %1411 = vmatpush1.bf16.msra.mxu0 0
        %1412 = vmatprep.subr.bf16.mxu0 0
        %1413 = vmatpush1.bf16.msra.mxu0 0
        %1414 = vmatprep.subr.bf16.mxu0 0
        %1415 = vmatpush1.bf16.msra.mxu0 0
        %1416 = vmatprep.subr.bf16.mxu0 0
        %1417 = vmatpush1.bf16.msra.mxu0 0
        %1418 = vmatprep.subr.bf16.mxu0 0
        %1419 = vmatpush1.bf16.msra.mxu0 0
        %1420 = vmatprep.subr.bf16.mxu0 0
        %1421 = vmatpush1.bf16.msra.mxu0 0
        %1422 = vmatprep.subr.bf16.mxu0 0
        %1423 = vmatpush1.bf16.msra.mxu0 0
        %1424 = vmatprep.subr.bf16.mxu0 0
        %1425 = vmatpush1.bf16.msra.mxu0 0
        %1426 = vmatprep.subr.bf16.mxu0 0
        %1427 = vmatpush1.bf16.msra.mxu0 0
        %1428 = vmatprep.mubr.bf16.mxu0 0
        %1429 = vmatmul.mubr.bf16.gmra.mrb[0].mxu0 %v1391
        %v1430 = vpop.f32.mrb[0].mxu0
        %v1431 = vadd.f32 0.0, %v1430
        %v1432 = vpop.f32.mrb[0].mxu0
        %v1433 = vpop.f32.mrb[0].mxu0
        %v1434 = vpop.f32.mrb[0].mxu0
        %1435 = vdwg.mxu0
        %v1437 = vsel %vm1060, %v1292, 0
        %v1440 = vsel %vm1300, %v1296, 0
        %1442 = vmatprep.subr.bf16.mxu0 0
        %1443 = vmatpush1.bf16.msra.mxu0 %v1440
        %1444 = vmatprep.subr.bf16.mxu0 0
        %1445 = vmatpush1.bf16.msra.mxu0 0
        %1446 = vmatprep.subr.bf16.mxu0 0
        %1447 = vmatpush1.bf16.msra.mxu0 0
        %1448 = vmatprep.subr.bf16.mxu0 0
        %1449 = vmatpush1.bf16.msra.mxu0 0
        %1450 = vmatprep.subr.bf16.mxu0 0
        %1451 = vmatpush1.bf16.msra.mxu0 0
        %1452 = vmatprep.subr.bf16.mxu0 0
        %1453 = vmatpush1.bf16.msra.mxu0 0
        %1454 = vmatprep.subr.bf16.mxu0 0
        %1455 = vmatpush1.bf16.msra.mxu0 0
        %1456 = vmatprep.subr.bf16.mxu0 0
        %1457 = vmatpush1.bf16.msra.mxu0 0
        %1458 = vmatprep.subr.bf16.mxu0 0
        %1459 = vmatpush1.bf16.msra.mxu0 0
        %1460 = vmatprep.subr.bf16.mxu0 0
        %1461 = vmatpush1.bf16.msra.mxu0 0
        %1462 = vmatprep.subr.bf16.mxu0 0
        %1463 = vmatpush1.bf16.msra.mxu0 0
        %1464 = vmatprep.subr.bf16.mxu0 0
        %1465 = vmatpush1.bf16.msra.mxu0 0
        %1466 = vmatprep.subr.bf16.mxu0 0
        %1467 = vmatpush1.bf16.msra.mxu0 0
        %1468 = vmatprep.subr.bf16.mxu0 0
        %1469 = vmatpush1.bf16.msra.mxu0 0
        %1470 = vmatprep.subr.bf16.mxu0 0
        %1471 = vmatpush1.bf16.msra.mxu0 0
        %1472 = vmatprep.subr.bf16.mxu0 0
        %1473 = vmatpush1.bf16.msra.mxu0 0
        %1474 = vmatprep.mubr.bf16.mxu0 0
        %1475 = vmatmul.mubr.bf16.gmra.mrb[0].mxu0 %v1437
        %v1476 = vpop.f32.mrb[0].mxu0
        %v1477 = vadd.f32 0.0, %v1476
        %v1478 = vpop.f32.mrb[0].mxu0
        %v1479 = vpop.f32.mrb[0].mxu0
        %v1480 = vpop.f32.mrb[0].mxu0
        %1481 = vdwg.mxu0
        %v1482 = vpack.c.bf16 %v1339, %v1339
        %v1483 = vpack.c.bf16 %v1385, %v1385
        %v1484 = vpack.c.bf16 %v1431, %v1431
        %v1485 = vpack.c.bf16 %v1477, %v1477
        %v1486 = vld [vmem:[%s5] sm:$0xf]
        %v1487 = vld [vmem:[%s5 + $0x4] sm:$0xf]
        %v1488 = vld [vmem:[%s5 + $0x8] sm:$0xf]
        %v1489 = vld [vmem:[%s5 + $0xc] sm:$0xf]
        %v1491 = vsel %vm1060, %v1482, 0
        %v1494 = vsel %vm1300, %v1486, 0
        %1496 = vmatprep.subr.bf16.mxu0 0
        %1497 = vmatpush1.bf16.msra.mxu0 %v1494
        %1498 = vmatprep.subr.bf16.mxu0 0
        %1499 = vmatpush1.bf16.msra.mxu0 0
        %1500 = vmatprep.subr.bf16.mxu0 0
        %1501 = vmatpush1.bf16.msra.mxu0 0
        %1502 = vmatprep.subr.bf16.mxu0 0
        %1503 = vmatpush1.bf16.msra.mxu0 0
        %1504 = vmatprep.subr.bf16.mxu0 0
        %1505 = vmatpush1.bf16.msra.mxu0 0
        %1506 = vmatprep.subr.bf16.mxu0 0
        %1507 = vmatpush1.bf16.msra.mxu0 0
        %1508 = vmatprep.subr.bf16.mxu0 0
        %1509 = vmatpush1.bf16.msra.mxu0 0
        %1510 = vmatprep.subr.bf16.mxu0 0
        %1511 = vmatpush1.bf16.msra.mxu0 0
        %1512 = vmatprep.subr.bf16.mxu0 0
        %1513 = vmatpush1.bf16.msra.mxu0 0
        %1514 = vmatprep.subr.bf16.mxu0 0
        %1515 = vmatpush1.bf16.msra.mxu0 0
        %1516 = vmatprep.subr.bf16.mxu0 0
        %1517 = vmatpush1.bf16.msra.mxu0 0
        %1518 = vmatprep.subr.bf16.mxu0 0
        %1519 = vmatpush1.bf16.msra.mxu0 0
        %1520 = vmatprep.subr.bf16.mxu0 0
        %1521 = vmatpush1.bf16.msra.mxu0 0
        %1522 = vmatprep.subr.bf16.mxu0 0
        %1523 = vmatpush1.bf16.msra.mxu0 0
        %1524 = vmatprep.subr.bf16.mxu0 0
        %1525 = vmatpush1.bf16.msra.mxu0 0
        %1526 = vmatprep.subr.bf16.mxu0 0
        %1527 = vmatpush1.bf16.msra.mxu0 0
        %1528 = vmatprep.mubr.bf16.mxu0 0
        %1529 = vmatmul.mubr.bf16.gmra.mrb[0].mxu0 %v1491
        %v1530 = vpop.f32.mrb[0].mxu0
        %v1531 = vadd.f32 0.0, %v1530
        %v1532 = vpop.f32.mrb[0].mxu0
        %v1533 = vpop.f32.mrb[0].mxu0
        %v1534 = vpop.f32.mrb[0].mxu0
        %1535 = vdwg.mxu0
        %v1537 = vsel %vm1060, %v1483, 0
        %v1540 = vsel %vm1300, %v1487, 0
        %1542 = vmatprep.subr.bf16.mxu0 0
        %1543 = vmatpush1.bf16.msra.mxu0 %v1540
        %1544 = vmatprep.subr.bf16.mxu0 0
        %1545 = vmatpush1.bf16.msra.mxu0 0
        %1546 = vmatprep.subr.bf16.mxu0 0
        %1547 = vmatpush1.bf16.msra.mxu0 0
        %1548 = vmatprep.subr.bf16.mxu0 0
        %1549 = vmatpush1.bf16.msra.mxu0 0
        %1550 = vmatprep.subr.bf16.mxu0 0
        %1551 = vmatpush1.bf16.msra.mxu0 0
        %1552 = vmatprep.subr.bf16.mxu0 0
        %1553 = vmatpush1.bf16.msra.mxu0 0
        %1554 = vmatprep.subr.bf16.mxu0 0
        %1555 = vmatpush1.bf16.msra.mxu0 0
        %1556 = vmatprep.subr.bf16.mxu0 0
        %1557 = vmatpush1.bf16.msra.mxu0 0
        %1558 = vmatprep.subr.bf16.mxu0 0
        %1559 = vmatpush1.bf16.msra.mxu0 0
        %1560 = vmatprep.subr.bf16.mxu0 0
        %1561 = vmatpush1.bf16.msra.mxu0 0
        %1562 = vmatprep.subr.bf16.mxu0 0
        %1563 = vmatpush1.bf16.msra.mxu0 0
        %1564 = vmatprep.subr.bf16.mxu0 0
        %1565 = vmatpush1.bf16.msra.mxu0 0
        %1566 = vmatprep.subr.bf16.mxu0 0
        %1567 = vmatpush1.bf16.msra.mxu0 0
        %1568 = vmatprep.subr.bf16.mxu0 0
        %1569 = vmatpush1.bf16.msra.mxu0 0
        %1570 = vmatprep.subr.bf16.mxu0 0
        %1571 = vmatpush1.bf16.msra.mxu0 0
        %1572 = vmatprep.subr.bf16.mxu0 0
        %1573 = vmatpush1.bf16.msra.mxu0 0
        %1574 = vmatprep.mubr.bf16.mxu0 0
        %1575 = vmatmul.mubr.bf16.gmra.mrb[0].mxu0 %v1537
        %v1576 = vpop.f32.mrb[0].mxu0
        %v1577 = vadd.f32 0.0, %v1576
        %v1578 = vpop.f32.mrb[0].mxu0
        %v1579 = vpop.f32.mrb[0].mxu0
        %v1580 = vpop.f32.mrb[0].mxu0
        %1581 = vdwg.mxu0
        %v1583 = vsel %vm1060, %v1484, 0
        %v1586 = vsel %vm1300, %v1488, 0
        %1588 = vmatprep.subr.bf16.mxu0 0
        %1589 = vmatpush1.bf16.msra.mxu0 %v1586
        %1590 = vmatprep.subr.bf16.mxu0 0
        %1591 = vmatpush1.bf16.msra.mxu0 0
        %1592 = vmatprep.subr.bf16.mxu0 0
        %1593 = vmatpush1.bf16.msra.mxu0 0
        %1594 = vmatprep.subr.bf16.mxu0 0
        %1595 = vmatpush1.bf16.msra.mxu0 0
        %1596 = vmatprep.subr.bf16.mxu0 0
        %1597 = vmatpush1.bf16.msra.mxu0 0
        %1598 = vmatprep.subr.bf16.mxu0 0
        %1599 = vmatpush1.bf16.msra.mxu0 0
        %1600 = vmatprep.subr.bf16.mxu0 0
        %1601 = vmatpush1.bf16.msra.mxu0 0
        %1602 = vmatprep.subr.bf16.mxu0 0
        %1603 = vmatpush1.bf16.msra.mxu0 0
        %1604 = vmatprep.subr.bf16.mxu0 0
        %1605 = vmatpush1.bf16.msra.mxu0 0
        %1606 = vmatprep.subr.bf16.mxu0 0
        %1607 = vmatpush1.bf16.msra.mxu0 0
        %1608 = vmatprep.subr.bf16.mxu0 0
        %1609 = vmatpush1.bf16.msra.mxu0 0
        %1610 = vmatprep.subr.bf16.mxu0 0
        %1611 = vmatpush1.bf16.msra.mxu0 0
        %1612 = vmatprep.subr.bf16.mxu0 0
        %1613 = vmatpush1.bf16.msra.mxu0 0
        %1614 = vmatprep.subr.bf16.mxu0 0
        %1615 = vmatpush1.bf16.msra.mxu0 0
        %1616 = vmatprep.subr.bf16.mxu0 0
        %1617 = vmatpush1.bf16.msra.mxu0 0
        %1618 = vmatprep.subr.bf16.mxu0 0
        %1619 = vmatpush1.bf16.msra.mxu0 0
        %1620 = vmatprep.mubr.bf16.mxu0 0
        %1621 = vmatmul.mubr.bf16.gmra.mrb[0].mxu0 %v1583
        %v1622 = vpop.f32.mrb[0].mxu0
        %v1623 = vadd.f32 0.0, %v1622
        %v1624 = vpop.f32.mrb[0].mxu0
        %v1625 = vpop.f32.mrb[0].mxu0
        %v1626 = vpop.f32.mrb[0].mxu0
        %1627 = vdwg.mxu0
        %v1629 = vsel %vm1060, %v1485, 0
        %v1632 = vsel %vm1300, %v1489, 0
        %1634 = vmatprep.subr.bf16.mxu0 0
        %1635 = vmatpush1.bf16.msra.mxu0 %v1632
        %1636 = vmatprep.subr.bf16.mxu0 0
        %1637 = vmatpush1.bf16.msra.mxu0 0
        %1638 = vmatprep.subr.bf16.mxu0 0
        %1639 = vmatpush1.bf16.msra.mxu0 0
        %1640 = vmatprep.subr.bf16.mxu0 0
        %1641 = vmatpush1.bf16.msra.mxu0 0
        %1642 = vmatprep.subr.bf16.mxu0 0
        %1643 = vmatpush1.bf16.msra.mxu0 0
        %1644 = vmatprep.subr.bf16.mxu0 0
        %1645 = vmatpush1.bf16.msra.mxu0 0
        %1646 = vmatprep.subr.bf16.mxu0 0
        %1647 = vmatpush1.bf16.msra.mxu0 0
        %1648 = vmatprep.subr.bf16.mxu0 0
        %1649 = vmatpush1.bf16.msra.mxu0 0
        %1650 = vmatprep.subr.bf16.mxu0 0
        %1651 = vmatpush1.bf16.msra.mxu0 0
        %1652 = vmatprep.subr.bf16.mxu0 0
        %1653 = vmatpush1.bf16.msra.mxu0 0
        %1654 = vmatprep.subr.bf16.mxu0 0
        %1655 = vmatpush1.bf16.msra.mxu0 0
        %1656 = vmatprep.subr.bf16.mxu0 0
        %1657 = vmatpush1.bf16.msra.mxu0 0
        %1658 = vmatprep.subr.bf16.mxu0 0
        %1659 = vmatpush1.bf16.msra.mxu0 0
        %1660 = vmatprep.subr.bf16.mxu0 0
        %1661 = vmatpush1.bf16.msra.mxu0 0
        %1662 = vmatprep.subr.bf16.mxu0 0
        %1663 = vmatpush1.bf16.msra.mxu0 0
        %1664 = vmatprep.subr.bf16.mxu0 0
        %1665 = vmatpush1.bf16.msra.mxu0 0
        %1666 = vmatprep.mubr.bf16.mxu0 0
        %1667 = vmatmul.mubr.bf16.gmra.mrb[0].mxu0 %v1629
        %v1668 = vpop.f32.mrb[0].mxu0
        %v1669 = vadd.f32 0.0, %v1668
        %v1670 = vpop.f32.mrb[0].mxu0
        %v1671 = vpop.f32.mrb[0].mxu0
        %v1672 = vpop.f32.mrb[0].mxu0
        %1673 = vdwg.mxu0
        %v1674 = vsel %vm351, %v1531, 0.0
        %v1675 = vsel %vm351, %v1577, 0.0
        %v1676 = vadd.f32 %v1674, %v1675
        %v1677 = vsel %vm351, %v1623, 0.0
        %v1678 = vadd.f32 %v1676, %v1677
        %v1679 = vsel %vm351, %v1669, 0.0
        %v1680 = vadd.f32 %v1678, %v1679
        %v1681 = vadd.f32 %v1680, %v349
        %v1682 = vsel %vm351, %v1681, 0.0
        %1683 = vadd.xlane.f32.xlu0 %v1682
        %v1684 = vpop.xlane.xlu0 %1683
        %v1685 = vmul.f32 %v1684, %v355
        %v1686 = vsub.f32 %v1681, %v1685
        %v1687 = vmul.f32 %v1686, %v1686
        %v1688 = vsel %vm351, %v1687, 0.0
        %1689 = vadd.xlane.f32.xlu0 %v1688
        %v1690 = vpop.xlane.xlu0 %1689
        %v1691 = vmul.f32 %v1690, %v355
        %v1692 = vadd.f32 %v1691, 1e-05
        %v1693 = vrsqrt.pop %v1692
        %v1694 = vmul.f32 %v1686, %v1693
        %v1695 = vlaneseq
        %v1696 = vshrl.u32 %v1695, 7
        %v1697 = vsub.s32 2, %v1696
        %v1698 = vrot.slane %v350, %v1697
        %v1699 = vmul.f32 %v1694, %v1698
        %v1700 = vlaneseq
        %v1701 = vshrl.u32 %v1700, 7
        %v1702 = vsub.s32 3, %v1701
        %v1703 = vrot.slane %v350, %v1702
        %v1704 = vadd.f32 %v1699, %v1703
        %v1705 = vpack.c.bf16 %v1704, %v1704
        %v1706 = vld [vmem:[%s6] sm:$0xf]
        %v1707 = vld [vmem:[%s6 + $0x4] sm:$0xf]
        %v1708 = vld [vmem:[%s6 + $0x8] sm:$0xf]
        %v1709 = vld [vmem:[%s6 + $0xc] sm:$0xf]
        %v1710 = vld [vmem:[%s7] sm:$0x1]
        %v1712 = vlaneseq
        %v1713 = vshrl.u32 %v1712, 7
        %v1714 = vsub.s32 0, %v1713
        %v1715 = vrot.slane %v1710, %v1714
        %v1721 = vunpack.c.l.b16 %v1706
        %v1722 = vunpack.c.l.b16 %v1707
        %v1723 = vunpack.c.l.b16 %v1708
        %v1724 = vunpack.c.l.b16 %v1709
        %v1725 = vpack.c.b16 %v1722, %v1721
        %v1726 = vpack.c.b16 %v1724, %v1723
        %v1730 = vsel %vm351, %v1705, 0
        %1732 = vmatprep.subr.bf16.mxu0 0
        %1733 = vmatpush1.bf16.msra.mxu0 %v1725
        %1734 = vmatprep.subr.bf16.mxu0 0
        %1735 = vmatpush1.bf16.msra.mxu0 %v1726
        %1736 = vmatprep.subr.bf16.mxu0 0
        %1737 = vmatpush1.bf16.msra.mxu0 0
        %1738 = vmatprep.subr.bf16.mxu0 0
        %1739 = vmatpush1.bf16.msra.mxu0 0
        %1740 = vmatprep.subr.bf16.mxu0 0
        %1741 = vmatpush1.bf16.msra.mxu0 0
        %1742 = vmatprep.subr.bf16.mxu0 0
        %1743 = vmatpush1.bf16.msra.mxu0 0
        %1744 = vmatprep.subr.bf16.mxu0 0
        %1745 = vmatpush1.bf16.msra.mxu0 0
        %1746 = vmatprep.subr.bf16.mxu0 0
        %1747 = vmatpush1.bf16.msra.mxu0 0
        %1748 = vmatprep.subr.bf16.mxu0 0
        %1749 = vmatpush1.bf16.msra.mxu0 0
        %1750 = vmatprep.subr.bf16.mxu0 0
        %1751 = vmatpush1.bf16.msra.mxu0 0
        %1752 = vmatprep.subr.bf16.mxu0 0
        %1753 = vmatpush1.bf16.msra.mxu0 0
        %1754 = vmatprep.subr.bf16.mxu0 0
        %1755 = vmatpush1.bf16.msra.mxu0 0
        %1756 = vmatprep.subr.bf16.mxu0 0
        %1757 = vmatpush1.bf16.msra.mxu0 0
        %1758 = vmatprep.subr.bf16.mxu0 0
        %1759 = vmatpush1.bf16.msra.mxu0 0
        %1760 = vmatprep.subr.bf16.mxu0 0
        %1761 = vmatpush1.bf16.msra.mxu0 0
        %1762 = vmatprep.subr.bf16.mxu0 0
        %1763 = vmatpush1.bf16.msra.mxu0 0
        %1764 = vmatprep.mubr.bf16.mxu0 0
        %1765 = vmatmul.mubr.bf16.gmra.mrb[0].mxu0 %v1730
        %v1766 = vpop.f32.mrb[0].mxu0
        %v1767 = vadd.f32 %v1715, %v1766
        %v1768 = vpop.f32.mrb[0].mxu0
        %v1769 = vpop.f32.mrb[0].mxu0
        %v1770 = vpop.f32.mrb[0].mxu0
        %1771 = vdwg.mxu0
        %v1772 = vmul.f32 %v1767, 0.5
        %v1773 = vmul.f32 %v1767, 0.70710677
        %v1774 = verf.f32.pop %v1773
        %v1775 = vadd.f32 %v1774, 1.0
        %v1776 = vmul.f32 %v1772, %v1775
        %v1777 = vpack.c.bf16 %v1776, %v1776
        %v1778 = vld [vmem:[%s8] sm:$0xf]
        %v1779 = vld [vmem:[%s8 + $0x4] sm:$0xf]
        %v1780 = vld [vmem:[%s8 + $0x8] sm:$0xf]
        %v1781 = vld [vmem:[%s8 + $0xc] sm:$0xf]
        %v1782 = vld [vmem:[%s8 + $0x10] sm:$0xf]
        %v1783 = vld [vmem:[%s8 + $0x14] sm:$0xf]
        %v1784 = vld [vmem:[%s8 + $0x18] sm:$0xf]
        %v1785 = vld [vmem:[%s8 + $0x1c] sm:$0xf]
        %v1786 = vlaneseq
        %v1787 = vshrl.u32 %v1786, 7
        %v1788 = vsub.s32 4, %v1787
        %v1789 = vrot.slane %v350, %v1788
        %v1798 = vunpack.c.l.b16 %v1778
        %v1799 = vunpack.c.l.b16 %v1779
        %v1800 = vunpack.c.l.b16 %v1780
        %v1801 = vunpack.c.l.b16 %v1781
        %v1802 = vunpack.c.l.b16 %v1782
        %v1803 = vunpack.c.l.b16 %v1783
        %v1804 = vunpack.c.l.b16 %v1784
        %v1805 = vunpack.c.l.b16 %v1785
        %v1806 = vpack.c.b16 %v1799, %v1798
        %v1807 = vpack.c.b16 %v1801, %v1800
        %v1808 = vpack.c.b16 %v1803, %v1802
        %v1809 = vpack.c.b16 %v1805, %v1804
        %vm1814 = vcmask 523264
        %v1816 = vsel %vm1814, %v1777, 0
        %1818 = vmatprep.subr.bf16.mxu0 0
        %1819 = vmatpush1.bf16.msra.mxu0 %v1806
        %1820 = vmatprep.subr.bf16.mxu0 0
        %1821 = vmatpush1.bf16.msra.mxu0 %v1807
        %1822 = vmatprep.subr.bf16.mxu0 0
        %1823 = vmatpush1.bf16.msra.mxu0 %v1808
        %1824 = vmatprep.subr.bf16.mxu0 0
        %1825 = vmatpush1.bf16.msra.mxu0 %v1809
        %1826 = vmatprep.subr.bf16.mxu0 0
        %1827 = vmatpush1.bf16.msra.mxu0 0
        %1828 = vmatprep.subr.bf16.mxu0 0
        %1829 = vmatpush1.bf16.msra.mxu0 0
        %1830 = vmatprep.subr.bf16.mxu0 0
        %1831 = vmatpush1.bf16.msra.mxu0 0
        %1832 = vmatprep.subr.bf16.mxu0 0
        %1833 = vmatpush1.bf16.msra.mxu0 0
        %1834 = vmatprep.subr.bf16.mxu0 0
        %1835 = vmatpush1.bf16.msra.mxu0 0
        %1836 = vmatprep.subr.bf16.mxu0 0
        %1837 = vmatpush1.bf16.msra.mxu0 0
        %1838 = vmatprep.subr.bf16.mxu0 0
        %1839 = vmatpush1.bf16.msra.mxu0 0
        %1840 = vmatprep.subr.bf16.mxu0 0
        %1841 = vmatpush1.bf16.msra.mxu0 0
        %1842 = vmatprep.subr.bf16.mxu0 0
        %1843 = vmatpush1.bf16.msra.mxu0 0
        %1844 = vmatprep.subr.bf16.mxu0 0
        %1845 = vmatpush1.bf16.msra.mxu0 0
        %1846 = vmatprep.subr.bf16.mxu0 0
        %1847 = vmatpush1.bf16.msra.mxu0 0
        %1848 = vmatprep.subr.bf16.mxu0 0
        %1849 = vmatpush1.bf16.msra.mxu0 0
        %1850 = vmatprep.mubr.bf16.mxu0 0
        %1851 = vmatmul.mubr.bf16.gmra.mrb[0].mxu0 %v1816
        %v1852 = vpop.f32.mrb[0].mxu0
        %v1853 = vadd.f32 %v1789, %v1852
        %v1854 = vpop.f32.mrb[0].mxu0
        %v1855 = vpop.f32.mrb[0].mxu0
        %v1856 = vpop.f32.mrb[0].mxu0
        %1857 = vdwg.mxu0
        %v1858 = vadd.f32 %v1853, %v1681
        %1859 = vst.msk [vmem:[%s347] sm:$0xff] %vm351, %v1858
        %s1860 = sand.u32 %s228, 1
        %s1861 = scalar_lea.sflag [#allocation4], %s1860
        %s1862 = sand.u32 %s228, 1
        %s1863 = smul.addr %s1862, 8
        %s1864 = scalar_lea.vmem [#allocation5], %s1863
        // Predicated region
        $region61: #{transformer_forward.3} parent=55 // pred_check
          %p1865 = pneg %p238
        $region62: #{transformer_forward.3} parent=55 // pred_check_branch
          %1867 = sbr.rel (%p1865) target = $region64
        $region63: #{transformer_forward.3} parent=55 // pred_region
          %s1869 = ssub.s32 128, 128
          %1870 = vsyncadd %s1861, %s1869
          %s1871 = smul.addr %s26, 128
          %s1872 = scalar_lea.hbm %s9, %s1871
          %s1874 = sshll.u32 %s1864, 4
          %s1875 = int_to_ptr.vmem [resolvable:$true] %s1874
          %1877 = dma.vmem_to_hbm [thread:$0]  %s1875, 128, %s1872, %s1861
        $region64: #{transformer_forward.3} parent=55 // pred_fallthru
          _
      $region56: #{transformer_forward.3} parent=5 // pred_fallthru
        _
      %p1878 = scmp.le.s32.totalorder 2, %s21
      // Predicated region
      $region65: #{transformer_forward.3} parent=5 // pred_check
        %p1879 = pneg %p1878
      $region66: #{transformer_forward.3} parent=5 // pred_check_branch
        %1881 = sbr.rel (%p1879) target = $region68
      $region67: #{transformer_forward.3} parent=5 // pred_region
        %s1882 = ssub.s32 %s21, 2
        // Predicated region
        $region69: #{transformer_forward.3} parent=67 // pred_check
          %p1883 = pneg %p244
        $region70: #{transformer_forward.3} parent=67 // pred_check_branch
          %1885 = sbr.rel (%p1883) target = $region72
        $region71: #{transformer_forward.3} parent=67 // pred_region
          %s1886 = sand.u32 %s229, 1
          %s1887 = scalar_lea.sflag [#allocation4], %s1886
          %s1888 = sand.u32 %s229, 1
          %s1889 = smul.addr %s1888, 8
          %s1890 = scalar_lea.vmem [#allocation5], %s1889
          %1891 = dma.done %s1887, 128
        $region72: #{transformer_forward.3} parent=67 // pred_fallthru
          _
      $region68: #{transformer_forward.3} parent=5 // pred_fallthru
        _
    $region6: #{transformer_forward.3} parent=1 // loop_footer
      %s25 = sadd.s32 1, %s21
    $region7: #{transformer_forward.3} parent=1 // loop_footer_branch
      %20 = sbr.rel target = $region3
    $region8: #{transformer_forward.3} parent=1 // loop_exit
      _
    %1892 = vsyncpa [#allocation3], 1
    %s1893 = scalar_lea.sflag [#allocation3], 1
    %1894 = vsyncpa %s1893, 1
    %1895 = vsyncpa [#allocation4], 1
    %s1896 = scalar_lea.sflag [#allocation4], 1
    %1897 = vsyncpa %s1896, 1

// kernel: transformer_forward.2
$region0: #{transformer_forward.2}
  #allocation0 [shape = 'u32[]', space=smem, size = 0x4, offset = 0x4, fixed_abs, tag = 'smem constant byte address 0x4 - core index']
  #allocation1 [shape = 'u32[144,128]{1,0:T(1,128)}', space=vmem, size = 0x12000, scoped, tag = 'internal scratch']
  %s0 = inlined_call_operand.vmem [shape: f32[2,8,32], index: 0, kind: input, shape index: {}, may-alias: {0,9}]
  %s1 = inlined_call_operand.vmem [shape: f32[5,32], index: 1, kind: input, shape index: {}]
  %s2 = inlined_call_operand.vmem [shape: bf16[4,32,8], index: 2, kind: input, shape index: {}]
  %s3 = inlined_call_operand.vmem [shape: bf16[4,32,8], index: 3, kind: input, shape index: {}]
  %s4 = inlined_call_operand.vmem [shape: bf16[4,32,8], index: 4, kind: input, shape index: {}]
  %s5 = inlined_call_operand.vmem [shape: bf16[4,8,32], index: 5, kind: input, shape index: {}]
  %s6 = inlined_call_operand.vmem [shape: bf16[32,64], index: 6, kind: input, shape index: {}]
  %s7 = inlined_call_operand.vmem [shape: f32[1,64], index: 7, kind: input, shape index: {}]
  %s8 = inlined_call_operand.vmem [shape: bf16[64,32], index: 8, kind: input, shape index: {}]
  %s9 = inlined_call_operand.vmem [shape: f32[2,8,32], index: 9, kind: output, shape index: {}, may-alias: {0,9}]
  %s10 = sld [smem:[#allocation0]]
  $region69: #{transformer_forward.2} parent=0
    _
  %s12 = ssub.s32 1, %s10
  %s13 = scalar_select 0, %s12, %s10
  loop: start=0, step=1, limit=4
  $region2: #{transformer_forward.2} parent=0 // loop_pre_header
    _
  $region3: #{transformer_forward.2} parent=0 // loop_header
    %s15 = sphi 0, %s19
    %p16 = scmp.ge.s32.totalorder %s15, 4
    %s25 = sphi 0, %s27
    %s28 = sphi 0, %s25
    %s29 = sphi 0, %s28
    %s45 = sphi 0, %s29
    %s49 = sphi 0, %s49
    %s51 = sphi 0, %s49
    %s52 = sphi 0, %s51
    %s66 = sphi 0, %s52
    %s70 = sphi 0, %s70
    %s72 = sphi 0, %s70
    %s73 = sphi 0, %s72
    %s87 = sphi 0, %s73
    %s91 = sphi 0, %s91
    %s93 = sphi 0, %s91
    %s94 = sphi 0, %s93
    %s108 = sphi 0, %s94
    %s112 = sphi 0, %s112
    %s114 = sphi 0, %s112
    %s115 = sphi 0, %s114
    %s129 = sphi 0, %s115
    %s133 = sphi 0, %s133
    %s135 = sphi 0, %s133
    %s136 = sphi 0, %s135
    %s150 = sphi 0, %s136
    %s154 = sphi 0, %s154
    %s156 = sphi 0, %s154
    %s157 = sphi 0, %s156
    %s171 = sphi 0, %s157
    %s175 = sphi 0, %s175
    %s177 = sphi 0, %s175
    %s178 = sphi 0, %s177
    %s192 = sphi 0, %s178
    %s196 = sphi 0, %s196
    %s198 = sphi 0, %s196
    %s199 = sphi 0, %s198
    %s213 = sphi 0, %s199
    %s219 = sphi 0, %s221
    %s222 = sphi 0, %s219
    %s223 = sphi 0, %s222
    %s239 = sphi 0, %s223
  $region4: #{transformer_forward.2} parent=0 // loop_header_branch
    %18 = sbr.rel (%p16) target = $region8
  $region5: #{transformer_forward.2} parent=0 // loop_body
    %s20 = ssub.s32 %s15, 1
    %s21 = ssub.s32 %s15, 2
    %s22 = sadd.s32 %s15, 1
    %s23 = ssub.s32 %s15, %s22
    %p24 = scmp.eq.s32.totalorder %s23, 0
    %s26 = sadd.s32 %s25, 1
    %s27 = scalar_select %p24, %s25, %s26
    %p30 = pneg %p24
    %p31 = scmp.eq.s32.totalorder %s15, 1
    %p32 = por %p30, %p31
    %p33 = scmp.ne.s32.totalorder %s25, %s28
    %p34 = scmp.eq.s32.totalorder %s15, 0
    %p35 = por %p33, %p34
    %p36 = scmp.ne.s32.totalorder %s25, %s28
    %p37 = scmp.eq.s32.totalorder %s20, 1
    %p38 = por %p36, %p37
    %p39 = scmp.ne.s32.totalorder %s28, %s29
    %p40 = scmp.eq.s32.totalorder %s20, 0
    %p41 = por %p39, %p40
    %p42 = scmp.ne.s32.totalorder %s28, %s29
    %p43 = scmp.eq.s32.totalorder %s21, 1
    %p44 = por %p42, %p43
    %p46 = scmp.ne.s32.totalorder %s29, %s45
    %p47 = scmp.eq.s32.totalorder %s21, 0
    %p48 = por %p46, %p47
    %s50 = sadd.s32 %s49, 1
    %p53 = scmp.eq.s32.totalorder %s15, 1
    %p54 = scmp.ne.s32.totalorder %s49, %s51
    %p55 = scmp.eq.s32.totalorder %s15, 0
    %p56 = por %p54, %p55
    %p57 = scmp.ne.s32.totalorder %s49, %s51
    %p58 = scmp.eq.s32.totalorder %s20, 1
    %p59 = por %p57, %p58
    %p60 = scmp.ne.s32.totalorder %s51, %s52
    %p61 = scmp.eq.s32.totalorder %s20, 0
    %p62 = por %p60, %p61
    %p63 = scmp.ne.s32.totalorder %s51, %s52
    %p64 = scmp.eq.s32.totalorder %s21, 1
    %p65 = por %p63, %p64
    %p67 = scmp.ne.s32.totalorder %s52, %s66
    %p68 = scmp.eq.s32.totalorder %s21, 0
    %p69 = por %p67, %p68
    %s71 = sadd.s32 %s70, 1
    %p74 = scmp.eq.s32.totalorder %s15, 1
    %p75 = scmp.ne.s32.totalorder %s70, %s72
    %p76 = scmp.eq.s32.totalorder %s15, 0
    %p77 = por %p75, %p76
    %p78 = scmp.ne.s32.totalorder %s70, %s72
    %p79 = scmp.eq.s32.totalorder %s20, 1
    %p80 = por %p78, %p79
    %p81 = scmp.ne.s32.totalorder %s72, %s73
    %p82 = scmp.eq.s32.totalorder %s20, 0
    %p83 = por %p81, %p82
    %p84 = scmp.ne.s32.totalorder %s72, %s73
    %p85 = scmp.eq.s32.totalorder %s21, 1
    %p86 = por %p84, %p85
    %p88 = scmp.ne.s32.totalorder %s73, %s87
    %p89 = scmp.eq.s32.totalorder %s21, 0
    %p90 = por %p88, %p89
    %s92 = sadd.s32 %s91, 1
    %p95 = scmp.eq.s32.totalorder %s15, 1
    %p96 = scmp.ne.s32.totalorder %s91, %s93
    %p97 = scmp.eq.s32.totalorder %s15, 0
    %p98 = por %p96, %p97
    %p99 = scmp.ne.s32.totalorder %s91, %s93
    %p100 = scmp.eq.s32.totalorder %s20, 1
    %p101 = por %p99, %p100
    %p102 = scmp.ne.s32.totalorder %s93, %s94
    %p103 = scmp.eq.s32.totalorder %s20, 0
    %p104 = por %p102, %p103
    %p105 = scmp.ne.s32.totalorder %s93, %s94
    %p106 = scmp.eq.s32.totalorder %s21, 1
    %p107 = por %p105, %p106
    %p109 = scmp.ne.s32.totalorder %s94, %s108
    %p110 = scmp.eq.s32.totalorder %s21, 0
    %p111 = por %p109, %p110
    %s113 = sadd.s32 %s112, 1
    %p116 = scmp.eq.s32.totalorder %s15, 1
    %p117 = scmp.ne.s32.totalorder %s112, %s114
    %p118 = scmp.eq.s32.totalorder %s15, 0
    %p119 = por %p117, %p118
    %p120 = scmp.ne.s32.totalorder %s112, %s114
    %p121 = scmp.eq.s32.totalorder %s20, 1
    %p122 = por %p120, %p121
    %p123 = scmp.ne.s32.totalorder %s114, %s115
    %p124 = scmp.eq.s32.totalorder %s20, 0
    %p125 = por %p123, %p124
    %p126 = scmp.ne.s32.totalorder %s114, %s115
    %p127 = scmp.eq.s32.totalorder %s21, 1
    %p128 = por %p126, %p127
    %p130 = scmp.ne.s32.totalorder %s115, %s129
    %p131 = scmp.eq.s32.totalorder %s21, 0
    %p132 = por %p130, %p131
    %s134 = sadd.s32 %s133, 1
    %p137 = scmp.eq.s32.totalorder %s15, 1
    %p138 = scmp.ne.s32.totalorder %s133, %s135
    %p139 = scmp.eq.s32.totalorder %s15, 0
    %p140 = por %p138, %p139
    %p141 = scmp.ne.s32.totalorder %s133, %s135
    %p142 = scmp.eq.s32.totalorder %s20, 1
    %p143 = por %p141, %p142
    %p144 = scmp.ne.s32.totalorder %s135, %s136
    %p145 = scmp.eq.s32.totalorder %s20, 0
    %p146 = por %p144, %p145
    %p147 = scmp.ne.s32.totalorder %s135, %s136
    %p148 = scmp.eq.s32.totalorder %s21, 1
    %p149 = por %p147, %p148
    %p151 = scmp.ne.s32.totalorder %s136, %s150
    %p152 = scmp.eq.s32.totalorder %s21, 0
    %p153 = por %p151, %p152
    %s155 = sadd.s32 %s154, 1
    %p158 = scmp.eq.s32.totalorder %s15, 1
    %p159 = scmp.ne.s32.totalorder %s154, %s156
    %p160 = scmp.eq.s32.totalorder %s15, 0
    %p161 = por %p159, %p160
    %p162 = scmp.ne.s32.totalorder %s154, %s156
    %p163 = scmp.eq.s32.totalorder %s20, 1
    %p164 = por %p162, %p163
    %p165 = scmp.ne.s32.totalorder %s156, %s157
    %p166 = scmp.eq.s32.totalorder %s20, 0
    %p167 = por %p165, %p166
    %p168 = scmp.ne.s32.totalorder %s156, %s157
    %p169 = scmp.eq.s32.totalorder %s21, 1
    %p170 = por %p168, %p169
    %p172 = scmp.ne.s32.totalorder %s157, %s171
    %p173 = scmp.eq.s32.totalorder %s21, 0
    %p174 = por %p172, %p173
    %s176 = sadd.s32 %s175, 1
    %p179 = scmp.eq.s32.totalorder %s15, 1
    %p180 = scmp.ne.s32.totalorder %s175, %s177
    %p181 = scmp.eq.s32.totalorder %s15, 0
    %p182 = por %p180, %p181
    %p183 = scmp.ne.s32.totalorder %s175, %s177
    %p184 = scmp.eq.s32.totalorder %s20, 1
    %p185 = por %p183, %p184
    %p186 = scmp.ne.s32.totalorder %s177, %s178
    %p187 = scmp.eq.s32.totalorder %s20, 0
    %p188 = por %p186, %p187
    %p189 = scmp.ne.s32.totalorder %s177, %s178
    %p190 = scmp.eq.s32.totalorder %s21, 1
    %p191 = por %p189, %p190
    %p193 = scmp.ne.s32.totalorder %s178, %s192
    %p194 = scmp.eq.s32.totalorder %s21, 0
    %p195 = por %p193, %p194
    %s197 = sadd.s32 %s196, 1
    %p200 = scmp.eq.s32.totalorder %s15, 1
    %p201 = scmp.ne.s32.totalorder %s196, %s198
    %p202 = scmp.eq.s32.totalorder %s15, 0
    %p203 = por %p201, %p202
    %p204 = scmp.ne.s32.totalorder %s196, %s198
    %p205 = scmp.eq.s32.totalorder %s20, 1
    %p206 = por %p204, %p205
    %p207 = scmp.ne.s32.totalorder %s198, %s199
    %p208 = scmp.eq.s32.totalorder %s20, 0
    %p209 = por %p207, %p208
    %p210 = scmp.ne.s32.totalorder %s198, %s199
    %p211 = scmp.eq.s32.totalorder %s21, 1
    %p212 = por %p210, %p211
    %p214 = scmp.ne.s32.totalorder %s199, %s213
    %p215 = scmp.eq.s32.totalorder %s21, 0
    %p216 = por %p214, %p215
    %s217 = ssub.s32 %s15, %s22
    %p218 = scmp.eq.s32.totalorder %s217, 0
    %s220 = sadd.s32 %s219, 1
    %s221 = scalar_select %p218, %s219, %s220
    %p224 = pneg %p218
    %p225 = scmp.eq.s32.totalorder %s15, 1
    %p226 = por %p224, %p225
    %p227 = scmp.ne.s32.totalorder %s219, %s222
    %p228 = scmp.eq.s32.totalorder %s15, 0
    %p229 = por %p227, %p228
    %p230 = scmp.ne.s32.totalorder %s219, %s222
    %p231 = scmp.eq.s32.totalorder %s20, 1
    %p232 = por %p230, %p231
    %p233 = scmp.ne.s32.totalorder %s222, %s223
    %p234 = scmp.eq.s32.totalorder %s20, 0
    %p235 = por %p233, %p234
    %p236 = scmp.ne.s32.totalorder %s222, %s223
    %p237 = scmp.eq.s32.totalorder %s21, 1
    %p238 = por %p236, %p237
    %p240 = scmp.ne.s32.totalorder %s223, %s239
    %p241 = scmp.eq.s32.totalorder %s21, 0
    %p242 = por %p240, %p241
    %p243 = scmp.le.s32.totalorder 1, %s15
    %p244 = scmp.lt.s32.totalorder %s15, 3
    %p245 = pnand %p243, %p244
    %p246 = pneg %p245
    // Predicated region
    $region9: #{transformer_forward.2} parent=5 // pred_check
      _
    $region10: #{transformer_forward.2} parent=5 // pred_check_branch
      %248 = sbr.rel (%p245) target = $region12
    $region11: #{transformer_forward.2} parent=5 // pred_region
      %s249 = ssub.s32 %s15, 1
      // Predicated region
      $region13: #{transformer_forward.2} parent=11 // pred_check
        %p250 = pneg %p62
      $region14: #{transformer_forward.2} parent=11 // pred_check_branch
        %252 = sbr.rel (%p250) target = $region16
      $region15: #{transformer_forward.2} parent=11 // pred_region
        _
      $region16: #{transformer_forward.2} parent=11 // pred_fallthru
        _
      // Predicated region
      $region17: #{transformer_forward.2} parent=11 // pred_check
        %p253 = pneg %p83
      $region18: #{transformer_forward.2} parent=11 // pred_check_branch
        %255 = sbr.rel (%p253) target = $region20
      $region19: #{transformer_forward.2} parent=11 // pred_region
        _
      $region20: #{transformer_forward.2} parent=11 // pred_fallthru
        _
      // Predicated region
      $region21: #{transformer_forward.2} parent=11 // pred_check
        %p256 = pneg %p104
      $region22: #{transformer_forward.2} parent=11 // pred_check_branch
        %258 = sbr.rel (%p256) target = $region24
      $region23: #{transformer_forward.2} parent=11 // pred_region
        _
      $region24: #{transformer_forward.2} parent=11 // pred_fallthru
        _
      // Predicated region
      $region25: #{transformer_forward.2} parent=11 // pred_check
        %p259 = pneg %p125
      $region26: #{transformer_forward.2} parent=11 // pred_check_branch
        %261 = sbr.rel (%p259) target = $region28
      $region27: #{transformer_forward.2} parent=11 // pred_region
        _
      $region28: #{transformer_forward.2} parent=11 // pred_fallthru
        _
      // Predicated region
      $region29: #{transformer_forward.2} parent=11 // pred_check
        %p262 = pneg %p146
      $region30: #{transformer_forward.2} parent=11 // pred_check_branch
        %264 = sbr.rel (%p262) target = $region32
      $region31: #{transformer_forward.2} parent=11 // pred_region
        _
      $region32: #{transformer_forward.2} parent=11 // pred_fallthru
        _
      // Predicated region
      $region33: #{transformer_forward.2} parent=11 // pred_check
        %p265 = pneg %p167
      $region34: #{transformer_forward.2} parent=11 // pred_check_branch
        %267 = sbr.rel (%p265) target = $region36
      $region35: #{transformer_forward.2} parent=11 // pred_region
        _
      $region36: #{transformer_forward.2} parent=11 // pred_fallthru
        _
      // Predicated region
      $region37: #{transformer_forward.2} parent=11 // pred_check
        %p268 = pneg %p188
      $region38: #{transformer_forward.2} parent=11 // pred_check_branch
        %270 = sbr.rel (%p268) target = $region40
      $region39: #{transformer_forward.2} parent=11 // pred_region
        _
      $region40: #{transformer_forward.2} parent=11 // pred_fallthru
        _
      // Predicated region
      $region41: #{transformer_forward.2} parent=11 // pred_check
        %p271 = pneg %p209
      $region42: #{transformer_forward.2} parent=11 // pred_check_branch
        %273 = sbr.rel (%p271) target = $region44
      $region43: #{transformer_forward.2} parent=11 // pred_region
        _
      $region44: #{transformer_forward.2} parent=11 // pred_fallthru
        _
    $region12: #{transformer_forward.2} parent=5 // pred_fallthru
      _
    %p274 = scmp.lt.s32.totalorder %s15, 2
    // Predicated region
    $region45: #{transformer_forward.2} parent=5 // pred_check
      %p275 = pneg %p274
    $region46: #{transformer_forward.2} parent=5 // pred_check_branch
      %277 = sbr.rel (%p275) target = $region48
    $region47: #{transformer_forward.2} parent=5 // pred_region
      // Predicated region
      $region49: #{transformer_forward.2} parent=47 // pred_check
        %p278 = pneg %p35
      $region50: #{transformer_forward.2} parent=47 // pred_check_branch
        %280 = sbr.rel (%p278) target = $region52
      $region51: #{transformer_forward.2} parent=47 // pred_region
        %p281 = scmp.lt.s32.totalorder %s15, 1
        %s282 = scalar_select %p281, %s15, 1
        %s283 = smul.addr %s282, 8
        %s284 = scalar_lea.vmem %s0, %s283
      $region52: #{transformer_forward.2} parent=47 // pred_fallthru
        _
    $region48: #{transformer_forward.2} parent=5 // pred_fallthru
      _
    %p285 = scmp.le.s32.totalorder 1, %s15
    %p286 = scmp.lt.s32.totalorder %s15, 3
    %p287 = pnand %p285, %p286
    %p288 = pneg %p287
    // Predicated region
    $region53: #{transformer_forward.2} parent=5 // pred_check
      _
    $region54: #{transformer_forward.2} parent=5 // pred_check_branch
      %290 = sbr.rel (%p287) target = $region56
    $region55: #{transformer_forward.2} parent=5 // pred_region
      %s291 = ssub.s32 %s15, 1
      %p292 = scmp.lt.s32.totalorder %s20, 1
      %s293 = scalar_select %p292, %s20, 1
      %s294 = smul.addr %s293, 8
      %s295 = scalar_lea.vmem %s0, %s294
      %p296 = pneg %p41
      %p297 = pneg %p38
      %p298 = pneg %p62
      %p299 = pneg %p59
      %p300 = pneg %p83
      %p301 = pneg %p80
      %p302 = pneg %p104
      %p303 = pneg %p101
      %p304 = pneg %p125
      %p305 = pneg %p122
      %p306 = pneg %p146
      %p307 = pneg %p143
      %p308 = pneg %p167
      %p309 = pneg %p164
      %p310 = pneg %p188
      %p311 = pneg %p185
      %p312 = pneg %p209
      %p313 = pneg %p206
      %p314 = pneg %p235
      %p315 = pneg %p232
      %p316 = scmp.lt.s32.totalorder %s20, 1
      %s317 = scalar_select %p316, %s20, 1
      %s318 = smul.addr %s317, 8
      %s319 = scalar_lea.vmem %s9, %s318
      %p320 = scmp.lt.s32.totalorder %s20, 1
      %s321 = scalar_select %p320, %s20, 1
      %s322 = smul.addr %s321, 8
      %s323 = scalar_lea.vmem %s0, %s322
      %p324 = scmp.lt.s32.totalorder %s20, 1
      %s325 = scalar_select %p324, %s20, 1
      %s326 = smul.addr %s325, 8
      %s327 = scalar_lea.vmem %s9, %s326
      %v329 = vld [vmem:[%s323] sm:$0xff]
      %v330 = vld [vmem:[%s1] sm:$0x1f]
      %vm331 = vcmask 261120
      %v332 = vsel %vm331, %v329, 0.0
      %333 = vadd.xlane.f32.xlu0 %v332
      %v334 = vpop.xlane.xlu0 %333
      %v335 = vrcp.pop 32.0
      %v336 = vmul.f32 %v334, %v335
      %v337 = vsub.f32 %v329, %v336
      %v338 = vmul.f32 %v337, %v337
      %v339 = vsel %vm331, %v338, 0.0
      %340 = vadd.xlane.f32.xlu0 %v339
      %v341 = vpop.xlane.xlu0 %340
      %v342 = vmul.f32 %v341, %v335
      %v343 = vadd.f32 %v342, 1e-05
      %v344 = vrsqrt.pop %v343
      %v345 = vmul.f32 %v337, %v344
      %v346 = vlaneseq
      %v347 = vshrl.u32 %v346, 7
      %v348 = vsub.s32 0, %v347
      %v349 = vrot.slane %v330, %v348
      %v350 = vmul.f32 %v345, %v349
      %v351 = vlaneseq
      %v352 = vshrl.u32 %v351, 7
      %v353 = vsub.s32 1, %v352
      %v354 = vrot.slane %v330, %v353
      %v355 = vadd.f32 %v350, %v354
      %v356 = vpack.c.bf16 %v355, %v355
      %v357 = vld [vmem:[%s2] sm:$0xf]
      %v358 = vld [vmem:[%s2 + $0x4] sm:$0xf]
      %v359 = vld [vmem:[%s2 + $0x8] sm:$0xf]
      %v360 = vld [vmem:[%s2 + $0xc] sm:$0xf]
      %v361 = vld [vmem:[%s2 + $0x10] sm:$0xf]
      %v362 = vld [vmem:[%s2 + $0x14] sm:$0xf]
      %v363 = vld [vmem:[%s2 + $0x18] sm:$0xf]
      %v364 = vld [vmem:[%s2 + $0x1c] sm:$0xf]
      %v365 = vld [vmem:[%s2 + $0x20] sm:$0xf]
      %v366 = vld [vmem:[%s2 + $0x24] sm:$0xf]
      %v367 = vld [vmem:[%s2 + $0x28] sm:$0xf]
      %v368 = vld [vmem:[%s2 + $0x2c] sm:$0xf]
      %v369 = vld [vmem:[%s2 + $0x30] sm:$0xf]
      %v370 = vld [vmem:[%s2 + $0x34] sm:$0xf]
      %v371 = vld [vmem:[%s2 + $0x38] sm:$0xf]
      %v372 = vld [vmem:[%s2 + $0x3c] sm:$0xf]
      %v377 = vunpack.c.l.b16 %v357
      %v378 = vunpack.c.l.b16 %v358
      %v379 = vunpack.c.l.b16 %v359
      %v380 = vunpack.c.l.b16 %v360
      %v381 = vpack.c.b16 %v378, %v377
      %v382 = vpack.c.b16 %v380, %v379
      %v386 = vsel %vm331, %v356, 0
      %388 = vmatprep.subr.bf16.mxu0 0
      %389 = vmatpush1.bf16.msra.mxu0 %v381
      %390 = vmatprep.subr.bf16.mxu0 0
      %391 = vmatpush1.bf16.msra.mxu0 %v382
      %392 = vmatprep.subr.bf16.mxu0 0
      %393 = vmatpush1.bf16.msra.mxu0 0
      %394 = vmatprep.subr.bf16.mxu0 0
      %395 = vmatpush1.bf16.msra.mxu0 0
      %396 = vmatprep.subr.bf16.mxu0 0
      %397 = vmatpush1.bf16.msra.mxu0 0
      %398 = vmatprep.subr.bf16.mxu0 0
      %399 = vmatpush1.bf16.msra.mxu0 0
      %400 = vmatprep.subr.bf16.mxu0 0
      %401 = vmatpush1.bf16.msra.mxu0 0
      %402 = vmatprep.subr.bf16.mxu0 0
      %403 = vmatpush1.bf16.msra.mxu0 0
      %404 = vmatprep.subr.bf16.mxu0 0
      %405 = vmatpush1.bf16.msra.mxu0 0
      %406 = vmatprep.subr.bf16.mxu0 0
      %407 = vmatpush1.bf16.msra.mxu0 0
      %408 = vmatprep.subr.bf16.mxu0 0
      %409 = vmatpush1.bf16.msra.mxu0 0
      %410 = vmatprep.subr.bf16.mxu0 0
      %411 = vmatpush1.bf16.msra.mxu0 0
      %412 = vmatprep.subr.bf16.mxu0 0
      %413 = vmatpush1.bf16.msra.mxu0 0
      %414 = vmatprep.subr.bf16.mxu0 0
      %415 = vmatpush1.bf16.msra.mxu0 0
      %416 = vmatprep.subr.bf16.mxu0 0
      %417 = vmatpush1.bf16.msra.mxu0 0
      %418 = vmatprep.subr.bf16.mxu0 0
      %419 = vmatpush1.bf16.msra.mxu0 0
      %420 = vmatprep.mubr.bf16.mxu0 0
      %421 = vmatmul.mubr.bf16.gmra.mrb[0].mxu0 %v386
      %v422 = vpop.f32.mrb[0].mxu0
      %v423 = vadd.f32 0.0, %v422
      %v424 = vpop.f32.mrb[0].mxu0
      %v425 = vpop.f32.mrb[0].mxu0
      %v426 = vpop.f32.mrb[0].mxu0
      %427 = vdwg.mxu0
      %v432 = vunpack.c.l.b16 %v361
      %v433 = vunpack.c.l.b16 %v362
      %v434 = vunpack.c.l.b16 %v363
      %v435 = vunpack.c.l.b16 %v364
      %v436 = vpack.c.b16 %v433, %v432
      %v437 = vpack.c.b16 %v435, %v434
      %440 = vmatprep.subr.bf16.mxu0 0
      %441 = vmatpush1.bf16.msra.mxu0 %v436
      %442 = vmatprep.subr.bf16.mxu0 0
      %443 = vmatpush1.bf16.msra.mxu0 %v437
      %444 = vmatprep.subr.bf16.mxu0 0
      %445 = vmatpush1.bf16.msra.mxu0 0
      %446 = vmatprep.subr.bf16.mxu0 0
      %447 = vmatpush1.bf16.msra.mxu0 0
      %448 = vmatprep.subr.bf16.mxu0 0
      %449 = vmatpush1.bf16.msra.mxu0 0
      %450 = vmatprep.subr.bf16.mxu0 0
      %451 = vmatpush1.bf16.msra.mxu0 0
      %452 = vmatprep.subr.bf16.mxu0 0
      %453 = vmatpush1.bf16.msra.mxu0 0
      %454 = vmatprep.subr.bf16.mxu0 0
      %455 = vmatpush1.bf16.msra.mxu0 0
      %456 = vmatprep.subr.bf16.mxu0 0
      %457 = vmatpush1.bf16.msra.mxu0 0
      %458 = vmatprep.subr.bf16.mxu0 0
      %459 = vmatpush1.bf16.msra.mxu0 0
      %460 = vmatprep.subr.bf16.mxu0 0
      %461 = vmatpush1.bf16.msra.mxu0 0
      %462 = vmatprep.subr.bf16.mxu0 0
      %463 = vmatpush1.bf16.msra.mxu0 0
      %464 = vmatprep.subr.bf16.mxu0 0
      %465 = vmatpush1.bf16.msra.mxu0 0
      %466 = vmatprep.subr.bf16.mxu0 0
      %467 = vmatpush1.bf16.msra.mxu0 0
      %468 = vmatprep.subr.bf16.mxu0 0
      %469 = vmatpush1.bf16.msra.mxu0 0
      %470 = vmatprep.subr.bf16.mxu0 0
      %471 = vmatpush1.bf16.msra.mxu0 0
      %472 = vmatprep.mubr.bf16.mxu0 0
      %473 = vmatmul.mubr.bf16.gmra.mrb[0].mxu0 %v386
      %v474 = vpop.f32.mrb[0].mxu0
      %v475 = vadd.f32 0.0, %v474
      %v476 = vpop.f32.mrb[0].mxu0
      %v477 = vpop.f32.mrb[0].mxu0
      %v478 = vpop.f32.mrb[0].mxu0
      %479 = vdwg.mxu0
      %v484 = vunpack.c.l.b16 %v365
      %v485 = vunpack.c.l.b16 %v366
      %v486 = vunpack.c.l.b16 %v367
      %v487 = vunpack.c.l.b16 %v368
      %v488 = vpack.c.b16 %v485, %v484
      %v489 = vpack.c.b16 %v487, %v486
      %492 = vmatprep.subr.bf16.mxu0 0
      %493 = vmatpush1.bf16.msra.mxu0 %v488
      %494 = vmatprep.subr.bf16.mxu0 0
      %495 = vmatpush1.bf16.msra.mxu0 %v489
      %496 = vmatprep.subr.bf16.mxu0 0
      %497 = vmatpush1.bf16.msra.mxu0 0
      %498 = vmatprep.subr.bf16.mxu0 0
      %499 = vmatpush1.bf16.msra.mxu0 0
      %500 = vmatprep.subr.bf16.mxu0 0
      %501 = vmatpush1.bf16.msra.mxu0 0
      %502 = vmatprep.subr.bf16.mxu0 0
      %503 = vmatpush1.bf16.msra.mxu0 0
      %504 = vmatprep.subr.bf16.mxu0 0
      %505 = vmatpush1.bf16.msra.mxu0 0
      %506 = vmatprep.subr.bf16.mxu0 0
      %507 = vmatpush1.bf16.msra.mxu0 0
      %508 = vmatprep.subr.bf16.mxu0 0
      %509 = vmatpush1.bf16.msra.mxu0 0
      %510 = vmatprep.subr.bf16.mxu0 0
      %511 = vmatpush1.bf16.msra.mxu0 0
      %512 = vmatprep.subr.bf16.mxu0 0
      %513 = vmatpush1.bf16.msra.mxu0 0
      %514 = vmatprep.subr.bf16.mxu0 0
      %515 = vmatpush1.bf16.msra.mxu0 0
      %516 = vmatprep.subr.bf16.mxu0 0
      %517 = vmatpush1.bf16.msra.mxu0 0
      %518 = vmatprep.subr.bf16.mxu0 0
      %519 = vmatpush1.bf16.msra.mxu0 0
      %520 = vmatprep.subr.bf16.mxu0 0
      %521 = vmatpush1.bf16.msra.mxu0 0
      %522 = vmatprep.subr.bf16.mxu0 0
      %523 = vmatpush1.bf16.msra.mxu0 0
      %524 = vmatprep.mubr.bf16.mxu0 0
      %525 = vmatmul.mubr.bf16.gmra.mrb[0].mxu0 %v386
      %v526 = vpop.f32.mrb[0].mxu0
      %v527 = vadd.f32 0.0, %v526
      %v528 = vpop.f32.mrb[0].mxu0
      %v529 = vpop.f32.mrb[0].mxu0
      %v530 = vpop.f32.mrb[0].mxu0
      %531 = vdwg.mxu0
      %v536 = vunpack.c.l.b16 %v369
      %v537 = vunpack.c.l.b16 %v370
      %v538 = vunpack.c.l.b16 %v371
      %v539 = vunpack.c.l.b16 %v372
      %v540 = vpack.c.b16 %v537, %v536
      %v541 = vpack.c.b16 %v539, %v538
      %544 = vmatprep.subr.bf16.mxu0 0
      %545 = vmatpush1.bf16.msra.mxu0 %v540
      %546 = vmatprep.subr.bf16.mxu0 0
      %547 = vmatpush1.bf16.msra.mxu0 %v541
      %548 = vmatprep.subr.bf16.mxu0 0
      %549 = vmatpush1.bf16.msra.mxu0 0
      %550 = vmatprep.subr.bf16.mxu0 0
      %551 = vmatpush1.bf16.msra.mxu0 0
      %552 = vmatprep.subr.bf16.mxu0 0
      %553 = vmatpush1.bf16.msra.mxu0 0
      %554 = vmatprep.subr.bf16.mxu0 0
      %555 = vmatpush1.bf16.msra.mxu0 0
      %556 = vmatprep.subr.bf16.mxu0 0
      %557 = vmatpush1.bf16.msra.mxu0 0
      %558 = vmatprep.subr.bf16.mxu0 0
      %559 = vmatpush1.bf16.msra.mxu0 0
      %560 = vmatprep.subr.bf16.mxu0 0
      %561 = vmatpush1.bf16.msra.mxu0 0
      %562 = vmatprep.subr.bf16.mxu0 0
      %563 = vmatpush1.bf16.msra.mxu0 0
      %564 = vmatprep.subr.bf16.mxu0 0
      %565 = vmatpush1.bf16.msra.mxu0 0
      %566 = vmatprep.subr.bf16.mxu0 0
      %567 = vmatpush1.bf16.msra.mxu0 0
      %568 = vmatprep.subr.bf16.mxu0 0
      %569 = vmatpush1.bf16.msra.mxu0 0
      %570 = vmatprep.subr.bf16.mxu0 0
      %571 = vmatpush1.bf16.msra.mxu0 0
      %572 = vmatprep.subr.bf16.mxu0 0
      %573 = vmatpush1.bf16.msra.mxu0 0
      %574 = vmatprep.subr.bf16.mxu0 0
      %575 = vmatpush1.bf16.msra.mxu0 0
      %576 = vmatprep.mubr.bf16.mxu0 0
      %577 = vmatmul.mubr.bf16.gmra.mrb[0].mxu0 %v386
      %v578 = vpop.f32.mrb[0].mxu0
      %v579 = vadd.f32 0.0, %v578
      %v580 = vpop.f32.mrb[0].mxu0
      %v581 = vpop.f32.mrb[0].mxu0
      %v582 = vpop.f32.mrb[0].mxu0
      %583 = vdwg.mxu0
      %v584 = vld [vmem:[%s3] sm:$0xf]
      %v585 = vld [vmem:[%s3 + $0x4] sm:$0xf]
      %v586 = vld [vmem:[%s3 + $0x8] sm:$0xf]
      %v587 = vld [vmem:[%s3 + $0xc] sm:$0xf]
      %v588 = vld [vmem:[%s3 + $0x10] sm:$0xf]
      %v589 = vld [vmem:[%s3 + $0x14] sm:$0xf]
      %v590 = vld [vmem:[%s3 + $0x18] sm:$0xf]
      %v591 = vld [vmem:[%s3 + $0x1c] sm:$0xf]
      %v592 = vld [vmem:[%s3 + $0x20] sm:$0xf]
      %v593 = vld [vmem:[%s3 + $0x24] sm:$0xf]
      %v594 = vld [vmem:[%s3 + $0x28] sm:$0xf]
      %v595 = vld [vmem:[%s3 + $0x2c] sm:$0xf]
      %v596 = vld [vmem:[%s3 + $0x30] sm:$0xf]
      %v597 = vld [vmem:[%s3 + $0x34] sm:$0xf]
      %v598 = vld [vmem:[%s3 + $0x38] sm:$0xf]
      %v599 = vld [vmem:[%s3 + $0x3c] sm:$0xf]
      %v604 = vunpack.c.l.b16 %v584
      %v605 = vunpack.c.l.b16 %v585
      %v606 = vunpack.c.l.b16 %v586
      %v607 = vunpack.c.l.b16 %v587
      %v608 = vpack.c.b16 %v605, %v604
      %v609 = vpack.c.b16 %v607, %v606
      %612 = vmatprep.subr.bf16.mxu0 0
      %613 = vmatpush1.bf16.msra.mxu0 %v608
      %614 = vmatprep.subr.bf16.mxu0 0
      %615 = vmatpush1.bf16.msra.mxu0 %v609
      %616 = vmatprep.subr.bf16.mxu0 0
      %617 = vmatpush1.bf16.msra.mxu0 0
      %618 = vmatprep.subr.bf16.mxu0 0
      %619 = vmatpush1.bf16.msra.mxu0 0
      %620 = vmatprep.subr.bf16.mxu0 0
      %621 = vmatpush1.bf16.msra.mxu0 0
      %622 = vmatprep.subr.bf16.mxu0 0
      %623 = vmatpush1.bf16.msra.mxu0 0
      %624 = vmatprep.subr.bf16.mxu0 0
      %625 = vmatpush1.bf16.msra.mxu0 0
      %626 = vmatprep.subr.bf16.mxu0 0
      %627 = vmatpush1.bf16.msra.mxu0 0
      %628 = vmatprep.subr.bf16.mxu0 0
      %629 = vmatpush1.bf16.msra.mxu0 0
      %630 = vmatprep.subr.bf16.mxu0 0
      %631 = vmatpush1.bf16.msra.mxu0 0
      %632 = vmatprep.subr.bf16.mxu0 0
      %633 = vmatpush1.bf16.msra.mxu0 0
      %634 = vmatprep.subr.bf16.mxu0 0
      %635 = vmatpush1.bf16.msra.mxu0 0
      %636 = vmatprep.subr.bf16.mxu0 0
      %637 = vmatpush1.bf16.msra.mxu0 0
      %638 = vmatprep.subr.bf16.mxu0 0
      %639 = vmatpush1.bf16.msra.mxu0 0
      %640 = vmatprep.subr.bf16.mxu0 0
      %641 = vmatpush1.bf16.msra.mxu0 0
      %642 = vmatprep.subr.bf16.mxu0 0
      %643 = vmatpush1.bf16.msra.mxu0 0
      %644 = vmatprep.mubr.bf16.mxu0 0
      %645 = vmatmul.mubr.bf16.gmra.mrb[0].mxu0 %v386
      %v646 = vpop.f32.mrb[0].mxu0
      %v647 = vadd.f32 0.0, %v646
      %v648 = vpop.f32.mrb[0].mxu0
      %v649 = vpop.f32.mrb[0].mxu0
      %v650 = vpop.f32.mrb[0].mxu0
      %651 = vdwg.mxu0
      %v656 = vunpack.c.l.b16 %v588
      %v657 = vunpack.c.l.b16 %v589
      %v658 = vunpack.c.l.b16 %v590
      %v659 = vunpack.c.l.b16 %v591
      %v660 = vpack.c.b16 %v657, %v656
      %v661 = vpack.c.b16 %v659, %v658
      %664 = vmatprep.subr.bf16.mxu0 0
      %665 = vmatpush1.bf16.msra.mxu0 %v660
      %666 = vmatprep.subr.bf16.mxu0 0
      %667 = vmatpush1.bf16.msra.mxu0 %v661
      %668 = vmatprep.subr.bf16.mxu0 0
      %669 = vmatpush1.bf16.msra.mxu0 0
      %670 = vmatprep.subr.bf16.mxu0 0
      %671 = vmatpush1.bf16.msra.mxu0 0
      %672 = vmatprep.subr.bf16.mxu0 0
      %673 = vmatpush1.bf16.msra.mxu0 0
      %674 = vmatprep.subr.bf16.mxu0 0
      %675 = vmatpush1.bf16.msra.mxu0 0
      %676 = vmatprep.subr.bf16.mxu0 0
      %677 = vmatpush1.bf16.msra.mxu0 0
      %678 = vmatprep.subr.bf16.mxu0 0
      %679 = vmatpush1.bf16.msra.mxu0 0
      %680 = vmatprep.subr.bf16.mxu0 0
      %681 = vmatpush1.bf16.msra.mxu0 0
      %682 = vmatprep.subr.bf16.mxu0 0
      %683 = vmatpush1.bf16.msra.mxu0 0
      %684 = vmatprep.subr.bf16.mxu0 0
      %685 = vmatpush1.bf16.msra.mxu0 0
      %686 = vmatprep.subr.bf16.mxu0 0
      %687 = vmatpush1.bf16.msra.mxu0 0
      %688 = vmatprep.subr.bf16.mxu0 0
      %689 = vmatpush1.bf16.msra.mxu0 0
      %690 = vmatprep.subr.bf16.mxu0 0
      %691 = vmatpush1.bf16.msra.mxu0 0
      %692 = vmatprep.subr.bf16.mxu0 0
      %693 = vmatpush1.bf16.msra.mxu0 0
      %694 = vmatprep.subr.bf16.mxu0 0
      %695 = vmatpush1.bf16.msra.mxu0 0
      %696 = vmatprep.mubr.bf16.mxu0 0
      %697 = vmatmul.mubr.bf16.gmra.mrb[0].mxu0 %v386
      %v698 = vpop.f32.mrb[0].mxu0
      %v699 = vadd.f32 0.0, %v698
      %v700 = vpop.f32.mrb[0].mxu0
      %v701 = vpop.f32.mrb[0].mxu0
      %v702 = vpop.f32.mrb[0].mxu0
      %703 = vdwg.mxu0
      %v708 = vunpack.c.l.b16 %v592
      %v709 = vunpack.c.l.b16 %v593
      %v710 = vunpack.c.l.b16 %v594
      %v711 = vunpack.c.l.b16 %v595
      %v712 = vpack.c.b16 %v709, %v708
      %v713 = vpack.c.b16 %v711, %v710
      %716 = vmatprep.subr.bf16.mxu0 0
      %717 = vmatpush1.bf16.msra.mxu0 %v712
      %718 = vmatprep.subr.bf16.mxu0 0
      %719 = vmatpush1.bf16.msra.mxu0 %v713
      %720 = vmatprep.subr.bf16.mxu0 0
      %721 = vmatpush1.bf16.msra.mxu0 0
      %722 = vmatprep.subr.bf16.mxu0 0
      %723 = vmatpush1.bf16.msra.mxu0 0
      %724 = vmatprep.subr.bf16.mxu0 0
      %725 = vmatpush1.bf16.msra.mxu0 0
      %726 = vmatprep.subr.bf16.mxu0 0
      %727 = vmatpush1.bf16.msra.mxu0 0
      %728 = vmatprep.subr.bf16.mxu0 0
      %729 = vmatpush1.bf16.msra.mxu0 0
      %730 = vmatprep.subr.bf16.mxu0 0
      %731 = vmatpush1.bf16.msra.mxu0 0
      %732 = vmatprep.subr.bf16.mxu0 0
      %733 = vmatpush1.bf16.msra.mxu0 0
      %734 = vmatprep.subr.bf16.mxu0 0
      %735 = vmatpush1.bf16.msra.mxu0 0
      %736 = vmatprep.subr.bf16.mxu0 0
      %737 = vmatpush1.bf16.msra.mxu0 0
      %738 = vmatprep.subr.bf16.mxu0 0
      %739 = vmatpush1.bf16.msra.mxu0 0
      %740 = vmatprep.subr.bf16.mxu0 0
      %741 = vmatpush1.bf16.msra.mxu0 0
      %742 = vmatprep.subr.bf16.mxu0 0
      %743 = vmatpush1.bf16.msra.mxu0 0
      %744 = vmatprep.subr.bf16.mxu0 0
      %745 = vmatpush1.bf16.msra.mxu0 0
      %746 = vmatprep.subr.bf16.mxu0 0
      %747 = vmatpush1.bf16.msra.mxu0 0
      %748 = vmatprep.mubr.bf16.mxu0 0
      %749 = vmatmul.mubr.bf16.gmra.mrb[0].mxu0 %v386
      %v750 = vpop.f32.mrb[0].mxu0
      %v751 = vadd.f32 0.0, %v750
      %v752 = vpop.f32.mrb[0].mxu0
      %v753 = vpop.f32.mrb[0].mxu0
      %v754 = vpop.f32.mrb[0].mxu0
      %755 = vdwg.mxu0
      %v760 = vunpack.c.l.b16 %v596
      %v761 = vunpack.c.l.b16 %v597
      %v762 = vunpack.c.l.b16 %v598
      %v763 = vunpack.c.l.b16 %v599
      %v764 = vpack.c.b16 %v761, %v760
      %v765 = vpack.c.b16 %v763, %v762
      %768 = vmatprep.subr.bf16.mxu0 0
      %769 = vmatpush1.bf16.msra.mxu0 %v764
      %770 = vmatprep.subr.bf16.mxu0 0
      %771 = vmatpush1.bf16.msra.mxu0 %v765
      %772 = vmatprep.subr.bf16.mxu0 0
      %773 = vmatpush1.bf16.msra.mxu0 0
      %774 = vmatprep.subr.bf16.mxu0 0
      %775 = vmatpush1.bf16.msra.mxu0 0
      %776 = vmatprep.subr.bf16.mxu0 0
      %777 = vmatpush1.bf16.msra.mxu0 0
      %778 = vmatprep.subr.bf16.mxu0 0
      %779 = vmatpush1.bf16.msra.mxu0 0
      %780 = vmatprep.subr.bf16.mxu0 0
      %781 = vmatpush1.bf16.msra.mxu0 0
      %782 = vmatprep.subr.bf16.mxu0 0
      %783 = vmatpush1.bf16.msra.mxu0 0
      %784 = vmatprep.subr.bf16.mxu0 0
      %785 = vmatpush1.bf16.msra.mxu0 0
      %786 = vmatprep.subr.bf16.mxu0 0
      %787 = vmatpush1.bf16.msra.mxu0 0
      %788 = vmatprep.subr.bf16.mxu0 0
      %789 = vmatpush1.bf16.msra.mxu0 0
      %790 = vmatprep.subr.bf16.mxu0 0
      %791 = vmatpush1.bf16.msra.mxu0 0
      %792 = vmatprep.subr.bf16.mxu0 0
      %793 = vmatpush1.bf16.msra.mxu0 0
      %794 = vmatprep.subr.bf16.mxu0 0
      %795 = vmatpush1.bf16.msra.mxu0 0
      %796 = vmatprep.subr.bf16.mxu0 0
      %797 = vmatpush1.bf16.msra.mxu0 0
      %798 = vmatprep.subr.bf16.mxu0 0
      %799 = vmatpush1.bf16.msra.mxu0 0
      %800 = vmatprep.mubr.bf16.mxu0 0
      %801 = vmatmul.mubr.bf16.gmra.mrb[0].mxu0 %v386
      %v802 = vpop.f32.mrb[0].mxu0
      %v803 = vadd.f32 0.0, %v802
      %v804 = vpop.f32.mrb[0].mxu0
      %v805 = vpop.f32.mrb[0].mxu0
      %v806 = vpop.f32.mrb[0].mxu0
      %807 = vdwg.mxu0
      %v808 = vld [vmem:[%s4] sm:$0xf]
      %v809 = vld [vmem:[%s4 + $0x4] sm:$0xf]
      %v810 = vld [vmem:[%s4 + $0x8] sm:$0xf]
      %v811 = vld [vmem:[%s4 + $0xc] sm:$0xf]
      %v812 = vld [vmem:[%s4 + $0x10] sm:$0xf]
      %v813 = vld [vmem:[%s4 + $0x14] sm:$0xf]
      %v814 = vld [vmem:[%s4 + $0x18] sm:$0xf]
      %v815 = vld [vmem:[%s4 + $0x1c] sm:$0xf]
      %v816 = vld [vmem:[%s4 + $0x20] sm:$0xf]
      %v817 = vld [vmem:[%s4 + $0x24] sm:$0xf]
      %v818 = vld [vmem:[%s4 + $0x28] sm:$0xf]
      %v819 = vld [vmem:[%s4 + $0x2c] sm:$0xf]
      %v820 = vld [vmem:[%s4 + $0x30] sm:$0xf]
      %v821 = vld [vmem:[%s4 + $0x34] sm:$0xf]
      %v822 = vld [vmem:[%s4 + $0x38] sm:$0xf]
      %v823 = vld [vmem:[%s4 + $0x3c] sm:$0xf]
      %v828 = vunpack.c.l.b16 %v808
      %v829 = vunpack.c.l.b16 %v809
      %v830 = vunpack.c.l.b16 %v810
      %v831 = vunpack.c.l.b16 %v811
      %v832 = vpack.c.b16 %v829, %v828
      %v833 = vpack.c.b16 %v831, %v830
      %836 = vmatprep.subr.bf16.mxu0 0
      %837 = vmatpush1.bf16.msra.mxu0 %v832
      %838 = vmatprep.subr.bf16.mxu0 0
      %839 = vmatpush1.bf16.msra.mxu0 %v833
      %840 = vmatprep.subr.bf16.mxu0 0
      %841 = vmatpush1.bf16.msra.mxu0 0
      %842 = vmatprep.subr.bf16.mxu0 0
      %843 = vmatpush1.bf16.msra.mxu0 0
      %844 = vmatprep.subr.bf16.mxu0 0
      %845 = vmatpush1.bf16.msra.mxu0 0
      %846 = vmatprep.subr.bf16.mxu0 0
      %847 = vmatpush1.bf16.msra.mxu0 0
      %848 = vmatprep.subr.bf16.mxu0 0
      %849 = vmatpush1.bf16.msra.mxu0 0
      %850 = vmatprep.subr.bf16.mxu0 0
      %851 = vmatpush1.bf16.msra.mxu0 0
      %852 = vmatprep.subr.bf16.mxu0 0
      %853 = vmatpush1.bf16.msra.mxu0 0
      %854 = vmatprep.subr.bf16.mxu0 0
      %855 = vmatpush1.bf16.msra.mxu0 0
      %856 = vmatprep.subr.bf16.mxu0 0
      %857 = vmatpush1.bf16.msra.mxu0 0
      %858 = vmatprep.subr.bf16.mxu0 0
      %859 = vmatpush1.bf16.msra.mxu0 0
      %860 = vmatprep.subr.bf16.mxu0 0
      %861 = vmatpush1.bf16.msra.mxu0 0
      %862 = vmatprep.subr.bf16.mxu0 0
      %863 = vmatpush1.bf16.msra.mxu0 0
      %864 = vmatprep.subr.bf16.mxu0 0
      %865 = vmatpush1.bf16.msra.mxu0 0
      %866 = vmatprep.subr.bf16.mxu0 0
      %867 = vmatpush1.bf16.msra.mxu0 0
      %868 = vmatprep.mubr.bf16.mxu0 0
      %869 = vmatmul.mubr.bf16.gmra.mrb[0].mxu0 %v386
      %v870 = vpop.f32.mrb[0].mxu0
      %v871 = vadd.f32 0.0, %v870
      %v872 = vpop.f32.mrb[0].mxu0
      %v873 = vpop.f32.mrb[0].mxu0
      %v874 = vpop.f32.mrb[0].mxu0
      %875 = vdwg.mxu0
      %v880 = vunpack.c.l.b16 %v812
      %v881 = vunpack.c.l.b16 %v813
      %v882 = vunpack.c.l.b16 %v814
      %v883 = vunpack.c.l.b16 %v815
      %v884 = vpack.c.b16 %v881, %v880
      %v885 = vpack.c.b16 %v883, %v882
      %888 = vmatprep.subr.bf16.mxu0 0
      %889 = vmatpush1.bf16.msra.mxu0 %v884
      %890 = vmatprep.subr.bf16.mxu0 0
      %891 = vmatpush1.bf16.msra.mxu0 %v885
      %892 = vmatprep.subr.bf16.mxu0 0
      %893 = vmatpush1.bf16.msra.mxu0 0
      %894 = vmatprep.subr.bf16.mxu0 0
      %895 = vmatpush1.bf16.msra.mxu0 0
      %896 = vmatprep.subr.bf16.mxu0 0
      %897 = vmatpush1.bf16.msra.mxu0 0
      %898 = vmatprep.subr.bf16.mxu0 0
      %899 = vmatpush1.bf16.msra.mxu0 0
      %900 = vmatprep.subr.bf16.mxu0 0
      %901 = vmatpush1.bf16.msra.mxu0 0
      %902 = vmatprep.subr.bf16.mxu0 0
      %903 = vmatpush1.bf16.msra.mxu0 0
      %904 = vmatprep.subr.bf16.mxu0 0
      %905 = vmatpush1.bf16.msra.mxu0 0
      %906 = vmatprep.subr.bf16.mxu0 0
      %907 = vmatpush1.bf16.msra.mxu0 0
      %908 = vmatprep.subr.bf16.mxu0 0
      %909 = vmatpush1.bf16.msra.mxu0 0
      %910 = vmatprep.subr.bf16.mxu0 0
      %911 = vmatpush1.bf16.msra.mxu0 0
      %912 = vmatprep.subr.bf16.mxu0 0
      %913 = vmatpush1.bf16.msra.mxu0 0
      %914 = vmatprep.subr.bf16.mxu0 0
      %915 = vmatpush1.bf16.msra.mxu0 0
      %916 = vmatprep.subr.bf16.mxu0 0
      %917 = vmatpush1.bf16.msra.mxu0 0
      %918 = vmatprep.subr.bf16.mxu0 0
      %919 = vmatpush1.bf16.msra.mxu0 0
      %920 = vmatprep.mubr.bf16.mxu0 0
      %921 = vmatmul.mubr.bf16.gmra.mrb[0].mxu0 %v386
      %v922 = vpop.f32.mrb[0].mxu0
      %v923 = vadd.f32 0.0, %v922
      %v924 = vpop.f32.mrb[0].mxu0
      %v925 = vpop.f32.mrb[0].mxu0
      %v926 = vpop.f32.mrb[0].mxu0
      %927 = vdwg.mxu0
      %v932 = vunpack.c.l.b16 %v816
      %v933 = vunpack.c.l.b16 %v817
      %v934 = vunpack.c.l.b16 %v818
      %v935 = vunpack.c.l.b16 %v819
      %v936 = vpack.c.b16 %v933, %v932
      %v937 = vpack.c.b16 %v935, %v934
      %940 = vmatprep.subr.bf16.mxu0 0
      %941 = vmatpush1.bf16.msra.mxu0 %v936
      %942 = vmatprep.subr.bf16.mxu0 0
      %943 = vmatpush1.bf16.msra.mxu0 %v937
      %944 = vmatprep.subr.bf16.mxu0 0
      %945 = vmatpush1.bf16.msra.mxu0 0
      %946 = vmatprep.subr.bf16.mxu0 0
      %947 = vmatpush1.bf16.msra.mxu0 0
      %948 = vmatprep.subr.bf16.mxu0 0
      %949 = vmatpush1.bf16.msra.mxu0 0
      %950 = vmatprep.subr.bf16.mxu0 0
      %951 = vmatpush1.bf16.msra.mxu0 0
      %952 = vmatprep.subr.bf16.mxu0 0
      %953 = vmatpush1.bf16.msra.mxu0 0
      %954 = vmatprep.subr.bf16.mxu0 0
      %955 = vmatpush1.bf16.msra.mxu0 0
      %956 = vmatprep.subr.bf16.mxu0 0
      %957 = vmatpush1.bf16.msra.mxu0 0
      %958 = vmatprep.subr.bf16.mxu0 0
      %959 = vmatpush1.bf16.msra.mxu0 0
      %960 = vmatprep.subr.bf16.mxu0 0
      %961 = vmatpush1.bf16.msra.mxu0 0
      %962 = vmatprep.subr.bf16.mxu0 0
      %963 = vmatpush1.bf16.msra.mxu0 0
      %964 = vmatprep.subr.bf16.mxu0 0
      %965 = vmatpush1.bf16.msra.mxu0 0
      %966 = vmatprep.subr.bf16.mxu0 0
      %967 = vmatpush1.bf16.msra.mxu0 0
      %968 = vmatprep.subr.bf16.mxu0 0
      %969 = vmatpush1.bf16.msra.mxu0 0
      %970 = vmatprep.subr.bf16.mxu0 0
      %971 = vmatpush1.bf16.msra.mxu0 0
      %972 = vmatprep.mubr.bf16.mxu0 0
      %973 = vmatmul.mubr.bf16.gmra.mrb[0].mxu0 %v386
      %v974 = vpop.f32.mrb[0].mxu0
      %v975 = vadd.f32 0.0, %v974
      %v976 = vpop.f32.mrb[0].mxu0
      %v977 = vpop.f32.mrb[0].mxu0
      %v978 = vpop.f32.mrb[0].mxu0
      %979 = vdwg.mxu0
      %v984 = vunpack.c.l.b16 %v820
      %v985 = vunpack.c.l.b16 %v821
      %v986 = vunpack.c.l.b16 %v822
      %v987 = vunpack.c.l.b16 %v823
      %v988 = vpack.c.b16 %v985, %v984
      %v989 = vpack.c.b16 %v987, %v986
      %992 = vmatprep.subr.bf16.mxu0 0
      %993 = vmatpush1.bf16.msra.mxu0 %v988
      %994 = vmatprep.subr.bf16.mxu0 0
      %995 = vmatpush1.bf16.msra.mxu0 %v989
      %996 = vmatprep.subr.bf16.mxu0 0
      %997 = vmatpush1.bf16.msra.mxu0 0
      %998 = vmatprep.subr.bf16.mxu0 0
      %999 = vmatpush1.bf16.msra.mxu0 0
      %1000 = vmatprep.subr.bf16.mxu0 0
      %1001 = vmatpush1.bf16.msra.mxu0 0
      %1002 = vmatprep.subr.bf16.mxu0 0
      %1003 = vmatpush1.bf16.msra.mxu0 0
      %1004 = vmatprep.subr.bf16.mxu0 0
      %1005 = vmatpush1.bf16.msra.mxu0 0
      %1006 = vmatprep.subr.bf16.mxu0 0
      %1007 = vmatpush1.bf16.msra.mxu0 0
      %1008 = vmatprep.subr.bf16.mxu0 0
      %1009 = vmatpush1.bf16.msra.mxu0 0
      %1010 = vmatprep.subr.bf16.mxu0 0
      %1011 = vmatpush1.bf16.msra.mxu0 0
      %1012 = vmatprep.subr.bf16.mxu0 0
      %1013 = vmatpush1.bf16.msra.mxu0 0
      %1014 = vmatprep.subr.bf16.mxu0 0
      %1015 = vmatpush1.bf16.msra.mxu0 0
      %1016 = vmatprep.subr.bf16.mxu0 0
      %1017 = vmatpush1.bf16.msra.mxu0 0
      %1018 = vmatprep.subr.bf16.mxu0 0
      %1019 = vmatpush1.bf16.msra.mxu0 0
      %1020 = vmatprep.subr.bf16.mxu0 0
      %1021 = vmatpush1.bf16.msra.mxu0 0
      %1022 = vmatprep.subr.bf16.mxu0 0
      %1023 = vmatpush1.bf16.msra.mxu0 0
      %1024 = vmatprep.mubr.bf16.mxu0 0
      %1025 = vmatmul.mubr.bf16.gmra.mrb[0].mxu0 %v386
      %v1026 = vpop.f32.mrb[0].mxu0
      %v1027 = vadd.f32 0.0, %v1026
      %v1028 = vpop.f32.mrb[0].mxu0
      %v1029 = vpop.f32.mrb[0].mxu0
      %v1030 = vpop.f32.mrb[0].mxu0
      %1031 = vdwg.mxu0
      %v1032 = vpack.c.bf16 %v423, %v423
      %v1033 = vpack.c.bf16 %v475, %v475
      %v1034 = vpack.c.bf16 %v527, %v527
      %v1035 = vpack.c.bf16 %v579, %v579
      %v1036 = vpack.c.bf16 %v647, %v647
      %v1037 = vpack.c.bf16 %v699, %v699
      %v1038 = vpack.c.bf16 %v751, %v751
      %v1039 = vpack.c.bf16 %v803, %v803
      %vm1040 = vcmask 64512
      %v1042 = vsel %vm1040, %v1032, 0
      %v1045 = vsel %vm1040, %v1036, 0
      %1047 = vmatprep.subr.bf16.mxu0 0
      %1048 = vmatpush1.bf16.xpose.msra.mxu0 %v1045
      %1049 = vmatprep.subr.bf16.mxu0 0
      %1050 = vmatpush1.bf16.xpose.msra.mxu0 0
      %1051 = vmatprep.subr.bf16.mxu0 0
      %1052 = vmatpush1.bf16.xpose.msra.mxu0 0
      %1053 = vmatprep.subr.bf16.mxu0 0
      %1054 = vmatpush1.bf16.xpose.msra.mxu0 0
      %1055 = vmatprep.subr.bf16.mxu0 0
      %1056 = vmatpush1.bf16.xpose.msra.mxu0 0
      %1057 = vmatprep.subr.bf16.mxu0 0
      %1058 = vmatpush1.bf16.xpose.msra.mxu0 0
      %1059 = vmatprep.subr.bf16.mxu0 0
      %1060 = vmatpush1.bf16.xpose.msra.mxu0 0
      %1061 = vmatprep.subr.bf16.mxu0 0
      %1062 = vmatpush1.bf16.xpose.msra.mxu0 0
      %1063 = vmatprep.subr.bf16.mxu0 0
      %1064 = vmatpush1.bf16.xpose.msra.mxu0 0
      %1065 = vmatprep.subr.bf16.mxu0 0
      %1066 = vmatpush1.bf16.xpose.msra.mxu0 0
      %1067 = vmatprep.subr.bf16.mxu0 0
      %1068 = vmatpush1.bf16.xpose.msra.mxu0 0
      %1069 = vmatprep.subr.bf16.mxu0 0
      %1070 = vmatpush1.bf16.xpose.msra.mxu0 0
      %1071 = vmatprep.subr.bf16.mxu0 0
      %1072 = vmatpush1.bf16.xpose.msra.mxu0 0
      %1073 = vmatprep.subr.bf16.mxu0 0
      %1074 = vmatpush1.bf16.xpose.msra.mxu0 0
      %1075 = vmatprep.subr.bf16.mxu0 0
      %1076 = vmatpush1.bf16.xpose.msra.mxu0 0
      %1077 = vmatprep.subr.bf16.mxu0 0
      %1078 = vmatpush1.bf16.xpose.msra.mxu0 0
      %1079 = vmatprep.mubr.bf16.mxu0 0
      %1080 = vmatmul.mubr.bf16.gmra.mrb[0].mxu0 %v1042
      %v1081 = vpop.f32.mrb[0].mxu0
      %v1082 = vadd.f32 0.0, %v1081
      %v1083 = vpop.f32.mrb[0].mxu0
      %v1084 = vpop.f32.mrb[0].mxu0
      %v1085 = vpop.f32.mrb[0].mxu0
      %1086 = vdwg.mxu0
      %v1088 = vsel %vm1040, %v1033, 0
      %v1091 = vsel %vm1040, %v1037, 0
      %1093 = vmatprep.subr.bf16.mxu0 0
      %1094 = vmatpush1.bf16.xpose.msra.mxu0 %v1091
      %1095 = vmatprep.subr.bf16.mxu0 0
      %1096 = vmatpush1.bf16.xpose.msra.mxu0 0
      %1097 = vmatprep.subr.bf16.mxu0 0
      %1098 = vmatpush1.bf16.xpose.msra.mxu0 0
      %1099 = vmatprep.subr.bf16.mxu0 0
      %1100 = vmatpush1.bf16.xpose.msra.mxu0 0
      %1101 = vmatprep.subr.bf16.mxu0 0
      %1102 = vmatpush1.bf16.xpose.msra.mxu0 0
      %1103 = vmatprep.subr.bf16.mxu0 0
      %1104 = vmatpush1.bf16.xpose.msra.mxu0 0
      %1105 = vmatprep.subr.bf16.mxu0 0
      %1106 = vmatpush1.bf16.xpose.msra.mxu0 0
      %1107 = vmatprep.subr.bf16.mxu0 0
      %1108 = vmatpush1.bf16.xpose.msra.mxu0 0
      %1109 = vmatprep.subr.bf16.mxu0 0
      %1110 = vmatpush1.bf16.xpose.msra.mxu0 0
      %1111 = vmatprep.subr.bf16.mxu0 0
      %1112 = vmatpush1.bf16.xpose.msra.mxu0 0
      %1113 = vmatprep.subr.bf16.mxu0 0
      %1114 = vmatpush1.bf16.xpose.msra.mxu0 0
      %1115 = vmatprep.subr.bf16.mxu0 0
      %1116 = vmatpush1.bf16.xpose.msra.mxu0 0
      %1117 = vmatprep.subr.bf16.mxu0 0
      %1118 = vmatpush1.bf16.xpose.msra.mxu0 0
      %1119 = vmatprep.subr.bf16.mxu0 0
      %1120 = vmatpush1.bf16.xpose.msra.mxu0 0
      %1121 = vmatprep.subr.bf16.mxu0 0
      %1122 = vmatpush1.bf16.xpose.msra.mxu0 0
      %1123 = vmatprep.subr.bf16.mxu0 0
      %1124 = vmatpush1.bf16.xpose.msra.mxu0 0
      %1125 = vmatprep.mubr.bf16.mxu0 0
      %1126 = vmatmul.mubr.bf16.gmra.mrb[0].mxu0 %v1088
      %v1127 = vpop.f32.mrb[0].mxu0
      %v1128 = vadd.f32 0.0, %v1127
      %v1129 = vpop.f32.mrb[0].mxu0
      %v1130 = vpop.f32.mrb[0].mxu0
      %v1131 = vpop.f32.mrb[0].mxu0
      %1132 = vdwg.mxu0
      %v1134 = vsel %vm1040, %v1034, 0
      %v1137 = vsel %vm1040, %v1038, 0
      %1139 = vmatprep.subr.bf16.mxu0 0
      %1140 = vmatpush1.bf16.xpose.msra.mxu0 %v1137
      %1141 = vmatprep.subr.bf16.mxu0 0
      %1142 = vmatpush1.bf16.xpose.msra.mxu0 0
      %1143 = vmatprep.subr.bf16.mxu0 0
      %1144 = vmatpush1.bf16.xpose.msra.mxu0 0
      %1145 = vmatprep.subr.bf16.mxu0 0
      %1146 = vmatpush1.bf16.xpose.msra.mxu0 0
      %1147 = vmatprep.subr.bf16.mxu0 0
      %1148 = vmatpush1.bf16.xpose.msra.mxu0 0
      %1149 = vmatprep.subr.bf16.mxu0 0
      %1150 = vmatpush1.bf16.xpose.msra.mxu0 0
      %1151 = vmatprep.subr.bf16.mxu0 0
      %1152 = vmatpush1.bf16.xpose.msra.mxu0 0
      %1153 = vmatprep.subr.bf16.mxu0 0
      %1154 = vmatpush1.bf16.xpose.msra.mxu0 0
      %1155 = vmatprep.subr.bf16.mxu0 0
      %1156 = vmatpush1.bf16.xpose.msra.mxu0 0
      %1157 = vmatprep.subr.bf16.mxu0 0
      %1158 = vmatpush1.bf16.xpose.msra.mxu0 0
      %1159 = vmatprep.subr.bf16.mxu0 0
      %1160 = vmatpush1.bf16.xpose.msra.mxu0 0
      %1161 = vmatprep.subr.bf16.mxu0 0
      %1162 = vmatpush1.bf16.xpose.msra.mxu0 0
      %1163 = vmatprep.subr.bf16.mxu0 0
      %1164 = vmatpush1.bf16.xpose.msra.mxu0 0
      %1165 = vmatprep.subr.bf16.mxu0 0
      %1166 = vmatpush1.bf16.xpose.msra.mxu0 0
      %1167 = vmatprep.subr.bf16.mxu0 0
      %1168 = vmatpush1.bf16.xpose.msra.mxu0 0
      %1169 = vmatprep.subr.bf16.mxu0 0
      %1170 = vmatpush1.bf16.xpose.msra.mxu0 0
      %1171 = vmatprep.mubr.bf16.mxu0 0
      %1172 = vmatmul.mubr.bf16.gmra.mrb[0].mxu0 %v1134
      %v1173 = vpop.f32.mrb[0].mxu0
      %v1174 = vadd.f32 0.0, %v1173
      %v1175 = vpop.f32.mrb[0].mxu0
      %v1176 = vpop.f32.mrb[0].mxu0
      %v1177 = vpop.f32.mrb[0].mxu0
      %1178 = vdwg.mxu0
      %v1180 = vsel %vm1040, %v1035, 0
      %v1183 = vsel %vm1040, %v1039, 0
      %1185 = vmatprep.subr.bf16.mxu0 0
      %1186 = vmatpush1.bf16.xpose.msra.mxu0 %v1183
      %1187 = vmatprep.subr.bf16.mxu0 0
      %1188 = vmatpush1.bf16.xpose.msra.mxu0 0
      %1189 = vmatprep.subr.bf16.mxu0 0
      %1190 = vmatpush1.bf16.xpose.msra.mxu0 0
      %1191 = vmatprep.subr.bf16.mxu0 0
      %1192 = vmatpush1.bf16.xpose.msra.mxu0 0
      %1193 = vmatprep.subr.bf16.mxu0 0
      %1194 = vmatpush1.bf16.xpose.msra.mxu0 0
      %1195 = vmatprep.subr.bf16.mxu0 0
      %1196 = vmatpush1.bf16.xpose.msra.mxu0 0
      %1197 = vmatprep.subr.bf16.mxu0 0
      %1198 = vmatpush1.bf16.xpose.msra.mxu0 0
      %1199 = vmatprep.subr.bf16.mxu0 0
      %1200 = vmatpush1.bf16.xpose.msra.mxu0 0
      %1201 = vmatprep.subr.bf16.mxu0 0
      %1202 = vmatpush1.bf16.xpose.msra.mxu0 0
      %1203 = vmatprep.subr.bf16.mxu0 0
      %1204 = vmatpush1.bf16.xpose.msra.mxu0 0
      %1205 = vmatprep.subr.bf16.mxu0 0
      %1206 = vmatpush1.bf16.xpose.msra.mxu0 0
      %1207 = vmatprep.subr.bf16.mxu0 0
      %1208 = vmatpush1.bf16.xpose.msra.mxu0 0
      %1209 = vmatprep.subr.bf16.mxu0 0
      %1210 = vmatpush1.bf16.xpose.msra.mxu0 0
      %1211 = vmatprep.subr.bf16.mxu0 0
      %1212 = vmatpush1.bf16.xpose.msra.mxu0 0
      %1213 = vmatprep.subr.bf16.mxu0 0
      %1214 = vmatpush1.bf16.xpose.msra.mxu0 0
      %1215 = vmatprep.subr.bf16.mxu0 0
      %1216 = vmatpush1.bf16.xpose.msra.mxu0 0
      %1217 = vmatprep.mubr.bf16.mxu0 0
      %1218 = vmatmul.mubr.bf16.gmra.mrb[0].mxu0 %v1180
      %v1219 = vpop.f32.mrb[0].mxu0
      %v1220 = vadd.f32 0.0, %v1219
      %v1221 = vpop.f32.mrb[0].mxu0
      %v1222 = vpop.f32.mrb[0].mxu0
      %v1223 = vpop.f32.mrb[0].mxu0
      %1224 = vdwg.mxu0
      %v1225 = vsel %vm1040, %v1082, -inf
      %1226 = vmax.xlane.f32.xlu0 %v1225
      %v1227 = vpop.xlane.xlu0 %1226
      %v1228 = vsel %vm1040, %v1128, -inf
      %1229 = vmax.xlane.f32.xlu0 %v1228
      %v1230 = vpop.xlane.xlu0 %1229
      %v1231 = vsel %vm1040, %v1174, -inf
      %1232 = vmax.xlane.f32.xlu0 %v1231
      %v1233 = vpop.xlane.xlu0 %1232
      %v1234 = vsel %vm1040, %v1220, -inf
      %1235 = vmax.xlane.f32.xlu0 %v1234
      %v1236 = vpop.xlane.xlu0 %1235
      %v1237 = vsub.f32 %v1082, %v1227
      %v1238 = vsub.f32 %v1128, %v1230
      %v1239 = vsub.f32 %v1174, %v1233
      %v1240 = vsub.f32 %v1220, %v1236
      %v1241 = vmul.f32 %v1237, 1.442695
      %v1242 = vpow.pop %v1241
      %v1243 = vmul.f32 %v1238, 1.442695
      %v1244 = vpow.pop %v1243
      %v1245 = vmul.f32 %v1239, 1.442695
      %v1246 = vpow.pop %v1245
      %v1247 = vmul.f32 %v1240, 1.442695
      %v1248 = vpow.pop %v1247
      %v1249 = vsel %vm1040, %v1242, 0.0
      %1250 = vadd.xlane.f32.xlu0 %v1249
      %v1251 = vpop.xlane.xlu0 %1250
      %v1252 = vsel %vm1040, %v1244, 0.0
      %1253 = vadd.xlane.f32.xlu0 %v1252
      %v1254 = vpop.xlane.xlu0 %1253
      %v1255 = vsel %vm1040, %v1246, 0.0
      %1256 = vadd.xlane.f32.xlu0 %v1255
      %v1257 = vpop.xlane.xlu0 %1256
      %v1258 = vsel %vm1040, %v1248, 0.0
      %1259 = vadd.xlane.f32.xlu0 %v1258
      %v1260 = vpop.xlane.xlu0 %1259
      %v1261 = vrcp.pop %v1251
      %v1262 = vrcp.pop %v1254
      %v1263 = vrcp.pop %v1257
      %v1264 = vrcp.pop %v1260
      %v1265 = vmul.f32 %v1242, %v1261
      %v1266 = vmul.f32 %v1244, %v1262
      %v1267 = vmul.f32 %v1246, %v1263
      %v1268 = vmul.f32 %v1248, %v1264
      %v1269 = vpack.c.bf16 %v1265, %v1265
      %v1270 = vpack.c.bf16 %v1266, %v1266
      %v1271 = vpack.c.bf16 %v1267, %v1267
      %v1272 = vpack.c.bf16 %v1268, %v1268
      %v1273 = vpack.c.bf16 %v871, %v871
      %v1274 = vpack.c.bf16 %v923, %v923
      %v1275 = vpack.c.bf16 %v975, %v975
      %v1276 = vpack.c.bf16 %v1027, %v1027
      %v1278 = vsel %vm1040, %v1269, 0
      %vm1280 = vcmask 1043456
      %v1282 = vsel %vm1280, %v1273, 0
      %1284 = vmatprep.subr.bf16.mxu0 0
      %1285 = vmatpush1.bf16.msra.mxu0 %v1282
      %1286 = vmatprep.subr.bf16.mxu0 0
      %1287 = vmatpush1.bf16.msra.mxu0 0
      %1288 = vmatprep.subr.bf16.mxu0 0
      %1289 = vmatpush1.bf16.msra.mxu0 0
      %1290 = vmatprep.subr.bf16.mxu0 0
      %1291 = vmatpush1.bf16.msra.mxu0 0
      %1292 = vmatprep.subr.bf16.mxu0 0
      %1293 = vmatpush1.bf16.msra.mxu0 0
      %1294 = vmatprep.subr.bf16.mxu0 0
      %1295 = vmatpush1.bf16.msra.mxu0 0
      %1296 = vmatprep.subr.bf16.mxu0 0
      %1297 = vmatpush1.bf16.msra.mxu0 0
      %1298 = vmatprep.subr.bf16.mxu0 0
      %1299 = vmatpush1.bf16.msra.mxu0 0
      %1300 = vmatprep.subr.bf16.mxu0 0
      %1301 = vmatpush1.bf16.msra.mxu0 0
      %1302 = vmatprep.subr.bf16.mxu0 0
      %1303 = vmatpush1.bf16.msra.mxu0 0
      %1304 = vmatprep.subr.bf16.mxu0 0
      %1305 = vmatpush1.bf16.msra.mxu0 0
      %1306 = vmatprep.subr.bf16.mxu0 0
      %1307 = vmatpush1.bf16.msra.mxu0 0
      %1308 = vmatprep.subr.bf16.mxu0 0
      %1309 = vmatpush1.bf16.msra.mxu0 0
      %1310 = vmatprep.subr.bf16.mxu0 0
      %1311 = vmatpush1.bf16.msra.mxu0 0
      %1312 = vmatprep.subr.bf16.mxu0 0
      %1313 = vmatpush1.bf16.msra.mxu0 0
      %1314 = vmatprep.subr.bf16.mxu0 0
      %1315 = vmatpush1.bf16.msra.mxu0 0
      %1316 = vmatprep.mubr.bf16.mxu0 0
      %1317 = vmatmul.mubr.bf16.gmra.mrb[0].mxu0 %v1278
      %v1318 = vpop.f32.mrb[0].mxu0
      %v1319 = vadd.f32 0.0, %v1318
      %v1320 = vpop.f32.mrb[0].mxu0
      %v1321 = vpop.f32.mrb[0].mxu0
      %v1322 = vpop.f32.mrb[0].mxu0
      %1323 = vdwg.mxu0
      %v1325 = vsel %vm1040, %v1270, 0
      %v1328 = vsel %vm1280, %v1274, 0
      %1330 = vmatprep.subr.bf16.mxu0 0
      %1331 = vmatpush1.bf16.msra.mxu0 %v1328
      %1332 = vmatprep.subr.bf16.mxu0 0
      %1333 = vmatpush1.bf16.msra.mxu0 0
      %1334 = vmatprep.subr.bf16.mxu0 0
      %1335 = vmatpush1.bf16.msra.mxu0 0
      %1336 = vmatprep.subr.bf16.mxu0 0
      %1337 = vmatpush1.bf16.msra.mxu0 0
      %1338 = vmatprep.subr.bf16.mxu0 0
      %1339 = vmatpush1.bf16.msra.mxu0 0
      %1340 = vmatprep.subr.bf16.mxu0 0
      %1341 = vmatpush1.bf16.msra.mxu0 0
      %1342 = vmatprep.subr.bf16.mxu0 0
      %1343 = vmatpush1.bf16.msra.mxu0 0
      %1344 = vmatprep.subr.bf16.mxu0 0
      %1345 = vmatpush1.bf16.msra.mxu0 0
      %1346 = vmatprep.subr.bf16.mxu0 0
      %1347 = vmatpush1.bf16.msra.mxu0 0
      %1348 = vmatprep.subr.bf16.mxu0 0
      %1349 = vmatpush1.bf16.msra.mxu0 0
      %1350 = vmatprep.subr.bf16.mxu0 0
      %1351 = vmatpush1.bf16.msra.mxu0 0
      %1352 = vmatprep.subr.bf16.mxu0 0
      %1353 = vmatpush1.bf16.msra.mxu0 0
      %1354 = vmatprep.subr.bf16.mxu0 0
      %1355 = vmatpush1.bf16.msra.mxu0 0
      %1356 = vmatprep.subr.bf16.mxu0 0
      %1357 = vmatpush1.bf16.msra.mxu0 0
      %1358 = vmatprep.subr.bf16.mxu0 0
      %1359 = vmatpush1.bf16.msra.mxu0 0
      %1360 = vmatprep.subr.bf16.mxu0 0
      %1361 = vmatpush1.bf16.msra.mxu0 0
      %1362 = vmatprep.mubr.bf16.mxu0 0
      %1363 = vmatmul.mubr.bf16.gmra.mrb[0].mxu0 %v1325
      %v1364 = vpop.f32.mrb[0].mxu0
      %v1365 = vadd.f32 0.0, %v1364
      %v1366 = vpop.f32.mrb[0].mxu0
      %v1367 = vpop.f32.mrb[0].mxu0
      %v1368 = vpop.f32.mrb[0].mxu0
      %1369 = vdwg.mxu0
      %v1371 = vsel %vm1040, %v1271, 0
      %v1374 = vsel %vm1280, %v1275, 0
      %1376 = vmatprep.subr.bf16.mxu0 0
      %1377 = vmatpush1.bf16.msra.mxu0 %v1374
      %1378 = vmatprep.subr.bf16.mxu0 0
      %1379 = vmatpush1.bf16.msra.mxu0 0
      %1380 = vmatprep.subr.bf16.mxu0 0
      %1381 = vmatpush1.bf16.msra.mxu0 0
      %1382 = vmatprep.subr.bf16.mxu0 0
      %1383 = vmatpush1.bf16.msra.mxu0 0
      %1384 = vmatprep.subr.bf16.mxu0 0
      %1385 = vmatpush1.bf16.msra.mxu0 0
      %1386 = vmatprep.subr.bf16.mxu0 0
      %1387 = vmatpush1.bf16.msra.mxu0 0
      %1388 = vmatprep.subr.bf16.mxu0 0
      %1389 = vmatpush1.bf16.msra.mxu0 0
      %1390 = vmatprep.subr.bf16.mxu0 0
      %1391 = vmatpush1.bf16.msra.mxu0 0
      %1392 = vmatprep.subr.bf16.mxu0 0
      %1393 = vmatpush1.bf16.msra.mxu0 0
      %1394 = vmatprep.subr.bf16.mxu0 0
      %1395 = vmatpush1.bf16.msra.mxu0 0
      %1396 = vmatprep.subr.bf16.mxu0 0
      %1397 = vmatpush1.bf16.msra.mxu0 0
      %1398 = vmatprep.subr.bf16.mxu0 0
      %1399 = vmatpush1.bf16.msra.mxu0 0
      %1400 = vmatprep.subr.bf16.mxu0 0
      %1401 = vmatpush1.bf16.msra.mxu0 0
      %1402 = vmatprep.subr.bf16.mxu0 0
      %1403 = vmatpush1.bf16.msra.mxu0 0
      %1404 = vmatprep.subr.bf16.mxu0 0
      %1405 = vmatpush1.bf16.msra.mxu0 0
      %1406 = vmatprep.subr.bf16.mxu0 0
      %1407 = vmatpush1.bf16.msra.mxu0 0
      %1408 = vmatprep.mubr.bf16.mxu0 0
      %1409 = vmatmul.mubr.bf16.gmra.mrb[0].mxu0 %v1371
      %v1410 = vpop.f32.mrb[0].mxu0
      %v1411 = vadd.f32 0.0, %v1410
      %v1412 = vpop.f32.mrb[0].mxu0
      %v1413 = vpop.f32.mrb[0].mxu0
      %v1414 = vpop.f32.mrb[0].mxu0
      %1415 = vdwg.mxu0
      %v1417 = vsel %vm1040, %v1272, 0
      %v1420 = vsel %vm1280, %v1276, 0
      %1422 = vmatprep.subr.bf16.mxu0 0
      %1423 = vmatpush1.bf16.msra.mxu0 %v1420
      %1424 = vmatprep.subr.bf16.mxu0 0
      %1425 = vmatpush1.bf16.msra.mxu0 0
      %1426 = vmatprep.subr.bf16.mxu0 0
      %1427 = vmatpush1.bf16.msra.mxu0 0
      %1428 = vmatprep.subr.bf16.mxu0 0
      %1429 = vmatpush1.bf16.msra.mxu0 0
      %1430 = vmatprep.subr.bf16.mxu0 0
      %1431 = vmatpush1.bf16.msra.mxu0 0
      %1432 = vmatprep.subr.bf16.mxu0 0
      %1433 = vmatpush1.bf16.msra.mxu0 0
      %1434 = vmatprep.subr.bf16.mxu0 0
      %1435 = vmatpush1.bf16.msra.mxu0 0
      %1436 = vmatprep.subr.bf16.mxu0 0
      %1437 = vmatpush1.bf16.msra.mxu0 0
      %1438 = vmatprep.subr.bf16.mxu0 0
      %1439 = vmatpush1.bf16.msra.mxu0 0
      %1440 = vmatprep.subr.bf16.mxu0 0
      %1441 = vmatpush1.bf16.msra.mxu0 0
      %1442 = vmatprep.subr.bf16.mxu0 0
      %1443 = vmatpush1.bf16.msra.mxu0 0
      %1444 = vmatprep.subr.bf16.mxu0 0
      %1445 = vmatpush1.bf16.msra.mxu0 0
      %1446 = vmatprep.subr.bf16.mxu0 0
      %1447 = vmatpush1.bf16.msra.mxu0 0
      %1448 = vmatprep.subr.bf16.mxu0 0
      %1449 = vmatpush1.bf16.msra.mxu0 0
      %1450 = vmatprep.subr.bf16.mxu0 0
      %1451 = vmatpush1.bf16.msra.mxu0 0
      %1452 = vmatprep.subr.bf16.mxu0 0
      %1453 = vmatpush1.bf16.msra.mxu0 0
      %1454 = vmatprep.mubr.bf16.mxu0 0
      %1455 = vmatmul.mubr.bf16.gmra.mrb[0].mxu0 %v1417
      %v1456 = vpop.f32.mrb[0].mxu0
      %v1457 = vadd.f32 0.0, %v1456
      %v1458 = vpop.f32.mrb[0].mxu0
      %v1459 = vpop.f32.mrb[0].mxu0
      %v1460 = vpop.f32.mrb[0].mxu0
      %1461 = vdwg.mxu0
      %v1462 = vpack.c.bf16 %v1319, %v1319
      %v1463 = vpack.c.bf16 %v1365, %v1365
      %v1464 = vpack.c.bf16 %v1411, %v1411
      %v1465 = vpack.c.bf16 %v1457, %v1457
      %v1466 = vld [vmem:[%s5] sm:$0xf]
      %v1467 = vld [vmem:[%s5 + $0x4] sm:$0xf]
      %v1468 = vld [vmem:[%s5 + $0x8] sm:$0xf]
      %v1469 = vld [vmem:[%s5 + $0xc] sm:$0xf]
      %v1471 = vsel %vm1040, %v1462, 0
      %v1474 = vsel %vm1280, %v1466, 0
      %1476 = vmatprep.subr.bf16.mxu0 0
      %1477 = vmatpush1.bf16.msra.mxu0 %v1474
      %1478 = vmatprep.subr.bf16.mxu0 0
      %1479 = vmatpush1.bf16.msra.mxu0 0
      %1480 = vmatprep.subr.bf16.mxu0 0
      %1481 = vmatpush1.bf16.msra.mxu0 0
      %1482 = vmatprep.subr.bf16.mxu0 0
      %1483 = vmatpush1.bf16.msra.mxu0 0
      %1484 = vmatprep.subr.bf16.mxu0 0
      %1485 = vmatpush1.bf16.msra.mxu0 0
      %1486 = vmatprep.subr.bf16.mxu0 0
      %1487 = vmatpush1.bf16.msra.mxu0 0
      %1488 = vmatprep.subr.bf16.mxu0 0
      %1489 = vmatpush1.bf16.msra.mxu0 0
      %1490 = vmatprep.subr.bf16.mxu0 0
      %1491 = vmatpush1.bf16.msra.mxu0 0
      %1492 = vmatprep.subr.bf16.mxu0 0
      %1493 = vmatpush1.bf16.msra.mxu0 0
      %1494 = vmatprep.subr.bf16.mxu0 0
      %1495 = vmatpush1.bf16.msra.mxu0 0
      %1496 = vmatprep.subr.bf16.mxu0 0
      %1497 = vmatpush1.bf16.msra.mxu0 0
      %1498 = vmatprep.subr.bf16.mxu0 0
      %1499 = vmatpush1.bf16.msra.mxu0 0
      %1500 = vmatprep.subr.bf16.mxu0 0
      %1501 = vmatpush1.bf16.msra.mxu0 0
      %1502 = vmatprep.subr.bf16.mxu0 0
      %1503 = vmatpush1.bf16.msra.mxu0 0
      %1504 = vmatprep.subr.bf16.mxu0 0
      %1505 = vmatpush1.bf16.msra.mxu0 0
      %1506 = vmatprep.subr.bf16.mxu0 0
      %1507 = vmatpush1.bf16.msra.mxu0 0
      %1508 = vmatprep.mubr.bf16.mxu0 0
      %1509 = vmatmul.mubr.bf16.gmra.mrb[0].mxu0 %v1471
      %v1510 = vpop.f32.mrb[0].mxu0
      %v1511 = vadd.f32 0.0, %v1510
      %v1512 = vpop.f32.mrb[0].mxu0
      %v1513 = vpop.f32.mrb[0].mxu0
      %v1514 = vpop.f32.mrb[0].mxu0
      %1515 = vdwg.mxu0
      %v1517 = vsel %vm1040, %v1463, 0
      %v1520 = vsel %vm1280, %v1467, 0
      %1522 = vmatprep.subr.bf16.mxu0 0
      %1523 = vmatpush1.bf16.msra.mxu0 %v1520
      %1524 = vmatprep.subr.bf16.mxu0 0
      %1525 = vmatpush1.bf16.msra.mxu0 0
      %1526 = vmatprep.subr.bf16.mxu0 0
      %1527 = vmatpush1.bf16.msra.mxu0 0
      %1528 = vmatprep.subr.bf16.mxu0 0
      %1529 = vmatpush1.bf16.msra.mxu0 0
      %1530 = vmatprep.subr.bf16.mxu0 0
      %1531 = vmatpush1.bf16.msra.mxu0 0
      %1532 = vmatprep.subr.bf16.mxu0 0
      %1533 = vmatpush1.bf16.msra.mxu0 0
      %1534 = vmatprep.subr.bf16.mxu0 0
      %1535 = vmatpush1.bf16.msra.mxu0 0
      %1536 = vmatprep.subr.bf16.mxu0 0
      %1537 = vmatpush1.bf16.msra.mxu0 0
      %1538 = vmatprep.subr.bf16.mxu0 0
      %1539 = vmatpush1.bf16.msra.mxu0 0
      %1540 = vmatprep.subr.bf16.mxu0 0
      %1541 = vmatpush1.bf16.msra.mxu0 0
      %1542 = vmatprep.subr.bf16.mxu0 0
      %1543 = vmatpush1.bf16.msra.mxu0 0
      %1544 = vmatprep.subr.bf16.mxu0 0
      %1545 = vmatpush1.bf16.msra.mxu0 0
      %1546 = vmatprep.subr.bf16.mxu0 0
      %1547 = vmatpush1.bf16.msra.mxu0 0
      %1548 = vmatprep.subr.bf16.mxu0 0
      %1549 = vmatpush1.bf16.msra.mxu0 0
      %1550 = vmatprep.subr.bf16.mxu0 0
      %1551 = vmatpush1.bf16.msra.mxu0 0
      %1552 = vmatprep.subr.bf16.mxu0 0
      %1553 = vmatpush1.bf16.msra.mxu0 0
      %1554 = vmatprep.mubr.bf16.mxu0 0
      %1555 = vmatmul.mubr.bf16.gmra.mrb[0].mxu0 %v1517
      %v1556 = vpop.f32.mrb[0].mxu0
      %v1557 = vadd.f32 0.0, %v1556
      %v1558 = vpop.f32.mrb[0].mxu0
      %v1559 = vpop.f32.mrb[0].mxu0
      %v1560 = vpop.f32.mrb[0].mxu0
      %1561 = vdwg.mxu0
      %v1563 = vsel %vm1040, %v1464, 0
      %v1566 = vsel %vm1280, %v1468, 0
      %1568 = vmatprep.subr.bf16.mxu0 0
      %1569 = vmatpush1.bf16.msra.mxu0 %v1566
      %1570 = vmatprep.subr.bf16.mxu0 0
      %1571 = vmatpush1.bf16.msra.mxu0 0
      %1572 = vmatprep.subr.bf16.mxu0 0
      %1573 = vmatpush1.bf16.msra.mxu0 0
      %1574 = vmatprep.subr.bf16.mxu0 0
      %1575 = vmatpush1.bf16.msra.mxu0 0
      %1576 = vmatprep.subr.bf16.mxu0 0
      %1577 = vmatpush1.bf16.msra.mxu0 0
      %1578 = vmatprep.subr.bf16.mxu0 0
      %1579 = vmatpush1.bf16.msra.mxu0 0
      %1580 = vmatprep.subr.bf16.mxu0 0
      %1581 = vmatpush1.bf16.msra.mxu0 0
      %1582 = vmatprep.subr.bf16.mxu0 0
      %1583 = vmatpush1.bf16.msra.mxu0 0
      %1584 = vmatprep.subr.bf16.mxu0 0
      %1585 = vmatpush1.bf16.msra.mxu0 0
      %1586 = vmatprep.subr.bf16.mxu0 0
      %1587 = vmatpush1.bf16.msra.mxu0 0
      %1588 = vmatprep.subr.bf16.mxu0 0
      %1589 = vmatpush1.bf16.msra.mxu0 0
      %1590 = vmatprep.subr.bf16.mxu0 0
      %1591 = vmatpush1.bf16.msra.mxu0 0
      %1592 = vmatprep.subr.bf16.mxu0 0
      %1593 = vmatpush1.bf16.msra.mxu0 0
      %1594 = vmatprep.subr.bf16.mxu0 0
      %1595 = vmatpush1.bf16.msra.mxu0 0
      %1596 = vmatprep.subr.bf16.mxu0 0
      %1597 = vmatpush1.bf16.msra.mxu0 0
      %1598 = vmatprep.subr.bf16.mxu0 0
      %1599 = vmatpush1.bf16.msra.mxu0 0
      %1600 = vmatprep.mubr.bf16.mxu0 0
      %1601 = vmatmul.mubr.bf16.gmra.mrb[0].mxu0 %v1563
      %v1602 = vpop.f32.mrb[0].mxu0
      %v1603 = vadd.f32 0.0, %v1602
      %v1604 = vpop.f32.mrb[0].mxu0
      %v1605 = vpop.f32.mrb[0].mxu0
      %v1606 = vpop.f32.mrb[0].mxu0
      %1607 = vdwg.mxu0
      %v1609 = vsel %vm1040, %v1465, 0
      %v1612 = vsel %vm1280, %v1469, 0
      %1614 = vmatprep.subr.bf16.mxu0 0
      %1615 = vmatpush1.bf16.msra.mxu0 %v1612
      %1616 = vmatprep.subr.bf16.mxu0 0
      %1617 = vmatpush1.bf16.msra.mxu0 0
      %1618 = vmatprep.subr.bf16.mxu0 0
      %1619 = vmatpush1.bf16.msra.mxu0 0
      %1620 = vmatprep.subr.bf16.mxu0 0
      %1621 = vmatpush1.bf16.msra.mxu0 0
      %1622 = vmatprep.subr.bf16.mxu0 0
      %1623 = vmatpush1.bf16.msra.mxu0 0
      %1624 = vmatprep.subr.bf16.mxu0 0
      %1625 = vmatpush1.bf16.msra.mxu0 0
      %1626 = vmatprep.subr.bf16.mxu0 0
      %1627 = vmatpush1.bf16.msra.mxu0 0
      %1628 = vmatprep.subr.bf16.mxu0 0
      %1629 = vmatpush1.bf16.msra.mxu0 0
      %1630 = vmatprep.subr.bf16.mxu0 0
      %1631 = vmatpush1.bf16.msra.mxu0 0
      %1632 = vmatprep.subr.bf16.mxu0 0
      %1633 = vmatpush1.bf16.msra.mxu0 0
      %1634 = vmatprep.subr.bf16.mxu0 0
      %1635 = vmatpush1.bf16.msra.mxu0 0
      %1636 = vmatprep.subr.bf16.mxu0 0
      %1637 = vmatpush1.bf16.msra.mxu0 0
      %1638 = vmatprep.subr.bf16.mxu0 0
      %1639 = vmatpush1.bf16.msra.mxu0 0
      %1640 = vmatprep.subr.bf16.mxu0 0
      %1641 = vmatpush1.bf16.msra.mxu0 0
      %1642 = vmatprep.subr.bf16.mxu0 0
      %1643 = vmatpush1.bf16.msra.mxu0 0
      %1644 = vmatprep.subr.bf16.mxu0 0
      %1645 = vmatpush1.bf16.msra.mxu0 0
      %1646 = vmatprep.mubr.bf16.mxu0 0
      %1647 = vmatmul.mubr.bf16.gmra.mrb[0].mxu0 %v1609
      %v1648 = vpop.f32.mrb[0].mxu0
      %v1649 = vadd.f32 0.0, %v1648
      %v1650 = vpop.f32.mrb[0].mxu0
      %v1651 = vpop.f32.mrb[0].mxu0
      %v1652 = vpop.f32.mrb[0].mxu0
      %1653 = vdwg.mxu0
      %v1654 = vsel %vm331, %v1511, 0.0
      %v1655 = vsel %vm331, %v1557, 0.0
      %v1656 = vadd.f32 %v1654, %v1655
      %v1657 = vsel %vm331, %v1603, 0.0
      %v1658 = vadd.f32 %v1656, %v1657
      %v1659 = vsel %vm331, %v1649, 0.0
      %v1660 = vadd.f32 %v1658, %v1659
      %v1661 = vadd.f32 %v1660, %v329
      %v1662 = vsel %vm331, %v1661, 0.0
      %1663 = vadd.xlane.f32.xlu0 %v1662
      %v1664 = vpop.xlane.xlu0 %1663
      %v1665 = vmul.f32 %v1664, %v335
      %v1666 = vsub.f32 %v1661, %v1665
      %v1667 = vmul.f32 %v1666, %v1666
      %v1668 = vsel %vm331, %v1667, 0.0
      %1669 = vadd.xlane.f32.xlu0 %v1668
      %v1670 = vpop.xlane.xlu0 %1669
      %v1671 = vmul.f32 %v1670, %v335
      %v1672 = vadd.f32 %v1671, 1e-05
      %v1673 = vrsqrt.pop %v1672
      %v1674 = vmul.f32 %v1666, %v1673
      %v1675 = vlaneseq
      %v1676 = vshrl.u32 %v1675, 7
      %v1677 = vsub.s32 2, %v1676
      %v1678 = vrot.slane %v330, %v1677
      %v1679 = vmul.f32 %v1674, %v1678
      %v1680 = vlaneseq
      %v1681 = vshrl.u32 %v1680, 7
      %v1682 = vsub.s32 3, %v1681
      %v1683 = vrot.slane %v330, %v1682
      %v1684 = vadd.f32 %v1679, %v1683
      %v1685 = vpack.c.bf16 %v1684, %v1684
      %v1686 = vld [vmem:[%s6] sm:$0xf]
      %v1687 = vld [vmem:[%s6 + $0x4] sm:$0xf]
      %v1688 = vld [vmem:[%s6 + $0x8] sm:$0xf]
      %v1689 = vld [vmem:[%s6 + $0xc] sm:$0xf]
      %v1690 = vld [vmem:[%s7] sm:$0x1]
      %v1692 = vlaneseq
      %v1693 = vshrl.u32 %v1692, 7
      %v1694 = vsub.s32 0, %v1693
      %v1695 = vrot.slane %v1690, %v1694
      %v1701 = vunpack.c.l.b16 %v1686
      %v1702 = vunpack.c.l.b16 %v1687
      %v1703 = vunpack.c.l.b16 %v1688
      %v1704 = vunpack.c.l.b16 %v1689
      %v1705 = vpack.c.b16 %v1702, %v1701
      %v1706 = vpack.c.b16 %v1704, %v1703
      %v1710 = vsel %vm331, %v1685, 0
      %1712 = vmatprep.subr.bf16.mxu0 0
      %1713 = vmatpush1.bf16.msra.mxu0 %v1705
      %1714 = vmatprep.subr.bf16.mxu0 0
      %1715 = vmatpush1.bf16.msra.mxu0 %v1706
      %1716 = vmatprep.subr.bf16.mxu0 0
      %1717 = vmatpush1.bf16.msra.mxu0 0
      %1718 = vmatprep.subr.bf16.mxu0 0
      %1719 = vmatpush1.bf16.msra.mxu0 0
      %1720 = vmatprep.subr.bf16.mxu0 0
      %1721 = vmatpush1.bf16.msra.mxu0 0
      %1722 = vmatprep.subr.bf16.mxu0 0
      %1723 = vmatpush1.bf16.msra.mxu0 0
      %1724 = vmatprep.subr.bf16.mxu0 0
      %1725 = vmatpush1.bf16.msra.mxu0 0
      %1726 = vmatprep.subr.bf16.mxu0 0
      %1727 = vmatpush1.bf16.msra.mxu0 0
      %1728 = vmatprep.subr.bf16.mxu0 0
      %1729 = vmatpush1.bf16.msra.mxu0 0
      %1730 = vmatprep.subr.bf16.mxu0 0
      %1731 = vmatpush1.bf16.msra.mxu0 0
      %1732 = vmatprep.subr.bf16.mxu0 0
      %1733 = vmatpush1.bf16.msra.mxu0 0
      %1734 = vmatprep.subr.bf16.mxu0 0
      %1735 = vmatpush1.bf16.msra.mxu0 0
      %1736 = vmatprep.subr.bf16.mxu0 0
      %1737 = vmatpush1.bf16.msra.mxu0 0
      %1738 = vmatprep.subr.bf16.mxu0 0
      %1739 = vmatpush1.bf16.msra.mxu0 0
      %1740 = vmatprep.subr.bf16.mxu0 0
      %1741 = vmatpush1.bf16.msra.mxu0 0
      %1742 = vmatprep.subr.bf16.mxu0 0
      %1743 = vmatpush1.bf16.msra.mxu0 0
      %1744 = vmatprep.mubr.bf16.mxu0 0
      %1745 = vmatmul.mubr.bf16.gmra.mrb[0].mxu0 %v1710
      %v1746 = vpop.f32.mrb[0].mxu0
      %v1747 = vadd.f32 %v1695, %v1746
      %v1748 = vpop.f32.mrb[0].mxu0
      %v1749 = vpop.f32.mrb[0].mxu0
      %v1750 = vpop.f32.mrb[0].mxu0
      %1751 = vdwg.mxu0
      %v1752 = vmul.f32 %v1747, 0.5
      %v1753 = vmul.f32 %v1747, 0.70710677
      %v1754 = verf.f32.pop %v1753
      %v1755 = vadd.f32 %v1754, 1.0
      %v1756 = vmul.f32 %v1752, %v1755
      %v1757 = vpack.c.bf16 %v1756, %v1756
      %v1758 = vld [vmem:[%s8] sm:$0xf]
      %v1759 = vld [vmem:[%s8 + $0x4] sm:$0xf]
      %v1760 = vld [vmem:[%s8 + $0x8] sm:$0xf]
      %v1761 = vld [vmem:[%s8 + $0xc] sm:$0xf]
      %v1762 = vld [vmem:[%s8 + $0x10] sm:$0xf]
      %v1763 = vld [vmem:[%s8 + $0x14] sm:$0xf]
      %v1764 = vld [vmem:[%s8 + $0x18] sm:$0xf]
      %v1765 = vld [vmem:[%s8 + $0x1c] sm:$0xf]
      %v1766 = vlaneseq
      %v1767 = vshrl.u32 %v1766, 7
      %v1768 = vsub.s32 4, %v1767
      %v1769 = vrot.slane %v330, %v1768
      %v1778 = vunpack.c.l.b16 %v1758
      %v1779 = vunpack.c.l.b16 %v1759
      %v1780 = vunpack.c.l.b16 %v1760
      %v1781 = vunpack.c.l.b16 %v1761
      %v1782 = vunpack.c.l.b16 %v1762
      %v1783 = vunpack.c.l.b16 %v1763
      %v1784 = vunpack.c.l.b16 %v1764
      %v1785 = vunpack.c.l.b16 %v1765
      %v1786 = vpack.c.b16 %v1779, %v1778
      %v1787 = vpack.c.b16 %v1781, %v1780
      %v1788 = vpack.c.b16 %v1783, %v1782
      %v1789 = vpack.c.b16 %v1785, %v1784
      %vm1794 = vcmask 523264
      %v1796 = vsel %vm1794, %v1757, 0
      %1798 = vmatprep.subr.bf16.mxu0 0
      %1799 = vmatpush1.bf16.msra.mxu0 %v1786
      %1800 = vmatprep.subr.bf16.mxu0 0
      %1801 = vmatpush1.bf16.msra.mxu0 %v1787
      %1802 = vmatprep.subr.bf16.mxu0 0
      %1803 = vmatpush1.bf16.msra.mxu0 %v1788
      %1804 = vmatprep.subr.bf16.mxu0 0
      %1805 = vmatpush1.bf16.msra.mxu0 %v1789
      %1806 = vmatprep.subr.bf16.mxu0 0
      %1807 = vmatpush1.bf16.msra.mxu0 0
      %1808 = vmatprep.subr.bf16.mxu0 0
      %1809 = vmatpush1.bf16.msra.mxu0 0
      %1810 = vmatprep.subr.bf16.mxu0 0
      %1811 = vmatpush1.bf16.msra.mxu0 0
      %1812 = vmatprep.subr.bf16.mxu0 0
      %1813 = vmatpush1.bf16.msra.mxu0 0
      %1814 = vmatprep.subr.bf16.mxu0 0
      %1815 = vmatpush1.bf16.msra.mxu0 0
      %1816 = vmatprep.subr.bf16.mxu0 0
      %1817 = vmatpush1.bf16.msra.mxu0 0
      %1818 = vmatprep.subr.bf16.mxu0 0
      %1819 = vmatpush1.bf16.msra.mxu0 0
      %1820 = vmatprep.subr.bf16.mxu0 0
      %1821 = vmatpush1.bf16.msra.mxu0 0
      %1822 = vmatprep.subr.bf16.mxu0 0
      %1823 = vmatpush1.bf16.msra.mxu0 0
      %1824 = vmatprep.subr.bf16.mxu0 0
      %1825 = vmatpush1.bf16.msra.mxu0 0
      %1826 = vmatprep.subr.bf16.mxu0 0
      %1827 = vmatpush1.bf16.msra.mxu0 0
      %1828 = vmatprep.subr.bf16.mxu0 0
      %1829 = vmatpush1.bf16.msra.mxu0 0
      %1830 = vmatprep.mubr.bf16.mxu0 0
      %1831 = vmatmul.mubr.bf16.gmra.mrb[0].mxu0 %v1796
      %v1832 = vpop.f32.mrb[0].mxu0
      %v1833 = vadd.f32 %v1769, %v1832
      %v1834 = vpop.f32.mrb[0].mxu0
      %v1835 = vpop.f32.mrb[0].mxu0
      %v1836 = vpop.f32.mrb[0].mxu0
      %1837 = vdwg.mxu0
      %v1838 = vadd.f32 %v1833, %v1661
      %1839 = vst.msk [vmem:[%s327] sm:$0xff] %vm331, %v1838
      %p1840 = scmp.lt.s32.totalorder %s20, 1
      %s1841 = scalar_select %p1840, %s20, 1
      %s1842 = smul.addr %s1841, 8
      %s1843 = scalar_lea.vmem %s9, %s1842
      // Predicated region
      $region57: #{transformer_forward.2} parent=55 // pred_check
        %p1844 = pneg %p232
      $region58: #{transformer_forward.2} parent=55 // pred_check_branch
        %1846 = sbr.rel (%p1844) target = $region60
      $region59: #{transformer_forward.2} parent=55 // pred_region
        _
      $region60: #{transformer_forward.2} parent=55 // pred_fallthru
        _
    $region56: #{transformer_forward.2} parent=5 // pred_fallthru
      _
    %p1847 = scmp.le.s32.totalorder 2, %s15
    // Predicated region
    $region61: #{transformer_forward.2} parent=5 // pred_check
      %p1848 = pneg %p1847
    $region62: #{transformer_forward.2} parent=5 // pred_check_branch
      %1850 = sbr.rel (%p1848) target = $region64
    $region63: #{transformer_forward.2} parent=5 // pred_region
      %s1851 = ssub.s32 %s15, 2
      // Predicated region
      $region65: #{transformer_forward.2} parent=63 // pred_check
        %p1852 = pneg %p238
      $region66: #{transformer_forward.2} parent=63 // pred_check_branch
        %1854 = sbr.rel (%p1852) target = $region68
      $region67: #{transformer_forward.2} parent=63 // pred_region
        %p1855 = scmp.lt.s32.totalorder %s21, 1
        %s1856 = scalar_select %p1855, %s21, 1
        %s1857 = smul.addr %s1856, 8
        %s1858 = scalar_lea.vmem %s9, %s1857
      $region68: #{transformer_forward.2} parent=63 // pred_fallthru
        _
    $region64: #{transformer_forward.2} parent=5 // pred_fallthru
      _
  $region6: #{transformer_forward.2} parent=0 // loop_footer
    %s19 = sadd.s32 1, %s15
  $region7: #{transformer_forward.2} parent=0 // loop_footer_branch
    %14 = sbr.rel target = $region3
  $region8: #{transformer_forward.2} parent=0 // loop_exit
    _

</llo_original>
